<compile_context>
chip_gen: v7x
topology: tpu7x:2x2x1
jax: 0.10.0
libtpu: 0.0.40
codegen_flags: <defaults>
</compile_context>

<pallas_src>
import math
from functools import partial

import numpy as np
import jax
import jax.numpy as jnp
from jax.experimental import pallas as pl
from jax.experimental.pallas import tpu as pltpu

LN_EPS = 1e-6
RMS_EPS = float(np.finfo(np.float32).eps)   # torch.nn.RMSNorm(eps=None) default
GELU_C = 0.7978845608028654                 # sqrt(2/pi)


# ----------------------------------------------------------------------------
# Kernel 1: pre-attention
#   LayerNorm -> modulate -> QKV matmul -> per-head RMSNorm -> fused RoPE
#   grid = (B, L // tl); q/k/v written channels-last (B, L, H) in compute dtype.
# ----------------------------------------------------------------------------
def pre_attn_kernel(x_ref, shift_ref, scale_ref, qkv_w_ref, qkv_b_ref,
                    qscale_ref, kscale_ref, ra_ref, rb_ref,
                    q_ref, k_ref, v_ref, *, heads, D, ln_eps, rms_eps):
    H = heads * D
    x = x_ref[0]                                      # (tl, H) f32
    tl = x.shape[0]

    # LayerNorm (f32 stats) + modulation
    mu = jnp.mean(x, axis=-1, keepdims=True)
    xc = x - mu
    var = jnp.mean(xc * xc, axis=-1, keepdims=True)
    xn = xc * jax.lax.rsqrt(var + ln_eps)
    xm = (1.0 + scale_ref[0]) * xn + shift_ref[0]

    # QKV projection on the MXU (bf16 operands, f32 accumulate)
    qkv = jnp.dot(xm.astype(qkv_w_ref.dtype), qkv_w_ref[...],
                  preferred_element_type=jnp.float32) + qkv_b_ref[...]
    q = qkv[:, 0:H]
    k = qkv[:, H:2 * H]
    v = qkv[:, 2 * H:3 * H]

    # Per-head RMSNorm: lane-aligned per-head reductions (XLU), no pooling matmuls.
    def rms_per_head(t, w):
        parts = []
        for h in range(heads):
            seg = t[:, h * D:(h + 1) * D]
            ms = jnp.mean(seg * seg, axis=-1, keepdims=True)
            parts.append(seg * jax.lax.rsqrt(ms + rms_eps))
        return jnp.concatenate(parts, axis=-1) * w

    q = rms_per_head(q, qscale_ref[...])
    k = rms_per_head(k, kscale_ref[...])

    # Fused RoPE: out[c] = A[c]*t[c] + B[c]*t[partner(c)], partner swaps pairs (2i,2i+1).
    # Partner is built from two XLU lane-rolls; a rolled iota detects the roll
    # direction at runtime so the result is independent of the roll sign convention.
    idx = jax.lax.broadcasted_iota(jnp.int32, (tl, H), 1)
    even = jnp.bitwise_and(idx, 1) == 0
    ridx = pltpu.roll(idx, 1, axis=1)
    delta = ridx - idx
    roll1_is_next = jnp.logical_or(delta == 1, delta == 1 - H)
    sel = even == roll1_is_next
    ca = ra_ref[...]
    cb = rb_ref[...]

    def rope(t):
        r_a = pltpu.roll(t, 1, axis=1)
        r_b = pltpu.roll(t, H - 1, axis=1)
        partner = jnp.where(sel, r_a, r_b)
        return ca * t + cb * partner

    q_ref[0] = rope(q).astype(q_ref.dtype)
    k_ref[0] = rope(k).astype(k_ref.dtype)
    v_ref[0] = v.astype(v_ref.dtype)


def pre_attn(x, shift, scale, qkv_w, qkv_b, q_scale, k_scale, rope_a, rope_b,
             num_heads, tl, out_dtype):
    B, L, H = x.shape
    D = H // num_heads
    assert L % tl == 0
    kernel = partial(pre_attn_kernel, heads=num_heads, D=D,
                     ln_eps=LN_EPS, rms_eps=RMS_EPS)
    xspec = pl.BlockSpec((1, tl, H), lambda b, l: (b, l, 0))
    mspec = pl.BlockSpec((1, 1, H), lambda b, l: (b, 0, 0))
    rspec = pl.BlockSpec((tl, H), lambda b, l: (l, 0))

    def const(shape):
        # TODO(synk): at Flux scale, tile qkv_w's 3H output dim like the MLP's M and
        # single-buffer constant weight blocks (pl.Buffered(1)) for v7x VMEM.
        return pl.BlockSpec(shape, lambda b, l: (0,) * len(shape))

    cost = pl.CostEstimate(
        flops=2 * B * L * H * 3 * H,
        transcendentals=0,
        bytes_accessed=int(B * L * H * 4 + qkv_w.size * qkv_w.dtype.itemsize
                           + 3 * B * L * H * jnp.dtype(out_dtype).itemsize))
    out_shape = [jax.ShapeDtypeStruct((B, L, H), out_dtype)] * 3
    return pl.pallas_call(
        kernel,
        grid=(B, L // tl),
        in_specs=[xspec, mspec, mspec,
                  const(qkv_w.shape), const((1, 3 * H)),
                  const((1, H)), const((1, H)),
                  rspec, rspec],
        out_specs=[xspec, xspec, xspec],
        out_shape=out_shape,
        compiler_params=pltpu.CompilerParams(
            dimension_semantics=("parallel", "parallel")),
        cost_estimate=cost,
    )(x, shift, scale, qkv_w, qkv_b, q_scale, k_scale, rope_a, rope_b)


# ----------------------------------------------------------------------------
# Kernel 2: flash attention
#   grid = (B, heads, L//tq, L//tkv); kv innermost "arbitrary"; online softmax.
#   q/k/v/o stay in channels-last (B, L, H); heads are sliced by the index_map.
# ----------------------------------------------------------------------------
def flash_attn_kernel(q_ref, k_ref, v_ref, o_ref, m_sc, l_sc, acc_sc, *, scale):
    ki = pl.program_id(3)

    @pl.when(ki == 0)
    def _():
        m_sc[...] = jnp.full(m_sc.shape, -jnp.inf, m_sc.dtype)
        l_sc[...] = jnp.zeros(l_sc.shape, l_sc.dtype)
        acc_sc[...] = jnp.zeros(acc_sc.shape, acc_sc.dtype)

    q = q_ref[0]                                      # (tq, D)
    k = k_ref[0]                                      # (tkv, D)
    s = jax.lax.dot_general(q, k, (((1,), (1,)), ((), ())),
                            preferred_element_type=jnp.float32) * scale
    m_prev = m_sc[...]
    m_new = jnp.maximum(m_prev, jnp.max(s, axis=-1, keepdims=True))
    alpha = jnp.exp(m_prev - m_new)
    p = jnp.exp(s - m_new)
    l_sc[...] = alpha * l_sc[...] + jnp.sum(p, axis=-1, keepdims=True)
    acc_sc[...] = alpha * acc_sc[...] + jnp.dot(
        p.astype(v_ref.dtype), v_ref[0], preferred_element_type=jnp.float32)
    m_sc[...] = m_new

    @pl.when(ki == pl.num_programs(3) - 1)
    def _():
        inv = pl.reciprocal(l_sc[...], approx=True)
        o_ref[0] = (acc_sc[...] * inv).astype(o_ref.dtype)


def flash_attention(q, k, v, num_heads, tq, tkv):
    B, L, H = q.shape
    D = H // num_heads
    assert D % 128 == 0 and L % tq == 0 and L % tkv == 0
    kernel = partial(flash_attn_kernel, scale=1.0 / math.sqrt(D))
    qspec = pl.BlockSpec((1, tq, D), lambda b, h, qi, ki: (b, qi, h))
    kvspec = pl.BlockSpec((1, tkv, D), lambda b, h, qi, ki: (b, ki, h))
    cost = pl.CostEstimate(
        flops=4 * B * num_heads * L * L * D,
        transcendentals=B * num_heads * L * L,
        bytes_accessed=int(4 * B * L * H * q.dtype.itemsize))
    return pl.pallas_call(
        kernel,
        grid=(B, num_heads, L // tq, L // tkv),
        in_specs=[qspec, kvspec, kvspec],
        out_specs=qspec,
        out_shape=jax.ShapeDtypeStruct((B, L, H), q.dtype),
        scratch_shapes=[pltpu.VMEM((tq, 1), jnp.float32),
                        pltpu.VMEM((tq, 1), jnp.float32),
                        pltpu.VMEM((tq, D), jnp.float32)],
        compiler_params=pltpu.CompilerParams(
            dimension_semantics=("parallel", "parallel", "parallel", "arbitrary")),
        cost_estimate=cost,
    )(q, k, v)


# ----------------------------------------------------------------------------
# Kernel 3: post-attention
#   attn proj + gated residual + LayerNorm + modulate (cached in scratch),
#   then MLP tiled over the hidden dim M (innermost "arbitrary" axis, f32 acc).
#   The attn input is the packed (B, L_tot, H) tensor; the per-stream slice is
#   taken for free by an index-map block offset.
# ----------------------------------------------------------------------------
def post_attn_kernel(x_ref, attn_ref, gate1_ref, shift2_ref, scale2_ref, gate2_ref,
                     pw_ref, pb_ref, w1_ref, b1_ref, w2_ref, b2_ref,
                     o_ref, x1_sc, h_sc, acc_sc, *, ln_eps):
    mi = pl.program_id(2)

    @pl.when(mi == 0)
    def _():
        a = attn_ref[0].astype(pw_ref.dtype)
        proj = jnp.dot(a, pw_ref[...],
                       preferred_element_type=jnp.float32) + pb_ref[...]
        x1 = x_ref[0] + gate1_ref[0] * proj
        x1_sc[...] = x1
        mu = jnp.mean(x1, axis=-1, keepdims=True)
        xc = x1 - mu
        var = jnp.mean(xc * xc, axis=-1, keepdims=True)
        xn = xc * jax.lax.rsqrt(var + ln_eps)
        h = (1.0 + scale2_ref[0]) * xn + shift2_ref[0]
        h_sc[...] = h.astype(h_sc.dtype)
        acc_sc[...] = jnp.zeros(acc_sc.shape, acc_sc.dtype)

    # one M-tile of the MLP: h @ w1[:, m] -> tanh-GELU -> @ w2[m, :] (f32 accumulate)
    h1 = jnp.dot(h_sc[...], w1_ref[...],
                 preferred_element_type=jnp.float32) + b1_ref[...]
    g = 0.5 * h1 * (1.0 + jnp.tanh(GELU_C * (h1 + 0.044715 * h1 * h1 * h1)))
    acc_sc[...] += jnp.dot(g.astype(w2_ref.dtype), w2_ref[...],
                           preferred_element_type=jnp.float32)

    @pl.when(mi == pl.num_programs(2) - 1)
    def _():
        o_ref[0] = (x1_sc[...]
                    + gate2_ref[0] * (acc_sc[...] + b2_ref[...])).astype(o_ref.dtype)


def post_attn(x, attn_full, l_off_blk, gate1, shift2, scale2, gate2,
              pw, pb, w1, b1, w2, b2, tl, tm):
    B, L, H = x.shape
    M = w1.shape[1]
    assert L % tl == 0 and M % tm == 0
    kernel = partial(post_attn_kernel, ln_eps=LN_EPS)
    xspec = pl.BlockSpec((1, tl, H), lambda b, l, m: (b, l, 0))
    aspec = pl.BlockSpec((1, tl, H), lambda b, l, m: (b, l + l_off_blk, 0))
    mspec = pl.BlockSpec((1, 1, H), lambda b, l, m: (b, 0, 0))
    pwspec = pl.BlockSpec((H, H), lambda b, l, m: (0, 0))
    pbspec = pl.BlockSpec((1, H), lambda b, l, m: (0, 0))
    w1spec = pl.BlockSpec((H, tm), lambda b, l, m: (0, m))
    b1spec = pl.BlockSpec((1, tm), lambda b, l, m: (0, m))
    w2spec = pl.BlockSpec((tm, H), lambda b, l, m: (m, 0))
    b2spec = pl.BlockSpec((1, H), lambda b, l, m: (0, 0))
    cost = pl.CostEstimate(
        flops=2 * B * L * (H * H + 2 * H * M),
        transcendentals=B * L * M,
        bytes_accessed=int(B * L * H * (4 + attn_full.dtype.itemsize + 4)
                           + (H * H + 2 * H * M) * w1.dtype.itemsize))
    return pl.pallas_call(
        kernel,
        grid=(B, L // tl, M // tm),
        in_specs=[xspec, aspec, mspec, mspec, mspec, mspec,
                  pwspec, pbspec, w1spec, b1spec, w2spec, b2spec],
        out_specs=xspec,
        out_shape=jax.ShapeDtypeStruct((B, L, H), x.dtype),
        scratch_shapes=[pltpu.VMEM((tl, H), jnp.float32),
                        pltpu.VMEM((tl, H), w1.dtype),
                        pltpu.VMEM((tl, H), jnp.float32)],
        compiler_params=pltpu.CompilerParams(
            dimension_semantics=("parallel", "parallel", "arbitrary")),
        cost_estimate=cost,
    )(x, attn_full, gate1, shift2, scale2, gate2, pw, pb, w1, b1, w2, b2)


# ----------------------------------------------------------------------------
# Full DoubleStreamBlock forward (kernel path)
# ----------------------------------------------------------------------------
def double_stream_block(img, txt, vec, pe, p, num_heads, *, dtype=jnp.bfloat16,
                        tl=128, tq=128, tkv=128, tm=256):
    B, L_img, H = img.shape
    L_txt = txt.shape[1]
    L_tot = L_txt + L_img
    D = H // num_heads
    assert H == num_heads * D and D % 2 == 0
    assert L_txt % tl == 0 and L_img % tl == 0

    # --- modulation (chunk order: shift1, scale1, gate1, shift2, scale2, gate2) ---
    # TODO(synk): tiny (B,H)@(H,6H) matmul left to plain XLA per perf review
    # (standalone pallas_call launch overhead exceeds the work).
    def mod6(w, b):
        m = jax.nn.silu(vec) @ w + b
        return [m[:, i * H:(i + 1) * H].reshape(B, 1, H) for i in range(6)]

    i_sh1, i_sc1, i_g1, i_sh2, i_sc2, i_g2 = mod6(p['img_mod_w'], p['img_mod_b'])
    t_sh1, t_sc1, t_g1, t_sh2, t_sc2, t_g2 = mod6(p['txt_mod_w'], p['txt_mod_b'])

    # --- RoPE coefficient tables (L_tot, H) derived from the Flux pe tensor ---
    pe_ = pe.reshape(L_tot, D // 2, 2, 2).astype(jnp.float32)
    ra = jnp.stack([pe_[:, :, 0, 0], pe_[:, :, 1, 1]], axis=-1).reshape(L_tot, D)
    rb = jnp.stack([pe_[:, :, 0, 1], pe_[:, :, 1, 0]], axis=-1).reshape(L_tot, D)
    ra = jnp.tile(ra, (1, num_heads))
    rb = jnp.tile(rb, (1, num_heads))

    cast_w = lambda name: p[name].astype(dtype)
    i_qs = jnp.tile(p['img_qscale'], num_heads).reshape(1, H)
    i_ks = jnp.tile(p['img_kscale'], num_heads).reshape(1, H)
    t_qs = jnp.tile(p['txt_qscale'], num_heads).reshape(1, H)
    t_ks = jnp.tile(p['txt_kscale'], num_heads).reshape(1, H)

    tq_, tk_, tv_ = pre_attn(txt, t_sh1, t_sc1, cast_w('txt_qkv_w'),
                             p['txt_qkv_b'].reshape(1, -1), t_qs, t_ks,
                             ra[:L_txt], rb[:L_txt], num_heads, tl, dtype)
    iq_, ik_, iv_ = pre_attn(img, i_sh1, i_sc1, cast_w('img_qkv_w'),
                             p['img_qkv_b'].reshape(1, -1), i_qs, i_ks,
                             ra[L_txt:], rb[L_txt:], num_heads, tl, dtype)

    # txt first, then img (matches torch.cat along the sequence dim)
    # TODO(synk): this concat could be removed by writing pre_attn outputs straight
    # into the packed (B, L_tot, H) buffers via out_spec offsets + input_output_aliases.
    q = jnp.concatenate([tq_, iq_], axis=1)
    k = jnp.concatenate([tk_, ik_], axis=1)
    v = jnp.concatenate([tv_, iv_], axis=1)

    attn = flash_attention(q, k, v, num_heads, tq, tkv)      # (B, L_tot, H), dtype

    txt_out = post_attn(txt, attn, 0, t_g1, t_sh2, t_sc2, t_g2,
                        cast_w('txt_proj_w'), p['txt_proj_b'].reshape(1, -1),
                        cast_w('txt_mlp_w1'), p['txt_mlp_b1'].reshape(1, -1),
                        cast_w('txt_mlp_w2'), p['txt_mlp_b2'].reshape(1, -1),
                        tl, tm)
    img_out = post_attn(img, attn, L_txt // tl, i_g1, i_sh2, i_sc2, i_g2,
                        cast_w('img_proj_w'), p['img_proj_b'].reshape(1, -1),
                        cast_w('img_mlp_w1'), p['img_mlp_b1'].reshape(1, -1),
                        cast_w('img_mlp_w2'), p['img_mlp_b2'].reshape(1, -1),
                        tl, tm)
    return img_out, txt_out


# ----------------------------------------------------------------------------
# Flux-style RoPE pe builder + pure-JAX reference for validation
# ----------------------------------------------------------------------------
def apply_rope(xq, xk, pe):
    B, Hh, L, D = xq.shape
    xq_ = xq.reshape(B, Hh, L, D // 2, 1, 2)
    xk_ = xk.reshape(B, Hh, L, D // 2, 1, 2)
    xq_out = pe[..., 0] * xq_[..., 0] + pe[..., 1] * xq_[..., 1]
    xk_out = pe[..., 0] * xk_[..., 0] + pe[..., 1] * xk_[..., 1]
    return xq_out.reshape(B, Hh, L, D), xk_out.reshape(B, Hh, L, D)


def build_rope_pe(L, D):
    pos = jnp.arange(L, dtype=jnp.float32)
    freqs = 1.0 / (10000.0 ** (jnp.arange(0, D, 2, dtype=jnp.float32) / D))
    ang = pos[:, None] * freqs[None, :]                 # (L, D//2)
    cos, sin = jnp.cos(ang), jnp.sin(ang)
    row0 = jnp.stack([cos, -sin], axis=-1)
    row1 = jnp.stack([sin, cos], axis=-1)
    pe = jnp.stack([row0, row1], axis=-2)               # (L, D//2, 2, 2)
    return pe[None, None]                               # (1, 1, L, D//2, 2, 2)


def reference_block(img, txt, vec, pe, p, num_heads):
    H = img.shape[-1]
    D = H // num_heads
    heads = num_heads
    B = img.shape[0]
    L_txt = txt.shape[1]

    silu = lambda x: x * jax.nn.sigmoid(x)

    def ln(x):
        mu = x.mean(-1, keepdims=True)
        var = ((x - mu) ** 2).mean(-1, keepdims=True)
        return (x - mu) * jax.lax.rsqrt(var + LN_EPS)

    def mod(v, w, b):
        o = silu(v) @ w + b
        return [o[:, None, i * H:(i + 1) * H] for i in range(6)]

    i_sh1, i_sc1, i_g1, i_sh2, i_sc2, i_g2 = mod(vec, p['img_mod_w'], p['img_mod_b'])
    t_sh1, t_sc1, t_g1, t_sh2, t_sc2, t_g2 = mod(vec, p['txt_mod_w'], p['txt_mod_b'])

    def qkv_branch(x, sh, sc, wqkv, bqkv, qs, ks):
        xm = (1 + sc) * ln(x) + sh
        qkv = xm @ wqkv + bqkv
        Bn, Ln, _ = qkv.shape
        qkv = qkv.reshape(Bn, Ln, 3, heads, D).transpose(2, 0, 3, 1, 4)
        q, k, v = qkv[0], qkv[1], qkv[2]

        def rms(t, w):
            ms = (t * t).mean(-1, keepdims=True)
            return t * jax.lax.rsqrt(ms + RMS_EPS) * w

        return rms(q, qs), rms(k, ks), v

    iq, ik, iv = qkv_branch(img, i_sh1, i_sc1, p['img_qkv_w'], p['img_qkv_b'],
                            p['img_qscale'], p['img_kscale'])
    tq, tk, tv = qkv_branch(txt, t_sh1, t_sc1, p['txt_qkv_w'], p['txt_qkv_b'],
                            p['txt_qscale'], p['txt_kscale'])

    q = jnp.concatenate([tq, iq], axis=2)
    k = jnp.concatenate([tk, ik], axis=2)
    v = jnp.concatenate([tv, iv], axis=2)
    q, k = apply_rope(q, k, pe)

    s = jnp.einsum('bhqd,bhkd->bhqk', q, k) * (1.0 / math.sqrt(D))
    pattn = jax.nn.softmax(s, axis=-1)
    o = jnp.einsum('bhqk,bhkd->bhqd', pattn, v)
    Ltot = q.shape[2]
    o = o.transpose(0, 2, 1, 3).reshape(B, Ltot, H)
    t_attn, i_attn = o[:, :L_txt], o[:, L_txt:]

    def post(x, a, g1, sh2, sc2, g2, pw, pb, w1, b1, w2, b2):
        x1 = x + g1 * (a @ pw + pb)
        h = (1 + sc2) * ln(x1) + sh2
        h1 = h @ w1 + b1
        g = 0.5 * h1 * (1 + jnp.tanh(GELU_C * (h1 + 0.044715 * h1 ** 3)))
        return x1 + g2 * (g @ w2 + b2)

    img_o = post(img, i_attn, i_g1, i_sh2, i_sc2, i_g2,
                 p['img_proj_w'], p['img_proj_b'],
                 p['img_mlp_w1'], p['img_mlp_b1'], p['img_mlp_w2'], p['img_mlp_b2'])
    txt_o = post(txt, t_attn, t_g1, t_sh2, t_sc2, t_g2,
                 p['txt_proj_w'], p['txt_proj_b'],
                 p['txt_mlp_w1'], p['txt_mlp_b1'], p['txt_mlp_w2'], p['txt_mlp_b2'])
    return img_o, txt_o


# ----------------------------------------------------------------------------
if __name__ == "__main__":
    key = jax.random.PRNGKey(0)
    B, num_heads, D = 2, 2, 128          # lane-aligned head_dim so head slicing is free
    H = num_heads * D                    # 256
    M = 2 * H                            # 512
    L_txt, L_img = 128, 384
    L = L_txt + L_img

    keys = iter(jax.random.split(key, 40))

    def nrm(shape, scale=0.05):
        return jax.random.normal(next(keys), shape, jnp.float32) * scale

    # Deterministic synthetic parameters (weights stored pre-transposed: x @ W)
    p = {
        'img_mod_w': nrm((H, 6 * H)), 'img_mod_b': nrm((6 * H,)),
        'txt_mod_w': nrm((H, 6 * H)), 'txt_mod_b': nrm((6 * H,)),
        'img_qkv_w': nrm((H, 3 * H)), 'img_qkv_b': nrm((3 * H,)),
        'txt_qkv_w': nrm((H, 3 * H)), 'txt_qkv_b': nrm((3 * H,)),
        'img_qscale': 1.0 + nrm((D,)), 'img_kscale': 1.0 + nrm((D,)),
        'txt_qscale': 1.0 + nrm((D,)), 'txt_kscale': 1.0 + nrm((D,)),
        'img_proj_w': nrm((H, H)), 'img_proj_b': nrm((H,)),
        'txt_proj_w': nrm((H, H)), 'txt_proj_b': nrm((H,)),
        'img_mlp_w1': nrm((H, M)), 'img_mlp_b1': nrm((M,)),
        'img_mlp_w2': nrm((M, H)), 'img_mlp_b2': nrm((H,)),
        'txt_mlp_w1': nrm((H, M)), 'txt_mlp_b1': nrm((M,)),
        'txt_mlp_w2': nrm((M, H)), 'txt_mlp_b2': nrm((H,)),
    }

    kx = jax.random.split(next(keys), 3)
    img = jax.random.normal(kx[0], (B, L_img, H), jnp.float32)
    txt = jax.random.normal(kx[1], (B, L_txt, H), jnp.float32)
    vec = jax.random.normal(kx[2], (B, H), jnp.float32)
    pe = build_rope_pe(L, D)

    img_r, txt_r = reference_block(img, txt, vec, pe, p, num_heads)
    jax.block_until_ready((img_r, txt_r))

    # Validate the f32 compute path tightly, then the bf16 production path loosely.
    for dt, tol in ((jnp.float32, 2.5e-2), (jnp.bfloat16, 7e-2)):
        img_o, txt_o = double_stream_block(img, txt, vec, pe, p, num_heads,
                                           dtype=dt, tl=128, tq=128, tkv=128, tm=256)
        jax.block_until_ready((img_o, txt_o))
        err_i = float(jnp.max(jnp.abs(img_o.astype(jnp.float32) - img_r)))
        err_t = float(jnp.max(jnp.abs(txt_o.astype(jnp.float32) - txt_r)))
        assert err_i < tol and err_t < tol, (str(dt), err_i, err_t)

    print("KERNEL_OK")
</pallas_src>

<mosaic_0001>
module attributes {stable_mosaic.version = 11 : i64} {
  func.func @pre_attn_kernel(%arg0: i32, %arg1: i32, %arg2: memref<1x128x256xf32, #tpu.memory_space<vmem>>, %arg3: memref<1x1x256xf32, #tpu.memory_space<vmem>>, %arg4: memref<1x1x256xf32, #tpu.memory_space<vmem>>, %arg5: memref<256x768xf32, #tpu.memory_space<vmem>>, %arg6: memref<1x768xf32, #tpu.memory_space<vmem>>, %arg7: memref<1x256xf32, #tpu.memory_space<vmem>>, %arg8: memref<1x256xf32, #tpu.memory_space<vmem>>, %arg9: memref<128x256xf32, #tpu.memory_space<vmem>>, %arg10: memref<128x256xf32, #tpu.memory_space<vmem>>, %arg11: memref<1x128x256xf32, #tpu.memory_space<vmem>>, %arg12: memref<1x128x256xf32, #tpu.memory_space<vmem>>, %arg13: memref<1x128x256xf32, #tpu.memory_space<vmem>>) attributes {dimension_semantics = [#tpu.dimension_semantics<parallel>, #tpu.dimension_semantics<parallel>], iteration_bounds = array<i64: 2, 1>, scalar_prefetch = 0 : i64, scratch_operands = 0 : i64, tpu.core_type = #tpu.core_type<tc>, window_params = [{transform_indices = @transform_0, window_bounds = array<i64: 1, 128, 256>}, {transform_indices = @transform_1, window_bounds = array<i64: 1, 1, 256>}, {transform_indices = @transform_2, window_bounds = array<i64: 1, 1, 256>}, {pipeline_mode = #tpu.pipeline_mode<synchronous>, transform_indices = @transform_3, window_bounds = array<i64: 256, 768>}, {pipeline_mode = #tpu.pipeline_mode<synchronous>, transform_indices = @transform_4, window_bounds = array<i64: 1, 768>}, {pipeline_mode = #tpu.pipeline_mode<synchronous>, transform_indices = @transform_5, window_bounds = array<i64: 1, 256>}, {pipeline_mode = #tpu.pipeline_mode<synchronous>, transform_indices = @transform_6, window_bounds = array<i64: 1, 256>}, {transform_indices = @transform_7, window_bounds = array<i64: 128, 256>}, {transform_indices = @transform_8, window_bounds = array<i64: 128, 256>}, {transform_indices = @transform_9, window_bounds = array<i64: 1, 128, 256>}, {transform_indices = @transform_10, window_bounds = array<i64: 1, 128, 256>}, {transform_indices = @transform_11, window_bounds = array<i64: 1, 128, 256>}]} {
    %c0 = arith.constant 0 : index
    %c0_0 = arith.constant 0 : index
    %c0_1 = arith.constant 0 : index
    %0 = vector.load %arg2[%c0, %c0_0, %c0_1] : memref<1x128x256xf32, #tpu.memory_space<vmem>>, vector<1x128x256xf32>
    %1 = vector.shape_cast %0 : vector<1x128x256xf32> to vector<128x256xf32>
    %cst = arith.constant dense<0.000000e+00> : vector<128xf32>
    %2 = vector.multi_reduction <add>, %1, %cst [1] : vector<128x256xf32> to vector<128xf32>
    %3 = vector.shape_cast %2 : vector<128xf32> to vector<128x1xf32>
    %cst_2 = arith.constant 2.560000e+02 : f32
    %4 = vector.broadcast %cst_2 : f32 to vector<128x1xf32>
    %5 = arith.divf %3, %4 : vector<128x1xf32>
    %6 = vector.broadcast %5 : vector<128x1xf32> to vector<128x256xf32>
    %7 = arith.subf %1, %6 : vector<128x256xf32>
    %8 = arith.mulf %7, %7 : vector<128x256xf32>
    %cst_3 = arith.constant dense<0.000000e+00> : vector<128xf32>
    %9 = vector.multi_reduction <add>, %8, %cst_3 [1] : vector<128x256xf32> to vector<128xf32>
    %10 = vector.shape_cast %9 : vector<128xf32> to vector<128x1xf32>
    %cst_4 = arith.constant 2.560000e+02 : f32
    %11 = vector.broadcast %cst_4 : f32 to vector<128x1xf32>
    %12 = arith.divf %10, %11 : vector<128x1xf32>
    %cst_5 = arith.constant 9.99999997E-7 : f32
    %13 = vector.broadcast %cst_5 : f32 to vector<128x1xf32>
    %14 = arith.addf %12, %13 : vector<128x1xf32>
    %15 = math.rsqrt %14 : vector<128x1xf32>
    %16 = vector.broadcast %15 : vector<128x1xf32> to vector<128x256xf32>
    %17 = arith.mulf %7, %16 : vector<128x256xf32>
    %c0_6 = arith.constant 0 : index
    %c0_7 = arith.constant 0 : index
    %c0_8 = arith.constant 0 : index
    %18 = vector.load %arg4[%c0_6, %c0_7, %c0_8] : memref<1x1x256xf32, #tpu.memory_space<vmem>>, vector<1x1x256xf32>
    %19 = vector.shape_cast %18 : vector<1x1x256xf32> to vector<1x256xf32>
    %cst_9 = arith.constant 1.000000e+00 : f32
    %20 = vector.broadcast %cst_9 : f32 to vector<1x256xf32>
    %21 = arith.addf %20, %19 : vector<1x256xf32>
    %22 = vector.broadcast %21 : vector<1x256xf32> to vector<128x256xf32>
    %23 = arith.mulf %22, %17 : vector<128x256xf32>
    %c0_10 = arith.constant 0 : index
    %c0_11 = arith.constant 0 : index
    %c0_12 = arith.constant 0 : index
    %24 = vector.load %arg3[%c0_10, %c0_11, %c0_12] : memref<1x1x256xf32, #tpu.memory_space<vmem>>, vector<1x1x256xf32>
    %25 = vector.shape_cast %24 : vector<1x1x256xf32> to vector<1x256xf32>
    %26 = vector.broadcast %25 : vector<1x256xf32> to vector<128x256xf32>
    %27 = arith.addf %23, %26 : vector<128x256xf32>
    %c0_13 = arith.constant 0 : index
    %c0_14 = arith.constant 0 : index
    %28 = vector.load %arg5[%c0_13, %c0_14] : memref<256x768xf32, #tpu.memory_space<vmem>>, vector<256x768xf32>
    %cst_15 = arith.constant dense<0.000000e+00> : vector<128x768xf32>
    %29 = tpu.matmul %27, %28, %cst_15 {dimension_numbers = #tpu.dot_dimension_numbers<[1], [0], [0], [1], [0, 0, 1, 1], [], []>} : vector<128x256xf32>, vector<256x768xf32>, vector<128x768xf32> -> vector<128x768xf32>
    %c0_16 = arith.constant 0 : index
    %c0_17 = arith.constant 0 : index
    %30 = vector.load %arg6[%c0_16, %c0_17] : memref<1x768xf32, #tpu.memory_space<vmem>>, vector<1x768xf32>
    %31 = vector.broadcast %30 : vector<1x768xf32> to vector<128x768xf32>
    %32 = arith.addf %29, %31 : vector<128x768xf32>
    %33 = vector.extract_strided_slice %32 {offsets = [0, 0], sizes = [128, 256], strides = [1, 1]} : vector<128x768xf32> to vector<128x256xf32>
    %34 = vector.extract_strided_slice %32 {offsets = [0, 256], sizes = [128, 256], strides = [1, 1]} : vector<128x768xf32> to vector<128x256xf32>
    %35 = vector.extract_strided_slice %32 {offsets = [0, 512], sizes = [128, 256], strides = [1, 1]} : vector<128x768xf32> to vector<128x256xf32>
    %c0_18 = arith.constant 0 : index
    %c0_19 = arith.constant 0 : index
    %36 = vector.load %arg7[%c0_18, %c0_19] : memref<1x256xf32, #tpu.memory_space<vmem>>, vector<1x256xf32>
    %37 = vector.extract_strided_slice %33 {offsets = [0, 0], sizes = [128, 128], strides = [1, 1]} : vector<128x256xf32> to vector<128x128xf32>
    %38 = arith.mulf %37, %37 : vector<128x128xf32>
    %cst_20 = arith.constant dense<0.000000e+00> : vector<128xf32>
    %39 = vector.multi_reduction <add>, %38, %cst_20 [1] : vector<128x128xf32> to vector<128xf32>
    %40 = vector.shape_cast %39 : vector<128xf32> to vector<128x1xf32>
    %cst_21 = arith.constant 1.280000e+02 : f32
    %41 = vector.broadcast %cst_21 : f32 to vector<128x1xf32>
    %42 = arith.divf %40, %41 : vector<128x1xf32>
    %cst_22 = arith.constant 1.1920929E-7 : f32
    %43 = vector.broadcast %cst_22 : f32 to vector<128x1xf32>
    %44 = arith.addf %42, %43 : vector<128x1xf32>
    %45 = math.rsqrt %44 : vector<128x1xf32>
    %46 = vector.broadcast %45 : vector<128x1xf32> to vector<128x128xf32>
    %47 = arith.mulf %37, %46 : vector<128x128xf32>
    %48 = vector.extract_strided_slice %33 {offsets = [0, 128], sizes = [128, 128], strides = [1, 1]} : vector<128x256xf32> to vector<128x128xf32>
    %49 = arith.mulf %48, %48 : vector<128x128xf32>
    %cst_23 = arith.constant dense<0.000000e+00> : vector<128xf32>
    %50 = vector.multi_reduction <add>, %49, %cst_23 [1] : vector<128x128xf32> to vector<128xf32>
    %51 = vector.shape_cast %50 : vector<128xf32> to vector<128x1xf32>
    %cst_24 = arith.constant 1.280000e+02 : f32
    %52 = vector.broadcast %cst_24 : f32 to vector<128x1xf32>
    %53 = arith.divf %51, %52 : vector<128x1xf32>
    %cst_25 = arith.constant 1.1920929E-7 : f32
    %54 = vector.broadcast %cst_25 : f32 to vector<128x1xf32>
    %55 = arith.addf %53, %54 : vector<128x1xf32>
    %56 = math.rsqrt %55 : vector<128x1xf32>
    %57 = vector.broadcast %56 : vector<128x1xf32> to vector<128x128xf32>
    %58 = arith.mulf %48, %57 : vector<128x128xf32>
    %59 = tpu.concatenate %47, %58 in 1 : vector<128x128xf32>, vector<128x128xf32> -> vector<128x256xf32>
    %60 = vector.broadcast %36 : vector<1x256xf32> to vector<128x256xf32>
    %61 = arith.mulf %59, %60 : vector<128x256xf32>
    %c0_26 = arith.constant 0 : index
    %c0_27 = arith.constant 0 : index
    %62 = vector.load %arg8[%c0_26, %c0_27] : memref<1x256xf32, #tpu.memory_space<vmem>>, vector<1x256xf32>
    %63 = vector.extract_strided_slice %34 {offsets = [0, 0], sizes = [128, 128], strides = [1, 1]} : vector<128x256xf32> to vector<128x128xf32>
    %64 = arith.mulf %63, %63 : vector<128x128xf32>
    %cst_28 = arith.constant dense<0.000000e+00> : vector<128xf32>
    %65 = vector.multi_reduction <add>, %64, %cst_28 [1] : vector<128x128xf32> to vector<128xf32>
    %66 = vector.shape_cast %65 : vector<128xf32> to vector<128x1xf32>
    %cst_29 = arith.constant 1.280000e+02 : f32
    %67 = vector.broadcast %cst_29 : f32 to vector<128x1xf32>
    %68 = arith.divf %66, %67 : vector<128x1xf32>
    %cst_30 = arith.constant 1.1920929E-7 : f32
    %69 = vector.broadcast %cst_30 : f32 to vector<128x1xf32>
    %70 = arith.addf %68, %69 : vector<128x1xf32>
    %71 = math.rsqrt %70 : vector<128x1xf32>
    %72 = vector.broadcast %71 : vector<128x1xf32> to vector<128x128xf32>
    %73 = arith.mulf %63, %72 : vector<128x128xf32>
    %74 = vector.extract_strided_slice %34 {offsets = [0, 128], sizes = [128, 128], strides = [1, 1]} : vector<128x256xf32> to vector<128x128xf32>
    %75 = arith.mulf %74, %74 : vector<128x128xf32>
    %cst_31 = arith.constant dense<0.000000e+00> : vector<128xf32>
    %76 = vector.multi_reduction <add>, %75, %cst_31 [1] : vector<128x128xf32> to vector<128xf32>
    %77 = vector.shape_cast %76 : vector<128xf32> to vector<128x1xf32>
    %cst_32 = arith.constant 1.280000e+02 : f32
    %78 = vector.broadcast %cst_32 : f32 to vector<128x1xf32>
    %79 = arith.divf %77, %78 : vector<128x1xf32>
    %cst_33 = arith.constant 1.1920929E-7 : f32
    %80 = vector.broadcast %cst_33 : f32 to vector<128x1xf32>
    %81 = arith.addf %79, %80 : vector<128x1xf32>
    %82 = math.rsqrt %81 : vector<128x1xf32>
    %83 = vector.broadcast %82 : vector<128x1xf32> to vector<128x128xf32>
    %84 = arith.mulf %74, %83 : vector<128x128xf32>
    %85 = tpu.concatenate %73, %84 in 1 : vector<128x128xf32>, vector<128x128xf32> -> vector<128x256xf32>
    %86 = vector.broadcast %62 : vector<1x256xf32> to vector<128x256xf32>
    %87 = arith.mulf %85, %86 : vector<128x256xf32>
    %88 = tpu.iota {dimensions = array<i32: 1>} : vector<128x256xi32>
    %c1_i32 = arith.constant 1 : i32
    %89 = vector.broadcast %c1_i32 : i32 to vector<128x256xi32>
    %90 = arith.andi %88, %89 : vector<128x256xi32>
    %c0_i32 = arith.constant 0 : i32
    %91 = vector.broadcast %c0_i32 : i32 to vector<128x256xi32>
    %92 = arith.cmpi eq, %90, %91 : vector<128x256xi32>
    %c1_i32_34 = arith.constant 1 : i32
    %93 = tpu.dynamic_rotate %88 by %c1_i32_34 dim 1 : vector<128x256xi32>, i32 -> vector<128x256xi32>
    %94 = arith.subi %93, %88 : vector<128x256xi32>
    %c1_i32_35 = arith.constant 1 : i32
    %95 = vector.broadcast %c1_i32_35 : i32 to vector<128x256xi32>
    %96 = arith.cmpi eq, %94, %95 : vector<128x256xi32>
    %c-255_i32 = arith.constant -255 : i32
    %97 = vector.broadcast %c-255_i32 : i32 to vector<128x256xi32>
    %98 = arith.cmpi eq, %94, %97 : vector<128x256xi32>
    %99 = arith.ori %96, %98 : vector<128x256xi1>
    %100 = arith.xori %92, %99 : vector<128x256xi1>
    %cst_36 = arith.constant dense<true> : vector<128x256xi1>
    %101 = arith.xori %100, %cst_36 : vector<128x256xi1>
    %c0_37 = arith.constant 0 : index
    %c0_38 = arith.constant 0 : index
    %102 = vector.load %arg9[%c0_37, %c0_38] : memref<128x256xf32, #tpu.memory_space<vmem>>, vector<128x256xf32>
    %c0_39 = arith.constant 0 : index
    %c0_40 = arith.constant 0 : index
    %103 = vector.load %arg10[%c0_39, %c0_40] : memref<128x256xf32, #tpu.memory_space<vmem>>, vector<128x256xf32>
    %c1_i32_41 = arith.constant 1 : i32
    %104 = tpu.dynamic_rotate %61 by %c1_i32_41 dim 1 : vector<128x256xf32>, i32 -> vector<128x256xf32>
    %c255_i32 = arith.constant 255 : i32
    %105 = tpu.dynamic_rotate %61 by %c255_i32 dim 1 : vector<128x256xf32>, i32 -> vector<128x256xf32>
    %106 = arith.select %101, %104, %105 : vector<128x256xi1>, vector<128x256xf32>
    %107 = arith.mulf %102, %61 : vector<128x256xf32>
    %108 = arith.mulf %103, %106 : vector<128x256xf32>
    %109 = arith.addf %107, %108 : vector<128x256xf32>
    %c0_42 = arith.constant 0 : index
    %c0_43 = arith.constant 0 : index
    %c0_44 = arith.constant 0 : index
    %110 = vector.load %arg11[%c0_42, %c0_43, %c0_44] : memref<1x128x256xf32, #tpu.memory_space<vmem>>, vector<1x128x256xf32>
    %111 = vector.shape_cast %110 : vector<1x128x256xf32> to vector<128x256xf32>
    %112 = vector.shape_cast %109 : vector<128x256xf32> to vector<1x128x256xf32>
    tpu.vector_store %arg11[%c0_42, %c0_43, %c0_44], %112 {strides = array<i32>} : memref<1x128x256xf32, #tpu.memory_space<vmem>>, vector<1x128x256xf32>,
    %c1_i32_45 = arith.constant 1 : i32
    %113 = tpu.dynamic_rotate %87 by %c1_i32_45 dim 1 : vector<128x256xf32>, i32 -> vector<128x256xf32>
    %c255_i32_46 = arith.constant 255 : i32
    %114 = tpu.dynamic_rotate %87 by %c255_i32_46 dim 1 : vector<128x256xf32>, i32 -> vector<128x256xf32>
    %115 = arith.select %101, %113, %114 : vector<128x256xi1>, vector<128x256xf32>
    %116 = arith.mulf %102, %87 : vector<128x256xf32>
    %117 = arith.mulf %103, %115 : vector<128x256xf32>
    %118 = arith.addf %116, %117 : vector<128x256xf32>
    %c0_47 = arith.constant 0 : index
    %c0_48 = arith.constant 0 : index
    %c0_49 = arith.constant 0 : index
    %119 = vector.load %arg12[%c0_47, %c0_48, %c0_49] : memref<1x128x256xf32, #tpu.memory_space<vmem>>, vector<1x128x256xf32>
    %120 = vector.shape_cast %119 : vector<1x128x256xf32> to vector<128x256xf32>
    %121 = vector.shape_cast %118 : vector<128x256xf32> to vector<1x128x256xf32>
    tpu.vector_store %arg12[%c0_47, %c0_48, %c0_49], %121 {strides = array<i32>} : memref<1x128x256xf32, #tpu.memory_space<vmem>>, vector<1x128x256xf32>,
    %c0_50 = arith.constant 0 : index
    %c0_51 = arith.constant 0 : index
    %c0_52 = arith.constant 0 : index
    %122 = vector.load %arg13[%c0_50, %c0_51, %c0_52] : memref<1x128x256xf32, #tpu.memory_space<vmem>>, vector<1x128x256xf32>
    %123 = vector.shape_cast %122 : vector<1x128x256xf32> to vector<128x256xf32>
    %124 = vector.shape_cast %35 : vector<128x256xf32> to vector<1x128x256xf32>
    tpu.vector_store %arg13[%c0_50, %c0_51, %c0_52], %124 {strides = array<i32>} : memref<1x128x256xf32, #tpu.memory_space<vmem>>, vector<1x128x256xf32>,
    return
  }
  func.func @transform_0(%arg0: i32, %arg1: i32) -> (i32, i32, i32) {
    %c0_i32 = arith.constant 0 : i32
    %c0_i32_0 = arith.constant 0 : i32
    return %arg0, %arg1, %c0_i32 : i32, i32, i32
  }
  func.func @transform_1(%arg0: i32, %arg1: i32) -> (i32, i32, i32) {
    %c0_i32 = arith.constant 0 : i32
    %c0_i32_0 = arith.constant 0 : i32
    %c0_i32_1 = arith.constant 0 : i32
    return %arg0, %c0_i32, %c0_i32_0 : i32, i32, i32
  }
  func.func @transform_2(%arg0: i32, %arg1: i32) -> (i32, i32, i32) {
    %c0_i32 = arith.constant 0 : i32
    %c0_i32_0 = arith.constant 0 : i32
    %c0_i32_1 = arith.constant 0 : i32
    return %arg0, %c0_i32, %c0_i32_0 : i32, i32, i32
  }
  func.func @transform_3(%arg0: i32, %arg1: i32) -> (i32, i32) {
    %c0_i32 = arith.constant 0 : i32
    %c0_i32_0 = arith.constant 0 : i32
    %c0_i32_1 = arith.constant 0 : i32
    return %c0_i32, %c0_i32_0 : i32, i32
  }
  func.func @transform_4(%arg0: i32, %arg1: i32) -> (i32, i32) {
    %c0_i32 = arith.constant 0 : i32
    %c0_i32_0 = arith.constant 0 : i32
    %c0_i32_1 = arith.constant 0 : i32
    return %c0_i32, %c0_i32_0 : i32, i32
  }
  func.func @transform_5(%arg0: i32, %arg1: i32) -> (i32, i32) {
    %c0_i32 = arith.constant 0 : i32
    %c0_i32_0 = arith.constant 0 : i32
    %c0_i32_1 = arith.constant 0 : i32
    return %c0_i32, %c0_i32_0 : i32, i32
  }
  func.func @transform_6(%arg0: i32, %arg1: i32) -> (i32, i32) {
    %c0_i32 = arith.constant 0 : i32
    %c0_i32_0 = arith.constant 0 : i32
    %c0_i32_1 = arith.constant 0 : i32
    return %c0_i32, %c0_i32_0 : i32, i32
  }
  func.func @transform_7(%arg0: i32, %arg1: i32) -> (i32, i32) {
    %c0_i32 = arith.constant 0 : i32
    %c0_i32_0 = arith.constant 0 : i32
    return %arg1, %c0_i32 : i32, i32
  }
  func.func @transform_8(%arg0: i32, %arg1: i32) -> (i32, i32) {
    %c0_i32 = arith.constant 0 : i32
    %c0_i32_0 = arith.constant 0 : i32
    return %arg1, %c0_i32 : i32, i32
  }
  func.func @transform_9(%arg0: i32, %arg1: i32) -> (i32, i32, i32) {
    %c0_i32 = arith.constant 0 : i32
    %c0_i32_0 = arith.constant 0 : i32
    return %arg0, %arg1, %c0_i32 : i32, i32, i32
  }
  func.func @transform_10(%arg0: i32, %arg1: i32) -> (i32, i32, i32) {
    %c0_i32 = arith.constant 0 : i32
    %c0_i32_0 = arith.constant 0 : i32
    return %arg0, %arg1, %c0_i32 : i32, i32, i32
  }
  func.func @transform_11(%arg0: i32, %arg1: i32) -> (i32, i32, i32) {
    %c0_i32 = arith.constant 0 : i32
    %c0_i32_0 = arith.constant 0 : i32
    return %arg0, %arg1, %c0_i32 : i32, i32, i32
  }
}

</mosaic_0001>

<llo_original>
// kernel: tpu_custom_call.1
$region0: #{tpu_custom_call.1}
  #allocation0 [shape = 'u32[]', space=smem, size = 0x4, offset = 0x4, fixed_abs, tag = 'smem constant byte address 0x4 - core index']
  #allocation1 [shape = 'u32[144,128]{1,0:T(1,128)}', space=vmem, size = 0x12000, scoped, tag = 'internal scratch']
  %s0 = inlined_call_operand.hbm [shape: f32[2,128,256], index: 0, kind: input, shape index: {}]
  %s1 = inlined_call_operand.hbm [shape: f32[2,1,256], index: 1, kind: input, shape index: {}]
  %s2 = inlined_call_operand.vmem [shape: f32[2,1,256], index: 2, kind: input, shape index: {}]
  %s3 = inlined_call_operand.hbm [shape: f32[256,768], index: 3, kind: input, shape index: {}]
  %s4 = inlined_call_operand.vmem [shape: f32[1,768], index: 4, kind: input, shape index: {}]
  %s5 = inlined_call_operand.vmem [shape: f32[1,256], index: 5, kind: input, shape index: {}]
  %s6 = inlined_call_operand.vmem [shape: f32[1,256], index: 6, kind: input, shape index: {}]
  %s7 = inlined_call_operand.hbm [shape: f32[128,256], index: 7, kind: input, shape index: {}]
  %s8 = inlined_call_operand.hbm [shape: f32[128,256], index: 8, kind: input, shape index: {}]
  %s9 = inlined_call_operand.hbm [shape: f32[2,128,256], index: 9, kind: output, shape index: {0}]
  %s10 = inlined_call_operand.hbm [shape: f32[2,128,256], index: 10, kind: output, shape index: {1}]
  %s11 = inlined_call_operand.hbm [shape: f32[2,128,256], index: 11, kind: output, shape index: {2}]
  %12 = xla_tuple %s9, %s10, %s11
  %s13 = sld [smem:[#allocation0]]
  $region105: #{tpu_custom_call.1} parent=0
    _
  %s15 = ssub.s32 1, %s13
  %s16 = scalar_select 0, %s15, %s13
  $region1: #{tpu_custom_call.1} parent=0
    #allocation2 [shape = 'u8[262144]{0}', space=vmem, size = 0x40000, scoped, tag = 'input window, operand 0']
    #allocation3 [shape = 's32[2]{0}', space=sflag, size = 0x8, scoped, tag = 'scoped memory for tpu_custom_call.1']
    #allocation4 [shape = 's32[2]{0}', space=sflag, size = 0x8, scoped, tag = 'scoped memory for tpu_custom_call.1']
    #allocation5 [shape = 'u8[2048]{0}', space=vmem, size = 0x800, scoped, tag = 'input window, operand 1']
    #allocation6 [shape = 's32[2]{0}', space=sflag, size = 0x8, scoped, tag = 'scoped memory for tpu_custom_call.1']
    #allocation7 [shape = 'u8[786432]{0}', space=vmem, size = 0xc0000, scoped, tag = 'input window, operand 3, single buffered']
    #allocation8 [shape = 'u8[131072]{0}', space=vmem, size = 0x20000, scoped, tag = 'input window, operand 7, single buffered']
    #allocation9 [shape = 's32[1]{0}', space=sflag, size = 0x4, scoped, tag = 'scoped memory for tpu_custom_call.1']
    #allocation10 [shape = 'u8[131072]{0}', space=vmem, size = 0x20000, scoped, tag = 'input window, operand 8, single buffered']
    #allocation11 [shape = 'u8[262144]{0}', space=vmem, size = 0x40000, scoped, tag = 'output window, operand 0']
    #allocation12 [shape = 'u8[262144]{0}', space=vmem, size = 0x40000, scoped, tag = 'output window, operand 1']
    #allocation13 [shape = 's32[2]{0}', space=sflag, size = 0x8, scoped, tag = 'scoped memory for tpu_custom_call.1']
    #allocation14 [shape = 'u8[262144]{0}', space=vmem, size = 0x40000, scoped, tag = 'output window, operand 2']
    %17 = vsyncpa [#allocation3], 0
    %s18 = scalar_lea.sflag [#allocation3], 1
    %19 = vsyncpa %s18, 0
    %20 = vsyncpa [#allocation6], 0
    %s21 = scalar_lea.sflag [#allocation6], 1
    %22 = vsyncpa %s21, 0
    %23 = vsyncpa [#allocation9], 0
    %24 = vsyncpa [#allocation4], 0
    %s25 = scalar_lea.sflag [#allocation4], 1
    %26 = vsyncpa %s25, 0
    %27 = vsyncpa [#allocation13], 0
    %s28 = scalar_lea.sflag [#allocation13], 1
    %29 = vsyncpa %s28, 0
    loop: start=0, step=1, limit=4
    $region2: #{tpu_custom_call.1} parent=1 // loop_pre_header
      _
    $region3: #{tpu_custom_call.1} parent=1 // loop_header
      %s31 = sphi 0, %s35
      %p32 = scmp.ge.s32.totalorder %s31, 4
      %s38 = sphi 0, %s50
      %s39 = sphi 0, %s46
      %s40 = sphi 0, %s38
      %s41 = sphi 0, %s39
      %s42 = sphi 0, %s40
      %s43 = sphi 0, %s41
      %s55 = sphi 0, %s57
      %s58 = sphi 0, %s55
      %s59 = sphi 0, %s58
      %s75 = sphi 0, %s59
      %s81 = sphi 0, %s83
      %s84 = sphi 0, %s81
      %s85 = sphi 0, %s84
      %s101 = sphi 0, %s85
      %s107 = sphi 0, %s109
      %s110 = sphi 0, %s107
      %s111 = sphi 0, %s110
      %s127 = sphi 0, %s111
      %s131 = sphi 0, %s131
      %s133 = sphi 0, %s131
      %s134 = sphi 0, %s133
      %s148 = sphi 0, %s134
      %s152 = sphi 0, %s152
      %s154 = sphi 0, %s152
      %s155 = sphi 0, %s154
      %s169 = sphi 0, %s155
      %s173 = sphi 0, %s173
      %s175 = sphi 0, %s173
      %s176 = sphi 0, %s175
      %s190 = sphi 0, %s176
      %s194 = sphi 0, %s194
      %s196 = sphi 0, %s194
      %s197 = sphi 0, %s196
      %s211 = sphi 0, %s197
      %s217 = sphi 0, %s219
      %s220 = sphi 0, %s217
      %s221 = sphi 0, %s220
      %s237 = sphi 0, %s221
      %s243 = sphi 0, %s245
      %s246 = sphi 0, %s243
      %s247 = sphi 0, %s246
      %s263 = sphi 0, %s247
      %s271 = sphi 0, %s273
      %s274 = sphi 0, %s271
      %s275 = sphi 0, %s274
      %s291 = sphi 0, %s275
      %s299 = sphi 0, %s301
      %s302 = sphi 0, %s299
      %s303 = sphi 0, %s302
      %s319 = sphi 0, %s303
      %s327 = sphi 0, %s329
      %s330 = sphi 0, %s327
      %s331 = sphi 0, %s330
      %s347 = sphi 0, %s331
    $region4: #{tpu_custom_call.1} parent=1 // loop_header_branch
      %34 = sbr.rel (%p32) target = $region8
    $region5: #{tpu_custom_call.1} parent=1 // loop_body
      %s36 = ssub.s32 %s31, 1
      %s37 = ssub.s32 %s31, 2
      %s44 = sadd.s32 1, %s39
      %p45 = scmp.ge.s32.totalorder %s44, 1
      %s46 = scalar_select %p45, 0, %s44
      %s47 = sadd.s32 1, %s38
      %s48 = scalar_select %p45, %s47, %s38
      %p49 = scmp.ge.s32.totalorder %s48, 2
      %s50 = scalar_select %p49, 0, %s48
      %s51 = ssub.s32 %s38, %s50
      %s52 = ssub.s32 %s39, %s46
      %s53 = sor.u32 %s51, %s52
      %p54 = scmp.eq.s32.totalorder %s53, 0
      %s56 = sadd.s32 %s55, 1
      %s57 = scalar_select %p54, %s55, %s56
      %p60 = pneg %p54
      %p61 = scmp.eq.s32.totalorder %s31, 1
      %p62 = por %p60, %p61
      %p63 = scmp.ne.s32.totalorder %s55, %s58
      %p64 = scmp.eq.s32.totalorder %s31, 0
      %p65 = por %p63, %p64
      %p66 = scmp.ne.s32.totalorder %s55, %s58
      %p67 = scmp.eq.s32.totalorder %s36, 1
      %p68 = por %p66, %p67
      %p69 = scmp.ne.s32.totalorder %s58, %s59
      %p70 = scmp.eq.s32.totalorder %s36, 0
      %p71 = por %p69, %p70
      %p72 = scmp.ne.s32.totalorder %s58, %s59
      %p73 = scmp.eq.s32.totalorder %s37, 1
      %p74 = por %p72, %p73
      %p76 = scmp.ne.s32.totalorder %s59, %s75
      %p77 = scmp.eq.s32.totalorder %s37, 0
      %p78 = por %p76, %p77
      %s79 = ssub.s32 %s38, %s50
      %p80 = scmp.eq.s32.totalorder %s79, 0
      %s82 = sadd.s32 %s81, 1
      %s83 = scalar_select %p80, %s81, %s82
      %p86 = pneg %p80
      %p87 = scmp.eq.s32.totalorder %s31, 1
      %p88 = por %p86, %p87
      %p89 = scmp.ne.s32.totalorder %s81, %s84
      %p90 = scmp.eq.s32.totalorder %s31, 0
      %p91 = por %p89, %p90
      %p92 = scmp.ne.s32.totalorder %s81, %s84
      %p93 = scmp.eq.s32.totalorder %s36, 1
      %p94 = por %p92, %p93
      %p95 = scmp.ne.s32.totalorder %s84, %s85
      %p96 = scmp.eq.s32.totalorder %s36, 0
      %p97 = por %p95, %p96
      %p98 = scmp.ne.s32.totalorder %s84, %s85
      %p99 = scmp.eq.s32.totalorder %s37, 1
      %p100 = por %p98, %p99
      %p102 = scmp.ne.s32.totalorder %s85, %s101
      %p103 = scmp.eq.s32.totalorder %s37, 0
      %p104 = por %p102, %p103
      %s105 = ssub.s32 %s38, %s50
      %p106 = scmp.eq.s32.totalorder %s105, 0
      %s108 = sadd.s32 %s107, 1
      %s109 = scalar_select %p106, %s107, %s108
      %p112 = pneg %p106
      %p113 = scmp.eq.s32.totalorder %s31, 1
      %p114 = por %p112, %p113
      %p115 = scmp.ne.s32.totalorder %s107, %s110
      %p116 = scmp.eq.s32.totalorder %s31, 0
      %p117 = por %p115, %p116
      %p118 = scmp.ne.s32.totalorder %s107, %s110
      %p119 = scmp.eq.s32.totalorder %s36, 1
      %p120 = por %p118, %p119
      %p121 = scmp.ne.s32.totalorder %s110, %s111
      %p122 = scmp.eq.s32.totalorder %s36, 0
      %p123 = por %p121, %p122
      %p124 = scmp.ne.s32.totalorder %s110, %s111
      %p125 = scmp.eq.s32.totalorder %s37, 1
      %p126 = por %p124, %p125
      %p128 = scmp.ne.s32.totalorder %s111, %s127
      %p129 = scmp.eq.s32.totalorder %s37, 0
      %p130 = por %p128, %p129
      %s132 = sadd.s32 %s131, 1
      %p135 = scmp.eq.s32.totalorder %s31, 1
      %p136 = scmp.ne.s32.totalorder %s131, %s133
      %p137 = scmp.eq.s32.totalorder %s31, 0
      %p138 = por %p136, %p137
      %p139 = scmp.ne.s32.totalorder %s131, %s133
      %p140 = scmp.eq.s32.totalorder %s36, 1
      %p141 = por %p139, %p140
      %p142 = scmp.ne.s32.totalorder %s133, %s134
      %p143 = scmp.eq.s32.totalorder %s36, 0
      %p144 = por %p142, %p143
      %p145 = scmp.ne.s32.totalorder %s133, %s134
      %p146 = scmp.eq.s32.totalorder %s37, 1
      %p147 = por %p145, %p146
      %p149 = scmp.ne.s32.totalorder %s134, %s148
      %p150 = scmp.eq.s32.totalorder %s37, 0
      %p151 = por %p149, %p150
      %s153 = sadd.s32 %s152, 1
      %p156 = scmp.eq.s32.totalorder %s31, 1
      %p157 = scmp.ne.s32.totalorder %s152, %s154
      %p158 = scmp.eq.s32.totalorder %s31, 0
      %p159 = por %p157, %p158
      %p160 = scmp.ne.s32.totalorder %s152, %s154
      %p161 = scmp.eq.s32.totalorder %s36, 1
      %p162 = por %p160, %p161
      %p163 = scmp.ne.s32.totalorder %s154, %s155
      %p164 = scmp.eq.s32.totalorder %s36, 0
      %p165 = por %p163, %p164
      %p166 = scmp.ne.s32.totalorder %s154, %s155
      %p167 = scmp.eq.s32.totalorder %s37, 1
      %p168 = por %p166, %p167
      %p170 = scmp.ne.s32.totalorder %s155, %s169
      %p171 = scmp.eq.s32.totalorder %s37, 0
      %p172 = por %p170, %p171
      %s174 = sadd.s32 %s173, 1
      %p177 = scmp.eq.s32.totalorder %s31, 1
      %p178 = scmp.ne.s32.totalorder %s173, %s175
      %p179 = scmp.eq.s32.totalorder %s31, 0
      %p180 = por %p178, %p179
      %p181 = scmp.ne.s32.totalorder %s173, %s175
      %p182 = scmp.eq.s32.totalorder %s36, 1
      %p183 = por %p181, %p182
      %p184 = scmp.ne.s32.totalorder %s175, %s176
      %p185 = scmp.eq.s32.totalorder %s36, 0
      %p186 = por %p184, %p185
      %p187 = scmp.ne.s32.totalorder %s175, %s176
      %p188 = scmp.eq.s32.totalorder %s37, 1
      %p189 = por %p187, %p188
      %p191 = scmp.ne.s32.totalorder %s176, %s190
      %p192 = scmp.eq.s32.totalorder %s37, 0
      %p193 = por %p191, %p192
      %s195 = sadd.s32 %s194, 1
      %p198 = scmp.eq.s32.totalorder %s31, 1
      %p199 = scmp.ne.s32.totalorder %s194, %s196
      %p200 = scmp.eq.s32.totalorder %s31, 0
      %p201 = por %p199, %p200
      %p202 = scmp.ne.s32.totalorder %s194, %s196
      %p203 = scmp.eq.s32.totalorder %s36, 1
      %p204 = por %p202, %p203
      %p205 = scmp.ne.s32.totalorder %s196, %s197
      %p206 = scmp.eq.s32.totalorder %s36, 0
      %p207 = por %p205, %p206
      %p208 = scmp.ne.s32.totalorder %s196, %s197
      %p209 = scmp.eq.s32.totalorder %s37, 1
      %p210 = por %p208, %p209
      %p212 = scmp.ne.s32.totalorder %s197, %s211
      %p213 = scmp.eq.s32.totalorder %s37, 0
      %p214 = por %p212, %p213
      %s215 = ssub.s32 %s39, %s46
      %p216 = scmp.eq.s32.totalorder %s215, 0
      %s218 = sadd.s32 %s217, 1
      %s219 = scalar_select %p216, %s217, %s218
      %p222 = pneg %p216
      %p223 = scmp.eq.s32.totalorder %s31, 1
      %p224 = por %p222, %p223
      %p225 = scmp.ne.s32.totalorder %s217, %s220
      %p226 = scmp.eq.s32.totalorder %s31, 0
      %p227 = por %p225, %p226
      %p228 = scmp.ne.s32.totalorder %s217, %s220
      %p229 = scmp.eq.s32.totalorder %s36, 1
      %p230 = por %p228, %p229
      %p231 = scmp.ne.s32.totalorder %s220, %s221
      %p232 = scmp.eq.s32.totalorder %s36, 0
      %p233 = por %p231, %p232
      %p234 = scmp.ne.s32.totalorder %s220, %s221
      %p235 = scmp.eq.s32.totalorder %s37, 1
      %p236 = por %p234, %p235
      %p238 = scmp.ne.s32.totalorder %s221, %s237
      %p239 = scmp.eq.s32.totalorder %s37, 0
      %p240 = por %p238, %p239
      %s241 = ssub.s32 %s39, %s46
      %p242 = scmp.eq.s32.totalorder %s241, 0
      %s244 = sadd.s32 %s243, 1
      %s245 = scalar_select %p242, %s243, %s244
      %p248 = pneg %p242
      %p249 = scmp.eq.s32.totalorder %s31, 1
      %p250 = por %p248, %p249
      %p251 = scmp.ne.s32.totalorder %s243, %s246
      %p252 = scmp.eq.s32.totalorder %s31, 0
      %p253 = por %p251, %p252
      %p254 = scmp.ne.s32.totalorder %s243, %s246
      %p255 = scmp.eq.s32.totalorder %s36, 1
      %p256 = por %p254, %p255
      %p257 = scmp.ne.s32.totalorder %s246, %s247
      %p258 = scmp.eq.s32.totalorder %s36, 0
      %p259 = por %p257, %p258
      %p260 = scmp.ne.s32.totalorder %s246, %s247
      %p261 = scmp.eq.s32.totalorder %s37, 1
      %p262 = por %p260, %p261
      %p264 = scmp.ne.s32.totalorder %s247, %s263
      %p265 = scmp.eq.s32.totalorder %s37, 0
      %p266 = por %p264, %p265
      %s267 = ssub.s32 %s38, %s50
      %s268 = ssub.s32 %s39, %s46
      %s269 = sor.u32 %s267, %s268
      %p270 = scmp.eq.s32.totalorder %s269, 0
      %s272 = sadd.s32 %s271, 1
      %s273 = scalar_select %p270, %s271, %s272
      %p276 = pneg %p270
      %p277 = scmp.eq.s32.totalorder %s31, 1
      %p278 = por %p276, %p277
      %p279 = scmp.ne.s32.totalorder %s271, %s274
      %p280 = scmp.eq.s32.totalorder %s31, 0
      %p281 = por %p279, %p280
      %p282 = scmp.ne.s32.totalorder %s271, %s274
      %p283 = scmp.eq.s32.totalorder %s36, 1
      %p284 = por %p282, %p283
      %p285 = scmp.ne.s32.totalorder %s274, %s275
      %p286 = scmp.eq.s32.totalorder %s36, 0
      %p287 = por %p285, %p286
      %p288 = scmp.ne.s32.totalorder %s274, %s275
      %p289 = scmp.eq.s32.totalorder %s37, 1
      %p290 = por %p288, %p289
      %p292 = scmp.ne.s32.totalorder %s275, %s291
      %p293 = scmp.eq.s32.totalorder %s37, 0
      %p294 = por %p292, %p293
      %s295 = ssub.s32 %s38, %s50
      %s296 = ssub.s32 %s39, %s46
      %s297 = sor.u32 %s295, %s296
      %p298 = scmp.eq.s32.totalorder %s297, 0
      %s300 = sadd.s32 %s299, 1
      %s301 = scalar_select %p298, %s299, %s300
      %p304 = pneg %p298
      %p305 = scmp.eq.s32.totalorder %s31, 1
      %p306 = por %p304, %p305
      %p307 = scmp.ne.s32.totalorder %s299, %s302
      %p308 = scmp.eq.s32.totalorder %s31, 0
      %p309 = por %p307, %p308
      %p310 = scmp.ne.s32.totalorder %s299, %s302
      %p311 = scmp.eq.s32.totalorder %s36, 1
      %p312 = por %p310, %p311
      %p313 = scmp.ne.s32.totalorder %s302, %s303
      %p314 = scmp.eq.s32.totalorder %s36, 0
      %p315 = por %p313, %p314
      %p316 = scmp.ne.s32.totalorder %s302, %s303
      %p317 = scmp.eq.s32.totalorder %s37, 1
      %p318 = por %p316, %p317
      %p320 = scmp.ne.s32.totalorder %s303, %s319
      %p321 = scmp.eq.s32.totalorder %s37, 0
      %p322 = por %p320, %p321
      %s323 = ssub.s32 %s38, %s50
      %s324 = ssub.s32 %s39, %s46
      %s325 = sor.u32 %s323, %s324
      %p326 = scmp.eq.s32.totalorder %s325, 0
      %s328 = sadd.s32 %s327, 1
      %s329 = scalar_select %p326, %s327, %s328
      %p332 = pneg %p326
      %p333 = scmp.eq.s32.totalorder %s31, 1
      %p334 = por %p332, %p333
      %p335 = scmp.ne.s32.totalorder %s327, %s330
      %p336 = scmp.eq.s32.totalorder %s31, 0
      %p337 = por %p335, %p336
      %p338 = scmp.ne.s32.totalorder %s327, %s330
      %p339 = scmp.eq.s32.totalorder %s36, 1
      %p340 = por %p338, %p339
      %p341 = scmp.ne.s32.totalorder %s330, %s331
      %p342 = scmp.eq.s32.totalorder %s36, 0
      %p343 = por %p341, %p342
      %p344 = scmp.ne.s32.totalorder %s330, %s331
      %p345 = scmp.eq.s32.totalorder %s37, 1
      %p346 = por %p344, %p345
      %p348 = scmp.ne.s32.totalorder %s331, %s347
      %p349 = scmp.eq.s32.totalorder %s37, 0
      %p350 = por %p348, %p349
      %p351 = scmp.le.s32.totalorder 1, %s31
      %p352 = scmp.lt.s32.totalorder %s31, 3
      %p353 = pnand %p351, %p352
      %p354 = pneg %p353
      // Predicated region
      $region9: #{tpu_custom_call.1} parent=5 // pred_check
        _
      $region10: #{tpu_custom_call.1} parent=5 // pred_check_branch
        %356 = sbr.rel (%p353) target = $region12
      $region11: #{tpu_custom_call.1} parent=5 // pred_region
        %s357 = ssub.s32 %s31, 1
        // Predicated region
        $region13: #{tpu_custom_call.1} parent=11 // pred_check
          %p358 = pneg %p144
        $region14: #{tpu_custom_call.1} parent=11 // pred_check_branch
          %360 = sbr.rel (%p358) target = $region16
        $region15: #{tpu_custom_call.1} parent=11 // pred_region
          %s362 = ssub.s32 24576, 24576
          %363 = vsyncadd [#allocation6], %s362
          %s364 = sshll.u32 [#allocation7], 4
          %s365 = int_to_ptr.vmem [resolvable:$true] %s364
          %370 = dma.hbm_to_vmem [thread:$0]  %s3, 24576, %s365, [#allocation6], 768, 768, 48
        $region16: #{tpu_custom_call.1} parent=11 // pred_fallthru
          _
        // Predicated region
        $region17: #{tpu_custom_call.1} parent=11 // pred_check
          %p371 = pneg %p165
        $region18: #{tpu_custom_call.1} parent=11 // pred_check_branch
          %373 = sbr.rel (%p371) target = $region20
        $region19: #{tpu_custom_call.1} parent=11 // pred_region
          _
        $region20: #{tpu_custom_call.1} parent=11 // pred_fallthru
          _
        // Predicated region
        $region21: #{tpu_custom_call.1} parent=11 // pred_check
          %p374 = pneg %p186
        $region22: #{tpu_custom_call.1} parent=11 // pred_check_branch
          %376 = sbr.rel (%p374) target = $region24
        $region23: #{tpu_custom_call.1} parent=11 // pred_region
          _
        $region24: #{tpu_custom_call.1} parent=11 // pred_fallthru
          _
        // Predicated region
        $region25: #{tpu_custom_call.1} parent=11 // pred_check
          %p377 = pneg %p207
        $region26: #{tpu_custom_call.1} parent=11 // pred_check_branch
          %379 = sbr.rel (%p377) target = $region28
        $region27: #{tpu_custom_call.1} parent=11 // pred_region
          _
        $region28: #{tpu_custom_call.1} parent=11 // pred_fallthru
          _
        // Predicated region
        $region29: #{tpu_custom_call.1} parent=11 // pred_check
          %p380 = pneg %p233
        $region30: #{tpu_custom_call.1} parent=11 // pred_check_branch
          %382 = sbr.rel (%p380) target = $region32
        $region31: #{tpu_custom_call.1} parent=11 // pred_region
          %s383 = smul.u32 16, %s41
          %s385 = ssub.s32 4096, 4096
          %386 = vsyncadd [#allocation9], %s385
          %s387 = smul.addr %s383, 2
          %s388 = smul.addr %s387, 128
          %s389 = scalar_lea.hbm %s7, %s388
          %s390 = sshll.u32 [#allocation8], 4
          %s391 = int_to_ptr.vmem [resolvable:$true] %s390
          %396 = dma.hbm_to_vmem [thread:$0]  %s389, 4096, %s391, [#allocation9], 256, 256, 16
        $region32: #{tpu_custom_call.1} parent=11 // pred_fallthru
          _
        // Predicated region
        $region33: #{tpu_custom_call.1} parent=11 // pred_check
          %p397 = pneg %p259
        $region34: #{tpu_custom_call.1} parent=11 // pred_check_branch
          %399 = sbr.rel (%p397) target = $region36
        $region35: #{tpu_custom_call.1} parent=11 // pred_region
          %s400 = smul.u32 16, %s41
          %s402 = ssub.s32 4096, 4096
          %403 = vsyncadd [#allocation9], %s402
          %s404 = smul.addr %s400, 2
          %s405 = smul.addr %s404, 128
          %s406 = scalar_lea.hbm %s8, %s405
          %s407 = sshll.u32 [#allocation10], 4
          %s408 = int_to_ptr.vmem [resolvable:$true] %s407
          %413 = dma.hbm_to_vmem [thread:$0]  %s406, 4096, %s408, [#allocation9], 256, 256, 16
        $region36: #{tpu_custom_call.1} parent=11 // pred_fallthru
          _
      $region12: #{tpu_custom_call.1} parent=5 // pred_fallthru
        _
      %p414 = scmp.lt.s32.totalorder %s31, 2
      // Predicated region
      $region37: #{tpu_custom_call.1} parent=5 // pred_check
        %p415 = pneg %p414
      $region38: #{tpu_custom_call.1} parent=5 // pred_check_branch
        %417 = sbr.rel (%p415) target = $region40
      $region39: #{tpu_custom_call.1} parent=5 // pred_region
        // Predicated region
        $region41: #{tpu_custom_call.1} parent=39 // pred_check
          %p418 = pneg %p65
        $region42: #{tpu_custom_call.1} parent=39 // pred_check_branch
          %420 = sbr.rel (%p418) target = $region44
        $region43: #{tpu_custom_call.1} parent=39 // pred_region
          %s421 = sand.u32 %s55, 1
          %s422 = scalar_lea.sflag [#allocation3], %s421
          %s423 = sand.u32 %s55, 1
          %s424 = smul.addr %s423, 256
          %s425 = scalar_lea.vmem [#allocation2], %s424
          %s426 = smul.u32 16, %s39
          %s428 = ssub.s32 4096, 4096
          %429 = vsyncadd %s422, %s428
          %s430 = smul.addr %s426, 2
          %s431 = smul.addr %s38, 32
          %s432 = sadd.s32 %s430, %s431
          %s433 = smul.addr %s432, 128
          %s434 = scalar_lea.hbm %s0, %s433
          %s435 = sshll.u32 %s425, 4
          %s436 = int_to_ptr.vmem [resolvable:$true] %s435
          %441 = dma.hbm_to_vmem [thread:$0]  %s434, 4096, %s436, %s422, 256, 256, 16
        $region44: #{tpu_custom_call.1} parent=39 // pred_fallthru
          _
        // Predicated region
        $region45: #{tpu_custom_call.1} parent=39 // pred_check
          %p442 = pneg %p91
        $region46: #{tpu_custom_call.1} parent=39 // pred_check_branch
          %444 = sbr.rel (%p442) target = $region48
        $region47: #{tpu_custom_call.1} parent=39 // pred_region
          %s445 = sand.u32 %s31, 1
          %s446 = scalar_lea.sflag [#allocation6], %s445
          %s447 = sand.u32 %s81, 1
          %s448 = smul.addr %s447, 2
          %s449 = scalar_lea.vmem [#allocation5], %s448
          %s451 = ssub.s32 32, 32
          %452 = vsyncadd %s446, %s451
          %s453 = smul.addr %s38, 2
          %s454 = smul.addr %s453, 16
          %s455 = scalar_lea.hbm %s1, %s454
          %s457 = sshll.u32 %s449, 4
          %s458 = int_to_ptr.vmem [resolvable:$true] %s457
          %460 = dma.hbm_to_vmem [thread:$0]  %s455, 32, %s458, %s446
        $region48: #{tpu_custom_call.1} parent=39 // pred_fallthru
          _
        // Predicated region
        $region49: #{tpu_custom_call.1} parent=39 // pred_check
          %p461 = pneg %p117
        $region50: #{tpu_custom_call.1} parent=39 // pred_check_branch
          %463 = sbr.rel (%p461) target = $region52
        $region51: #{tpu_custom_call.1} parent=39 // pred_region
          %p464 = scmp.lt.s32.totalorder %s38, 1
          %s465 = scalar_select %p464, %s38, 1
          %s466 = smul.addr %s465, 2
          %s467 = scalar_lea.vmem %s2, %s466
        $region52: #{tpu_custom_call.1} parent=39 // pred_fallthru
          _
      $region40: #{tpu_custom_call.1} parent=5 // pred_fallthru
        _
      %p468 = scmp.le.s32.totalorder 1, %s31
      %p469 = scmp.lt.s32.totalorder %s31, 3
      %p470 = pnand %p468, %p469
      %p471 = pneg %p470
      // Predicated region
      $region53: #{tpu_custom_call.1} parent=5 // pred_check
        _
      $region54: #{tpu_custom_call.1} parent=5 // pred_check_branch
        %473 = sbr.rel (%p470) target = $region56
      $region55: #{tpu_custom_call.1} parent=5 // pred_region
        %s474 = ssub.s32 %s31, 1
        %s475 = sand.u32 %s58, 1
        %s476 = scalar_lea.sflag [#allocation3], %s475
        %s477 = sand.u32 %s58, 1
        %s478 = smul.addr %s477, 256
        %s479 = scalar_lea.vmem [#allocation2], %s478
        // Predicated region
        $region57: #{tpu_custom_call.1} parent=55 // pred_check
          %p480 = pneg %p71
        $region58: #{tpu_custom_call.1} parent=55 // pred_check_branch
          %482 = sbr.rel (%p480) target = $region60
        $region59: #{tpu_custom_call.1} parent=55 // pred_region
          %483 = dma.done %s476, 4096
        $region60: #{tpu_custom_call.1} parent=55 // pred_fallthru
          _
        %s484 = sand.u32 %s36, 1
        %s485 = scalar_lea.sflag [#allocation6], %s484
        %s486 = sand.u32 %s84, 1
        %s487 = smul.addr %s486, 2
        %s488 = scalar_lea.vmem [#allocation5], %s487
        // Predicated region
        $region61: #{tpu_custom_call.1} parent=55 // pred_check
          %p489 = pneg %p97
        $region62: #{tpu_custom_call.1} parent=55 // pred_check_branch
          %491 = sbr.rel (%p489) target = $region64
        $region63: #{tpu_custom_call.1} parent=55 // pred_region
          %492 = dma.done %s485, 32
        $region64: #{tpu_custom_call.1} parent=55 // pred_fallthru
          _
        // Predicated region
        $region65: #{tpu_custom_call.1} parent=55 // pred_check
          %p493 = pneg %p144
        $region66: #{tpu_custom_call.1} parent=55 // pred_check_branch
          %495 = sbr.rel (%p493) target = $region68
        $region67: #{tpu_custom_call.1} parent=55 // pred_region
          %496 = dma.done [#allocation6], 24576
        $region68: #{tpu_custom_call.1} parent=55 // pred_fallthru
          _
        // Predicated region
        $region69: #{tpu_custom_call.1} parent=55 // pred_check
          %p497 = pneg %p233
        $region70: #{tpu_custom_call.1} parent=55 // pred_check_branch
          %499 = sbr.rel (%p497) target = $region72
        $region71: #{tpu_custom_call.1} parent=55 // pred_region
          %500 = dma.done [#allocation9], 4096
        $region72: #{tpu_custom_call.1} parent=55 // pred_fallthru
          _
        // Predicated region
        $region73: #{tpu_custom_call.1} parent=55 // pred_check
          %p501 = pneg %p259
        $region74: #{tpu_custom_call.1} parent=55 // pred_check_branch
          %503 = sbr.rel (%p501) target = $region76
        $region75: #{tpu_custom_call.1} parent=55 // pred_region
          %504 = dma.done [#allocation9], 4096
        $region76: #{tpu_custom_call.1} parent=55 // pred_fallthru
          _
        %s505 = sand.u32 %s58, 1
        %s506 = scalar_lea.sflag [#allocation3], %s505
        %s507 = sand.u32 %s58, 1
        %s508 = smul.addr %s507, 256
        %s509 = scalar_lea.vmem [#allocation2], %s508
        %p510 = pneg %p71
        %p511 = pneg %p68
        %s512 = sand.u32 %s36, 1
        %s513 = scalar_lea.sflag [#allocation6], %s512
        %s514 = sand.u32 %s84, 1
        %s515 = smul.addr %s514, 2
        %s516 = scalar_lea.vmem [#allocation5], %s515
        %p517 = pneg %p97
        %p518 = pneg %p94
        %p519 = scmp.lt.s32.totalorder %s40, 1
        %s520 = scalar_select %p519, %s40, 1
        %s521 = smul.addr %s520, 2
        %s522 = scalar_lea.vmem %s2, %s521
        %p523 = pneg %p123
        %p524 = pneg %p120
        %p525 = pneg %p144
        %p526 = pneg %p141
        %p527 = pneg %p165
        %p528 = pneg %p162
        %p529 = pneg %p186
        %p530 = pneg %p183
        %p531 = pneg %p207
        %p532 = pneg %p204
        %p533 = pneg %p233
        %p534 = pneg %p230
        %p535 = pneg %p259
        %p536 = pneg %p256
        %p537 = pneg %p287
        %p538 = pneg %p284
        %s539 = sand.u32 %s274, 1
        %s540 = scalar_lea.sflag [#allocation4], %s539
        %s541 = sand.u32 %s274, 1
        %s542 = smul.addr %s541, 256
        %s543 = scalar_lea.vmem [#allocation11], %s542
        %p544 = pneg %p315
        %p545 = pneg %p312
        %s546 = sand.u32 %s36, 1
        %s547 = scalar_lea.sflag [#allocation13], %s546
        %s548 = sand.u32 %s302, 1
        %s549 = smul.addr %s548, 256
        %s550 = scalar_lea.vmem [#allocation12], %s549
        %p551 = pneg %p343
        %p552 = pneg %p340
        %s553 = sand.u32 %s36, 1
        %s554 = scalar_lea.sflag [#allocation13], %s553
        %s555 = sand.u32 %s330, 1
        %s556 = smul.addr %s555, 256
        %s557 = scalar_lea.vmem [#allocation14], %s556
        %s558 = smul.u32 16, %s41
        %p559 = scmp.lt.s32.totalorder %s40, 1
        %s560 = scalar_select %p559, %s40, 1
        %s561 = smul.addr %s560, 2
        %s562 = scalar_lea.vmem %s2, %s561
        %s563 = smul.u32 16, %s41
        %s564 = smul.u32 16, %s41
        %s565 = smul.u32 16, %s41
        %s566 = smul.u32 16, %s41
        %s567 = smul.u32 16, %s41
        %v568 = vld [vmem:[%s479] sm:$0xff]
        %v569 = vld [vmem:[%s479 + $0x8] sm:$0xff]
        %v570 = vld [vmem:[%s479 + $0x10] sm:$0xff]
        %v571 = vld [vmem:[%s479 + $0x18] sm:$0xff]
        %v572 = vld [vmem:[%s479 + $0x20] sm:$0xff]
        %v573 = vld [vmem:[%s479 + $0x28] sm:$0xff]
        %v574 = vld [vmem:[%s479 + $0x30] sm:$0xff]
        %v575 = vld [vmem:[%s479 + $0x38] sm:$0xff]
        %v576 = vld [vmem:[%s479 + $0x40] sm:$0xff]
        %v577 = vld [vmem:[%s479 + $0x48] sm:$0xff]
        %v578 = vld [vmem:[%s479 + $0x50] sm:$0xff]
        %v579 = vld [vmem:[%s479 + $0x58] sm:$0xff]
        %v580 = vld [vmem:[%s479 + $0x60] sm:$0xff]
        %v581 = vld [vmem:[%s479 + $0x68] sm:$0xff]
        %v582 = vld [vmem:[%s479 + $0x70] sm:$0xff]
        %v583 = vld [vmem:[%s479 + $0x78] sm:$0xff]
        %v584 = vld [vmem:[%s479 + $0x80] sm:$0xff]
        %v585 = vld [vmem:[%s479 + $0x88] sm:$0xff]
        %v586 = vld [vmem:[%s479 + $0x90] sm:$0xff]
        %v587 = vld [vmem:[%s479 + $0x98] sm:$0xff]
        %v588 = vld [vmem:[%s479 + $0xa0] sm:$0xff]
        %v589 = vld [vmem:[%s479 + $0xa8] sm:$0xff]
        %v590 = vld [vmem:[%s479 + $0xb0] sm:$0xff]
        %v591 = vld [vmem:[%s479 + $0xb8] sm:$0xff]
        %v592 = vld [vmem:[%s479 + $0xc0] sm:$0xff]
        %v593 = vld [vmem:[%s479 + $0xc8] sm:$0xff]
        %v594 = vld [vmem:[%s479 + $0xd0] sm:$0xff]
        %v595 = vld [vmem:[%s479 + $0xd8] sm:$0xff]
        %v596 = vld [vmem:[%s479 + $0xe0] sm:$0xff]
        %v597 = vld [vmem:[%s479 + $0xe8] sm:$0xff]
        %v598 = vld [vmem:[%s479 + $0xf0] sm:$0xff]
        %v599 = vld [vmem:[%s479 + $0xf8] sm:$0xff]
        %v600 = vadd.f32 %v568, %v569
        %601 = vadd.xlane.f32.xlu0 %v600
        %v602 = vpop.xlane.xlu0 %601
        %v603 = vadd.f32 %v570, %v571
        %604 = vadd.xlane.f32.xlu0 %v603
        %v605 = vpop.xlane.xlu0 %604
        %v606 = vadd.f32 %v572, %v573
        %607 = vadd.xlane.f32.xlu0 %v606
        %v608 = vpop.xlane.xlu0 %607
        %v609 = vadd.f32 %v574, %v575
        %610 = vadd.xlane.f32.xlu0 %v609
        %v611 = vpop.xlane.xlu0 %610
        %v612 = vadd.f32 %v576, %v577
        %613 = vadd.xlane.f32.xlu0 %v612
        %v614 = vpop.xlane.xlu0 %613
        %v615 = vadd.f32 %v578, %v579
        %616 = vadd.xlane.f32.xlu0 %v615
        %v617 = vpop.xlane.xlu0 %616
        %v618 = vadd.f32 %v580, %v581
        %619 = vadd.xlane.f32.xlu0 %v618
        %v620 = vpop.xlane.xlu0 %619
        %v621 = vadd.f32 %v582, %v583
        %622 = vadd.xlane.f32.xlu0 %v621
        %v623 = vpop.xlane.xlu0 %622
        %v624 = vadd.f32 %v584, %v585
        %625 = vadd.xlane.f32.xlu0 %v624
        %v626 = vpop.xlane.xlu0 %625
        %v627 = vadd.f32 %v586, %v587
        %628 = vadd.xlane.f32.xlu0 %v627
        %v629 = vpop.xlane.xlu0 %628
        %v630 = vadd.f32 %v588, %v589
        %631 = vadd.xlane.f32.xlu0 %v630
        %v632 = vpop.xlane.xlu0 %631
        %v633 = vadd.f32 %v590, %v591
        %634 = vadd.xlane.f32.xlu0 %v633
        %v635 = vpop.xlane.xlu0 %634
        %v636 = vadd.f32 %v592, %v593
        %637 = vadd.xlane.f32.xlu0 %v636
        %v638 = vpop.xlane.xlu0 %637
        %v639 = vadd.f32 %v594, %v595
        %640 = vadd.xlane.f32.xlu0 %v639
        %v641 = vpop.xlane.xlu0 %640
        %v642 = vadd.f32 %v596, %v597
        %643 = vadd.xlane.f32.xlu0 %v642
        %v644 = vpop.xlane.xlu0 %643
        %v645 = vadd.f32 %v598, %v599
        %646 = vadd.xlane.f32.xlu0 %v645
        %v647 = vpop.xlane.xlu0 %646
        %v648 = vrcp.pop 256.0
        %v649 = vmul.f32 %v602, %v648
        %v650 = vmul.f32 %v605, %v648
        %v651 = vmul.f32 %v608, %v648
        %v652 = vmul.f32 %v611, %v648
        %v653 = vmul.f32 %v614, %v648
        %v654 = vmul.f32 %v617, %v648
        %v655 = vmul.f32 %v620, %v648
        %v656 = vmul.f32 %v623, %v648
        %v657 = vmul.f32 %v626, %v648
        %v658 = vmul.f32 %v629, %v648
        %v659 = vmul.f32 %v632, %v648
        %v660 = vmul.f32 %v635, %v648
        %v661 = vmul.f32 %v638, %v648
        %v662 = vmul.f32 %v641, %v648
        %v663 = vmul.f32 %v644, %v648
        %v664 = vmul.f32 %v647, %v648
        %v665 = vsub.f32 %v568, %v649
        %v666 = vsub.f32 %v569, %v649
        %v667 = vsub.f32 %v570, %v650
        %v668 = vsub.f32 %v571, %v650
        %v669 = vsub.f32 %v572, %v651
        %v670 = vsub.f32 %v573, %v651
        %v671 = vsub.f32 %v574, %v652
        %v672 = vsub.f32 %v575, %v652
        %v673 = vsub.f32 %v576, %v653
        %v674 = vsub.f32 %v577, %v653
        %v675 = vsub.f32 %v578, %v654
        %v676 = vsub.f32 %v579, %v654
        %v677 = vsub.f32 %v580, %v655
        %v678 = vsub.f32 %v581, %v655
        %v679 = vsub.f32 %v582, %v656
        %v680 = vsub.f32 %v583, %v656
        %v681 = vsub.f32 %v584, %v657
        %v682 = vsub.f32 %v585, %v657
        %v683 = vsub.f32 %v586, %v658
        %v684 = vsub.f32 %v587, %v658
        %v685 = vsub.f32 %v588, %v659
        %v686 = vsub.f32 %v589, %v659
        %v687 = vsub.f32 %v590, %v660
        %v688 = vsub.f32 %v591, %v660
        %v689 = vsub.f32 %v592, %v661
        %v690 = vsub.f32 %v593, %v661
        %v691 = vsub.f32 %v594, %v662
        %v692 = vsub.f32 %v595, %v662
        %v693 = vsub.f32 %v596, %v663
        %v694 = vsub.f32 %v597, %v663
        %v695 = vsub.f32 %v598, %v664
        %v696 = vsub.f32 %v599, %v664
        %v697 = vmul.f32 %v665, %v665
        %v698 = vmul.f32 %v666, %v666
        %v699 = vmul.f32 %v667, %v667
        %v700 = vmul.f32 %v668, %v668
        %v701 = vmul.f32 %v669, %v669
        %v702 = vmul.f32 %v670, %v670
        %v703 = vmul.f32 %v671, %v671
        %v704 = vmul.f32 %v672, %v672
        %v705 = vmul.f32 %v673, %v673
        %v706 = vmul.f32 %v674, %v674
        %v707 = vmul.f32 %v675, %v675
        %v708 = vmul.f32 %v676, %v676
        %v709 = vmul.f32 %v677, %v677
        %v710 = vmul.f32 %v678, %v678
        %v711 = vmul.f32 %v679, %v679
        %v712 = vmul.f32 %v680, %v680
        %v713 = vmul.f32 %v681, %v681
        %v714 = vmul.f32 %v682, %v682
        %v715 = vmul.f32 %v683, %v683
        %v716 = vmul.f32 %v684, %v684
        %v717 = vmul.f32 %v685, %v685
        %v718 = vmul.f32 %v686, %v686
        %v719 = vmul.f32 %v687, %v687
        %v720 = vmul.f32 %v688, %v688
        %v721 = vmul.f32 %v689, %v689
        %v722 = vmul.f32 %v690, %v690
        %v723 = vmul.f32 %v691, %v691
        %v724 = vmul.f32 %v692, %v692
        %v725 = vmul.f32 %v693, %v693
        %v726 = vmul.f32 %v694, %v694
        %v727 = vmul.f32 %v695, %v695
        %v728 = vmul.f32 %v696, %v696
        %v729 = vadd.f32 %v697, %v698
        %730 = vadd.xlane.f32.xlu0 %v729
        %v731 = vpop.xlane.xlu0 %730
        %v732 = vadd.f32 %v699, %v700
        %733 = vadd.xlane.f32.xlu0 %v732
        %v734 = vpop.xlane.xlu0 %733
        %v735 = vadd.f32 %v701, %v702
        %736 = vadd.xlane.f32.xlu0 %v735
        %v737 = vpop.xlane.xlu0 %736
        %v738 = vadd.f32 %v703, %v704
        %739 = vadd.xlane.f32.xlu0 %v738
        %v740 = vpop.xlane.xlu0 %739
        %v741 = vadd.f32 %v705, %v706
        %742 = vadd.xlane.f32.xlu0 %v741
        %v743 = vpop.xlane.xlu0 %742
        %v744 = vadd.f32 %v707, %v708
        %745 = vadd.xlane.f32.xlu0 %v744
        %v746 = vpop.xlane.xlu0 %745
        %v747 = vadd.f32 %v709, %v710
        %748 = vadd.xlane.f32.xlu0 %v747
        %v749 = vpop.xlane.xlu0 %748
        %v750 = vadd.f32 %v711, %v712
        %751 = vadd.xlane.f32.xlu0 %v750
        %v752 = vpop.xlane.xlu0 %751
        %v753 = vadd.f32 %v713, %v714
        %754 = vadd.xlane.f32.xlu0 %v753
        %v755 = vpop.xlane.xlu0 %754
        %v756 = vadd.f32 %v715, %v716
        %757 = vadd.xlane.f32.xlu0 %v756
        %v758 = vpop.xlane.xlu0 %757
        %v759 = vadd.f32 %v717, %v718
        %760 = vadd.xlane.f32.xlu0 %v759
        %v761 = vpop.xlane.xlu0 %760
        %v762 = vadd.f32 %v719, %v720
        %763 = vadd.xlane.f32.xlu0 %v762
        %v764 = vpop.xlane.xlu0 %763
        %v765 = vadd.f32 %v721, %v722
        %766 = vadd.xlane.f32.xlu0 %v765
        %v767 = vpop.xlane.xlu0 %766
        %v768 = vadd.f32 %v723, %v724
        %769 = vadd.xlane.f32.xlu0 %v768
        %v770 = vpop.xlane.xlu0 %769
        %v771 = vadd.f32 %v725, %v726
        %772 = vadd.xlane.f32.xlu0 %v771
        %v773 = vpop.xlane.xlu0 %772
        %v774 = vadd.f32 %v727, %v728
        %775 = vadd.xlane.f32.xlu0 %v774
        %v776 = vpop.xlane.xlu0 %775
        %v777 = vmul.f32 %v731, %v648
        %v778 = vmul.f32 %v734, %v648
        %v779 = vmul.f32 %v737, %v648
        %v780 = vmul.f32 %v740, %v648
        %v781 = vmul.f32 %v743, %v648
        %v782 = vmul.f32 %v746, %v648
        %v783 = vmul.f32 %v749, %v648
        %v784 = vmul.f32 %v752, %v648
        %v785 = vmul.f32 %v755, %v648
        %v786 = vmul.f32 %v758, %v648
        %v787 = vmul.f32 %v761, %v648
        %v788 = vmul.f32 %v764, %v648
        %v789 = vmul.f32 %v767, %v648
        %v790 = vmul.f32 %v770, %v648
        %v791 = vmul.f32 %v773, %v648
        %v792 = vmul.f32 %v776, %v648
        %v793 = vadd.f32 %v777, 1e-06
        %v794 = vadd.f32 %v778, 1e-06
        %v795 = vadd.f32 %v779, 1e-06
        %v796 = vadd.f32 %v780, 1e-06
        %v797 = vadd.f32 %v781, 1e-06
        %v798 = vadd.f32 %v782, 1e-06
        %v799 = vadd.f32 %v783, 1e-06
        %v800 = vadd.f32 %v784, 1e-06
        %v801 = vadd.f32 %v785, 1e-06
        %v802 = vadd.f32 %v786, 1e-06
        %v803 = vadd.f32 %v787, 1e-06
        %v804 = vadd.f32 %v788, 1e-06
        %v805 = vadd.f32 %v789, 1e-06
        %v806 = vadd.f32 %v790, 1e-06
        %v807 = vadd.f32 %v791, 1e-06
        %v808 = vadd.f32 %v792, 1e-06
        %v809 = vrsqrt.pop %v793
        %v810 = vrsqrt.pop %v794
        %v811 = vrsqrt.pop %v795
        %v812 = vrsqrt.pop %v796
        %v813 = vrsqrt.pop %v797
        %v814 = vrsqrt.pop %v798
        %v815 = vrsqrt.pop %v799
        %v816 = vrsqrt.pop %v800
        %v817 = vrsqrt.pop %v801
        %v818 = vrsqrt.pop %v802
        %v819 = vrsqrt.pop %v803
        %v820 = vrsqrt.pop %v804
        %v821 = vrsqrt.pop %v805
        %v822 = vrsqrt.pop %v806
        %v823 = vrsqrt.pop %v807
        %v824 = vrsqrt.pop %v808
        %v825 = vmul.f32 %v665, %v809
        %v826 = vmul.f32 %v666, %v809
        %v827 = vmul.f32 %v667, %v810
        %v828 = vmul.f32 %v668, %v810
        %v829 = vmul.f32 %v669, %v811
        %v830 = vmul.f32 %v670, %v811
        %v831 = vmul.f32 %v671, %v812
        %v832 = vmul.f32 %v672, %v812
        %v833 = vmul.f32 %v673, %v813
        %v834 = vmul.f32 %v674, %v813
        %v835 = vmul.f32 %v675, %v814
        %v836 = vmul.f32 %v676, %v814
        %v837 = vmul.f32 %v677, %v815
        %v838 = vmul.f32 %v678, %v815
        %v839 = vmul.f32 %v679, %v816
        %v840 = vmul.f32 %v680, %v816
        %v841 = vmul.f32 %v681, %v817
        %v842 = vmul.f32 %v682, %v817
        %v843 = vmul.f32 %v683, %v818
        %v844 = vmul.f32 %v684, %v818
        %v845 = vmul.f32 %v685, %v819
        %v846 = vmul.f32 %v686, %v819
        %v847 = vmul.f32 %v687, %v820
        %v848 = vmul.f32 %v688, %v820
        %v849 = vmul.f32 %v689, %v821
        %v850 = vmul.f32 %v690, %v821
        %v851 = vmul.f32 %v691, %v822
        %v852 = vmul.f32 %v692, %v822
        %v853 = vmul.f32 %v693, %v823
        %v854 = vmul.f32 %v694, %v823
        %v855 = vmul.f32 %v695, %v824
        %v856 = vmul.f32 %v696, %v824
        %v857 = vld [vmem:[%s562] sm:$0x3]
        %v858 = vadd.f32 %v857, 1.0
        %v860 = vlaneseq
        %v861 = vshrl.u32 %v860, 7
        %v862 = vsub.s32 0, %v861
        %v863 = vrot.slane %v858, %v862
        %v864 = vlaneseq
        %v865 = vshrl.u32 %v864, 7
        %v866 = vsub.s32 1, %v865
        %v867 = vrot.slane %v858, %v866
        %v870 = vmul.f32 %v863, %v825
        %v871 = vmul.f32 %v867, %v826
        %v872 = vmul.f32 %v863, %v827
        %v873 = vmul.f32 %v867, %v828
        %v874 = vmul.f32 %v863, %v829
        %v875 = vmul.f32 %v867, %v830
        %v876 = vmul.f32 %v863, %v831
        %v877 = vmul.f32 %v867, %v832
        %v878 = vmul.f32 %v863, %v833
        %v879 = vmul.f32 %v867, %v834
        %v880 = vmul.f32 %v863, %v835
        %v881 = vmul.f32 %v867, %v836
        %v882 = vmul.f32 %v863, %v837
        %v883 = vmul.f32 %v867, %v838
        %v884 = vmul.f32 %v863, %v839
        %v885 = vmul.f32 %v867, %v840
        %v886 = vmul.f32 %v863, %v841
        %v887 = vmul.f32 %v867, %v842
        %v888 = vmul.f32 %v863, %v843
        %v889 = vmul.f32 %v867, %v844
        %v890 = vmul.f32 %v863, %v845
        %v891 = vmul.f32 %v867, %v846
        %v892 = vmul.f32 %v863, %v847
        %v893 = vmul.f32 %v867, %v848
        %v894 = vmul.f32 %v863, %v849
        %v895 = vmul.f32 %v867, %v850
        %v896 = vmul.f32 %v863, %v851
        %v897 = vmul.f32 %v867, %v852
        %v898 = vmul.f32 %v863, %v853
        %v899 = vmul.f32 %v867, %v854
        %v900 = vmul.f32 %v863, %v855
        %v901 = vmul.f32 %v867, %v856
        %v902 = vld [vmem:[%s488] sm:$0x3]
        %v904 = vlaneseq
        %v905 = vshrl.u32 %v904, 7
        %v906 = vsub.s32 0, %v905
        %v907 = vrot.slane %v902, %v906
        %v908 = vlaneseq
        %v909 = vshrl.u32 %v908, 7
        %v910 = vsub.s32 1, %v909
        %v911 = vrot.slane %v902, %v910
        %v914 = vadd.f32 %v870, %v907
        %v915 = vadd.f32 %v871, %v911
        %v916 = vadd.f32 %v872, %v907
        %v917 = vadd.f32 %v873, %v911
        %v918 = vadd.f32 %v874, %v907
        %v919 = vadd.f32 %v875, %v911
        %v920 = vadd.f32 %v876, %v907
        %v921 = vadd.f32 %v877, %v911
        %v922 = vadd.f32 %v878, %v907
        %v923 = vadd.f32 %v879, %v911
        %v924 = vadd.f32 %v880, %v907
        %v925 = vadd.f32 %v881, %v911
        %v926 = vadd.f32 %v882, %v907
        %v927 = vadd.f32 %v883, %v911
        %v928 = vadd.f32 %v884, %v907
        %v929 = vadd.f32 %v885, %v911
        %v930 = vadd.f32 %v886, %v907
        %v931 = vadd.f32 %v887, %v911
        %v932 = vadd.f32 %v888, %v907
        %v933 = vadd.f32 %v889, %v911
        %v934 = vadd.f32 %v890, %v907
        %v935 = vadd.f32 %v891, %v911
        %v936 = vadd.f32 %v892, %v907
        %v937 = vadd.f32 %v893, %v911
        %v938 = vadd.f32 %v894, %v907
        %v939 = vadd.f32 %v895, %v911
        %v940 = vadd.f32 %v896, %v907
        %v941 = vadd.f32 %v897, %v911
        %v942 = vadd.f32 %v898, %v907
        %v943 = vadd.f32 %v899, %v911
        %v944 = vadd.f32 %v900, %v907
        %v945 = vadd.f32 %v901, %v911
        %v946 = vld [vmem:[#allocation7] sm:$0xff]
        %v947 = vld [vmem:[#allocation7 + $0x8] sm:$0xff]
        %v948 = vld [vmem:[#allocation7 + $0x10] sm:$0xff]
        %v949 = vld [vmem:[#allocation7 + $0x18] sm:$0xff]
        %v950 = vld [vmem:[#allocation7 + $0x20] sm:$0xff]
        %v951 = vld [vmem:[#allocation7 + $0x28] sm:$0xff]
        %v952 = vld [vmem:[#allocation7 + $0x30] sm:$0xff]
        %v953 = vld [vmem:[#allocation7 + $0x38] sm:$0xff]
        %v954 = vld [vmem:[#allocation7 + $0x40] sm:$0xff]
        %v955 = vld [vmem:[#allocation7 + $0x48] sm:$0xff]
        %v956 = vld [vmem:[#allocation7 + $0x50] sm:$0xff]
        %v957 = vld [vmem:[#allocation7 + $0x58] sm:$0xff]
        %v958 = vld [vmem:[#allocation7 + $0x60] sm:$0xff]
        %v959 = vld [vmem:[#allocation7 + $0x68] sm:$0xff]
        %v960 = vld [vmem:[#allocation7 + $0x70] sm:$0xff]
        %v961 = vld [vmem:[#allocation7 + $0x78] sm:$0xff]
        %v962 = vld [vmem:[#allocation7 + $0x80] sm:$0xff]
        %v963 = vld [vmem:[#allocation7 + $0x88] sm:$0xff]
        %v964 = vld [vmem:[#allocation7 + $0x90] sm:$0xff]
        %v965 = vld [vmem:[#allocation7 + $0x98] sm:$0xff]
        %v966 = vld [vmem:[#allocation7 + $0xa0] sm:$0xff]
        %v967 = vld [vmem:[#allocation7 + $0xa8] sm:$0xff]
        %v968 = vld [vmem:[#allocation7 + $0xb0] sm:$0xff]
        %v969 = vld [vmem:[#allocation7 + $0xb8] sm:$0xff]
        %v970 = vld [vmem:[#allocation7 + $0xc0] sm:$0xff]
        %v971 = vld [vmem:[#allocation7 + $0xc8] sm:$0xff]
        %v972 = vld [vmem:[#allocation7 + $0xd0] sm:$0xff]
        %v973 = vld [vmem:[#allocation7 + $0xd8] sm:$0xff]
        %v974 = vld [vmem:[#allocation7 + $0xe0] sm:$0xff]
        %v975 = vld [vmem:[#allocation7 + $0xe8] sm:$0xff]
        %v976 = vld [vmem:[#allocation7 + $0xf0] sm:$0xff]
        %v977 = vld [vmem:[#allocation7 + $0xf8] sm:$0xff]
        %v978 = vld [vmem:[#allocation7 + $0x100] sm:$0xff]
        %v979 = vld [vmem:[#allocation7 + $0x108] sm:$0xff]
        %v980 = vld [vmem:[#allocation7 + $0x110] sm:$0xff]
        %v981 = vld [vmem:[#allocation7 + $0x118] sm:$0xff]
        %v982 = vld [vmem:[#allocation7 + $0x120] sm:$0xff]
        %v983 = vld [vmem:[#allocation7 + $0x128] sm:$0xff]
        %v984 = vld [vmem:[#allocation7 + $0x130] sm:$0xff]
        %v985 = vld [vmem:[#allocation7 + $0x138] sm:$0xff]
        %v986 = vld [vmem:[#allocation7 + $0x140] sm:$0xff]
        %v987 = vld [vmem:[#allocation7 + $0x148] sm:$0xff]
        %v988 = vld [vmem:[#allocation7 + $0x150] sm:$0xff]
        %v989 = vld [vmem:[#allocation7 + $0x158] sm:$0xff]
        %v990 = vld [vmem:[#allocation7 + $0x160] sm:$0xff]
        %v991 = vld [vmem:[#allocation7 + $0x168] sm:$0xff]
        %v992 = vld [vmem:[#allocation7 + $0x170] sm:$0xff]
        %v993 = vld [vmem:[#allocation7 + $0x178] sm:$0xff]
        %v994 = vld [vmem:[#allocation7 + $0x180] sm:$0xff]
        %v995 = vld [vmem:[#allocation7 + $0x188] sm:$0xff]
        %v996 = vld [vmem:[#allocation7 + $0x190] sm:$0xff]
        %v997 = vld [vmem:[#allocation7 + $0x198] sm:$0xff]
        %v998 = vld [vmem:[#allocation7 + $0x1a0] sm:$0xff]
        %v999 = vld [vmem:[#allocation7 + $0x1a8] sm:$0xff]
        %v1000 = vld [vmem:[#allocation7 + $0x1b0] sm:$0xff]
        %v1001 = vld [vmem:[#allocation7 + $0x1b8] sm:$0xff]
        %v1002 = vld [vmem:[#allocation7 + $0x1c0] sm:$0xff]
        %v1003 = vld [vmem:[#allocation7 + $0x1c8] sm:$0xff]
        %v1004 = vld [vmem:[#allocation7 + $0x1d0] sm:$0xff]
        %v1005 = vld [vmem:[#allocation7 + $0x1d8] sm:$0xff]
        %v1006 = vld [vmem:[#allocation7 + $0x1e0] sm:$0xff]
        %v1007 = vld [vmem:[#allocation7 + $0x1e8] sm:$0xff]
        %v1008 = vld [vmem:[#allocation7 + $0x1f0] sm:$0xff]
        %v1009 = vld [vmem:[#allocation7 + $0x1f8] sm:$0xff]
        %v1010 = vld [vmem:[#allocation7 + $0x200] sm:$0xff]
        %v1011 = vld [vmem:[#allocation7 + $0x208] sm:$0xff]
        %v1012 = vld [vmem:[#allocation7 + $0x210] sm:$0xff]
        %v1013 = vld [vmem:[#allocation7 + $0x218] sm:$0xff]
        %v1014 = vld [vmem:[#allocation7 + $0x220] sm:$0xff]
        %v1015 = vld [vmem:[#allocation7 + $0x228] sm:$0xff]
        %v1016 = vld [vmem:[#allocation7 + $0x230] sm:$0xff]
        %v1017 = vld [vmem:[#allocation7 + $0x238] sm:$0xff]
        %v1018 = vld [vmem:[#allocation7 + $0x240] sm:$0xff]
        %v1019 = vld [vmem:[#allocation7 + $0x248] sm:$0xff]
        %v1020 = vld [vmem:[#allocation7 + $0x250] sm:$0xff]
        %v1021 = vld [vmem:[#allocation7 + $0x258] sm:$0xff]
        %v1022 = vld [vmem:[#allocation7 + $0x260] sm:$0xff]
        %v1023 = vld [vmem:[#allocation7 + $0x268] sm:$0xff]
        %v1024 = vld [vmem:[#allocation7 + $0x270] sm:$0xff]
        %v1025 = vld [vmem:[#allocation7 + $0x278] sm:$0xff]
        %v1026 = vld [vmem:[#allocation7 + $0x280] sm:$0xff]
        %v1027 = vld [vmem:[#allocation7 + $0x288] sm:$0xff]
        %v1028 = vld [vmem:[#allocation7 + $0x290] sm:$0xff]
        %v1029 = vld [vmem:[#allocation7 + $0x298] sm:$0xff]
        %v1030 = vld [vmem:[#allocation7 + $0x2a0] sm:$0xff]
        %v1031 = vld [vmem:[#allocation7 + $0x2a8] sm:$0xff]
        %v1032 = vld [vmem:[#allocation7 + $0x2b0] sm:$0xff]
        %v1033 = vld [vmem:[#allocation7 + $0x2b8] sm:$0xff]
        %v1034 = vld [vmem:[#allocation7 + $0x2c0] sm:$0xff]
        %v1035 = vld [vmem:[#allocation7 + $0x2c8] sm:$0xff]
        %v1036 = vld [vmem:[#allocation7 + $0x2d0] sm:$0xff]
        %v1037 = vld [vmem:[#allocation7 + $0x2d8] sm:$0xff]
        %v1038 = vld [vmem:[#allocation7 + $0x2e0] sm:$0xff]
        %v1039 = vld [vmem:[#allocation7 + $0x2e8] sm:$0xff]
        %v1040 = vld [vmem:[#allocation7 + $0x2f0] sm:$0xff]
        %v1041 = vld [vmem:[#allocation7 + $0x2f8] sm:$0xff]
        %v1042 = vld [vmem:[#allocation7 + $0x300] sm:$0xff]
        %v1043 = vld [vmem:[#allocation7 + $0x308] sm:$0xff]
        %v1044 = vld [vmem:[#allocation7 + $0x310] sm:$0xff]
        %v1045 = vld [vmem:[#allocation7 + $0x318] sm:$0xff]
        %v1046 = vld [vmem:[#allocation7 + $0x320] sm:$0xff]
        %v1047 = vld [vmem:[#allocation7 + $0x328] sm:$0xff]
        %v1048 = vld [vmem:[#allocation7 + $0x330] sm:$0xff]
        %v1049 = vld [vmem:[#allocation7 + $0x338] sm:$0xff]
        %v1050 = vld [vmem:[#allocation7 + $0x340] sm:$0xff]
        %v1051 = vld [vmem:[#allocation7 + $0x348] sm:$0xff]
        %v1052 = vld [vmem:[#allocation7 + $0x350] sm:$0xff]
        %v1053 = vld [vmem:[#allocation7 + $0x358] sm:$0xff]
        %v1054 = vld [vmem:[#allocation7 + $0x360] sm:$0xff]
        %v1055 = vld [vmem:[#allocation7 + $0x368] sm:$0xff]
        %v1056 = vld [vmem:[#allocation7 + $0x370] sm:$0xff]
        %v1057 = vld [vmem:[#allocation7 + $0x378] sm:$0xff]
        %v1058 = vld [vmem:[#allocation7 + $0x380] sm:$0xff]
        %v1059 = vld [vmem:[#allocation7 + $0x388] sm:$0xff]
        %v1060 = vld [vmem:[#allocation7 + $0x390] sm:$0xff]
        %v1061 = vld [vmem:[#allocation7 + $0x398] sm:$0xff]
        %v1062 = vld [vmem:[#allocation7 + $0x3a0] sm:$0xff]
        %v1063 = vld [vmem:[#allocation7 + $0x3a8] sm:$0xff]
        %v1064 = vld [vmem:[#allocation7 + $0x3b0] sm:$0xff]
        %v1065 = vld [vmem:[#allocation7 + $0x3b8] sm:$0xff]
        %v1066 = vld [vmem:[#allocation7 + $0x3c0] sm:$0xff]
        %v1067 = vld [vmem:[#allocation7 + $0x3c8] sm:$0xff]
        %v1068 = vld [vmem:[#allocation7 + $0x3d0] sm:$0xff]
        %v1069 = vld [vmem:[#allocation7 + $0x3d8] sm:$0xff]
        %v1070 = vld [vmem:[#allocation7 + $0x3e0] sm:$0xff]
        %v1071 = vld [vmem:[#allocation7 + $0x3e8] sm:$0xff]
        %v1072 = vld [vmem:[#allocation7 + $0x3f0] sm:$0xff]
        %v1073 = vld [vmem:[#allocation7 + $0x3f8] sm:$0xff]
        %v1074 = vld [vmem:[#allocation7 + $0x400] sm:$0xff]
        %v1075 = vld [vmem:[#allocation7 + $0x408] sm:$0xff]
        %v1076 = vld [vmem:[#allocation7 + $0x410] sm:$0xff]
        %v1077 = vld [vmem:[#allocation7 + $0x418] sm:$0xff]
        %v1078 = vld [vmem:[#allocation7 + $0x420] sm:$0xff]
        %v1079 = vld [vmem:[#allocation7 + $0x428] sm:$0xff]
        %v1080 = vld [vmem:[#allocation7 + $0x430] sm:$0xff]
        %v1081 = vld [vmem:[#allocation7 + $0x438] sm:$0xff]
        %v1082 = vld [vmem:[#allocation7 + $0x440] sm:$0xff]
        %v1083 = vld [vmem:[#allocation7 + $0x448] sm:$0xff]
        %v1084 = vld [vmem:[#allocation7 + $0x450] sm:$0xff]
        %v1085 = vld [vmem:[#allocation7 + $0x458] sm:$0xff]
        %v1086 = vld [vmem:[#allocation7 + $0x460] sm:$0xff]
        %v1087 = vld [vmem:[#allocation7 + $0x468] sm:$0xff]
        %v1088 = vld [vmem:[#allocation7 + $0x470] sm:$0xff]
        %v1089 = vld [vmem:[#allocation7 + $0x478] sm:$0xff]
        %v1090 = vld [vmem:[#allocation7 + $0x480] sm:$0xff]
        %v1091 = vld [vmem:[#allocation7 + $0x488] sm:$0xff]
        %v1092 = vld [vmem:[#allocation7 + $0x490] sm:$0xff]
        %v1093 = vld [vmem:[#allocation7 + $0x498] sm:$0xff]
        %v1094 = vld [vmem:[#allocation7 + $0x4a0] sm:$0xff]
        %v1095 = vld [vmem:[#allocation7 + $0x4a8] sm:$0xff]
        %v1096 = vld [vmem:[#allocation7 + $0x4b0] sm:$0xff]
        %v1097 = vld [vmem:[#allocation7 + $0x4b8] sm:$0xff]
        %v1098 = vld [vmem:[#allocation7 + $0x4c0] sm:$0xff]
        %v1099 = vld [vmem:[#allocation7 + $0x4c8] sm:$0xff]
        %v1100 = vld [vmem:[#allocation7 + $0x4d0] sm:$0xff]
        %v1101 = vld [vmem:[#allocation7 + $0x4d8] sm:$0xff]
        %v1102 = vld [vmem:[#allocation7 + $0x4e0] sm:$0xff]
        %v1103 = vld [vmem:[#allocation7 + $0x4e8] sm:$0xff]
        %v1104 = vld [vmem:[#allocation7 + $0x4f0] sm:$0xff]
        %v1105 = vld [vmem:[#allocation7 + $0x4f8] sm:$0xff]
        %v1106 = vld [vmem:[#allocation7 + $0x500] sm:$0xff]
        %v1107 = vld [vmem:[#allocation7 + $0x508] sm:$0xff]
        %v1108 = vld [vmem:[#allocation7 + $0x510] sm:$0xff]
        %v1109 = vld [vmem:[#allocation7 + $0x518] sm:$0xff]
        %v1110 = vld [vmem:[#allocation7 + $0x520] sm:$0xff]
        %v1111 = vld [vmem:[#allocation7 + $0x528] sm:$0xff]
        %v1112 = vld [vmem:[#allocation7 + $0x530] sm:$0xff]
        %v1113 = vld [vmem:[#allocation7 + $0x538] sm:$0xff]
        %v1114 = vld [vmem:[#allocation7 + $0x540] sm:$0xff]
        %v1115 = vld [vmem:[#allocation7 + $0x548] sm:$0xff]
        %v1116 = vld [vmem:[#allocation7 + $0x550] sm:$0xff]
        %v1117 = vld [vmem:[#allocation7 + $0x558] sm:$0xff]
        %v1118 = vld [vmem:[#allocation7 + $0x560] sm:$0xff]
        %v1119 = vld [vmem:[#allocation7 + $0x568] sm:$0xff]
        %v1120 = vld [vmem:[#allocation7 + $0x570] sm:$0xff]
        %v1121 = vld [vmem:[#allocation7 + $0x578] sm:$0xff]
        %v1122 = vld [vmem:[#allocation7 + $0x580] sm:$0xff]
        %v1123 = vld [vmem:[#allocation7 + $0x588] sm:$0xff]
        %v1124 = vld [vmem:[#allocation7 + $0x590] sm:$0xff]
        %v1125 = vld [vmem:[#allocation7 + $0x598] sm:$0xff]
        %v1126 = vld [vmem:[#allocation7 + $0x5a0] sm:$0xff]
        %v1127 = vld [vmem:[#allocation7 + $0x5a8] sm:$0xff]
        %v1128 = vld [vmem:[#allocation7 + $0x5b0] sm:$0xff]
        %v1129 = vld [vmem:[#allocation7 + $0x5b8] sm:$0xff]
        %v1130 = vld [vmem:[#allocation7 + $0x5c0] sm:$0xff]
        %v1131 = vld [vmem:[#allocation7 + $0x5c8] sm:$0xff]
        %v1132 = vld [vmem:[#allocation7 + $0x5d0] sm:$0xff]
        %v1133 = vld [vmem:[#allocation7 + $0x5d8] sm:$0xff]
        %v1134 = vld [vmem:[#allocation7 + $0x5e0] sm:$0xff]
        %v1135 = vld [vmem:[#allocation7 + $0x5e8] sm:$0xff]
        %v1136 = vld [vmem:[#allocation7 + $0x5f0] sm:$0xff]
        %v1137 = vld [vmem:[#allocation7 + $0x5f8] sm:$0xff]
        %v1138 = vld [vmem:[%s4] sm:$0x3f]
        %v1140 = vlaneseq
        %v1141 = vshrl.u32 %v1140, 7
        %v1142 = vsub.s32 0, %v1141
        %v1143 = vrot.slane %v1138, %v1142
        %v1144 = vlaneseq
        %v1145 = vshrl.u32 %v1144, 7
        %v1146 = vsub.s32 1, %v1145
        %v1147 = vrot.slane %v1138, %v1146
        %v1148 = vlaneseq
        %v1149 = vshrl.u32 %v1148, 7
        %v1150 = vsub.s32 2, %v1149
        %v1151 = vrot.slane %v1138, %v1150
        %v1152 = vlaneseq
        %v1153 = vshrl.u32 %v1152, 7
        %v1154 = vsub.s32 3, %v1153
        %v1155 = vrot.slane %v1138, %v1154
        %v1156 = vlaneseq
        %v1157 = vshrl.u32 %v1156, 7
        %v1158 = vsub.s32 4, %v1157
        %v1159 = vrot.slane %v1138, %v1158
        %v1160 = vlaneseq
        %v1161 = vshrl.u32 %v1160, 7
        %v1162 = vsub.s32 5, %v1161
        %v1163 = vrot.slane %v1138, %v1162
        %1170 = vmatprep.subr.mxu0 %v947
        %1171 = vmatpush1.msra.mxu0 %v946
        %1172 = vmatprep.subr.mxu0 %v953
        %1173 = vmatpush1.msra.mxu0 %v952
        %1174 = vmatprep.subr.mxu0 %v959
        %1175 = vmatpush1.msra.mxu0 %v958
        %1176 = vmatprep.subr.mxu0 %v965
        %1177 = vmatpush1.msra.mxu0 %v964
        %1178 = vmatprep.subr.mxu0 %v971
        %1179 = vmatpush1.msra.mxu0 %v970
        %1180 = vmatprep.subr.mxu0 %v977
        %1181 = vmatpush1.msra.mxu0 %v976
        %1182 = vmatprep.subr.mxu0 %v983
        %1183 = vmatpush1.msra.mxu0 %v982
        %1184 = vmatprep.subr.mxu0 %v989
        %1185 = vmatpush1.msra.mxu0 %v988
        %1186 = vmatprep.subr.mxu0 %v995
        %1187 = vmatpush1.msra.mxu0 %v994
        %1188 = vmatprep.subr.mxu0 %v1001
        %1189 = vmatpush1.msra.mxu0 %v1000
        %1190 = vmatprep.subr.mxu0 %v1007
        %1191 = vmatpush1.msra.mxu0 %v1006
        %1192 = vmatprep.subr.mxu0 %v1013
        %1193 = vmatpush1.msra.mxu0 %v1012
        %1194 = vmatprep.subr.mxu0 %v1019
        %1195 = vmatpush1.msra.mxu0 %v1018
        %1196 = vmatprep.subr.mxu0 %v1025
        %1197 = vmatpush1.msra.mxu0 %v1024
        %1198 = vmatprep.subr.mxu0 %v1031
        %1199 = vmatpush1.msra.mxu0 %v1030
        %1200 = vmatprep.subr.mxu0 %v1037
        %1201 = vmatpush1.msra.mxu0 %v1036
        %1202 = vmatprep.subr.mxu0 %v1043
        %1203 = vmatpush1.msra.mxu0 %v1042
        %1204 = vmatprep.subr.mxu0 %v1049
        %1205 = vmatpush1.msra.mxu0 %v1048
        %1206 = vmatprep.subr.mxu0 %v1055
        %1207 = vmatpush1.msra.mxu0 %v1054
        %1208 = vmatprep.subr.mxu0 %v1061
        %1209 = vmatpush1.msra.mxu0 %v1060
        %1210 = vmatprep.subr.mxu0 %v1067
        %1211 = vmatpush1.msra.mxu0 %v1066
        %1212 = vmatprep.subr.mxu0 %v1073
        %1213 = vmatpush1.msra.mxu0 %v1072
        %1214 = vmatprep.subr.mxu0 %v1079
        %1215 = vmatpush1.msra.mxu0 %v1078
        %1216 = vmatprep.subr.mxu0 %v1085
        %1217 = vmatpush1.msra.mxu0 %v1084
        %1218 = vmatprep.subr.mxu0 %v1091
        %1219 = vmatpush1.msra.mxu0 %v1090
        %1220 = vmatprep.subr.mxu0 %v1097
        %1221 = vmatpush1.msra.mxu0 %v1096
        %1222 = vmatprep.subr.mxu0 %v1103
        %1223 = vmatpush1.msra.mxu0 %v1102
        %1224 = vmatprep.subr.mxu0 %v1109
        %1225 = vmatpush1.msra.mxu0 %v1108
        %1226 = vmatprep.subr.mxu0 %v1115
        %1227 = vmatpush1.msra.mxu0 %v1114
        %1228 = vmatprep.subr.mxu0 %v1121
        %1229 = vmatpush1.msra.mxu0 %v1120
        %1230 = vmatprep.subr.mxu0 %v1127
        %1231 = vmatpush1.msra.mxu0 %v1126
        %1232 = vmatprep.subr.mxu0 %v1133
        %1233 = vmatpush1.msra.mxu0 %v1132
        %1234 = vmatprep.mubr.f32.mxu0 %v915
        %1235 = vmatmul.mubr.f32.gmra.mrb[0].mxu0 %v914
        %v1236 = vpop.f32.mrb[0].mxu0
        %v1237 = vadd.f32 %v1143, %v1236
        %v1238 = vpop.f32.mrb[0].mxu0
        %v1239 = vadd.f32 %v1147, %v1238
        %1240 = vmatprep.mubr.f32.mxu0 %v917
        %1241 = vmatmul.mubr.f32.gmra.mrb[0].mxu0 %v916
        %v1242 = vpop.f32.mrb[0].mxu0
        %v1243 = vadd.f32 %v1143, %v1242
        %v1244 = vpop.f32.mrb[0].mxu0
        %v1245 = vadd.f32 %v1147, %v1244
        %1246 = vmatprep.mubr.f32.mxu0 %v919
        %1247 = vmatmul.mubr.f32.gmra.mrb[0].mxu0 %v918
        %v1248 = vpop.f32.mrb[0].mxu0
        %v1249 = vadd.f32 %v1143, %v1248
        %v1250 = vpop.f32.mrb[0].mxu0
        %v1251 = vadd.f32 %v1147, %v1250
        %1252 = vmatprep.mubr.f32.mxu0 %v921
        %1253 = vmatmul.mubr.f32.gmra.mrb[0].mxu0 %v920
        %v1254 = vpop.f32.mrb[0].mxu0
        %v1255 = vadd.f32 %v1143, %v1254
        %v1256 = vpop.f32.mrb[0].mxu0
        %v1257 = vadd.f32 %v1147, %v1256
        %1258 = vmatprep.mubr.f32.mxu0 %v923
        %1259 = vmatmul.mubr.f32.gmra.mrb[0].mxu0 %v922
        %v1260 = vpop.f32.mrb[0].mxu0
        %v1261 = vadd.f32 %v1143, %v1260
        %v1262 = vpop.f32.mrb[0].mxu0
        %v1263 = vadd.f32 %v1147, %v1262
        %1264 = vmatprep.mubr.f32.mxu0 %v925
        %1265 = vmatmul.mubr.f32.gmra.mrb[0].mxu0 %v924
        %v1266 = vpop.f32.mrb[0].mxu0
        %v1267 = vadd.f32 %v1143, %v1266
        %v1268 = vpop.f32.mrb[0].mxu0
        %v1269 = vadd.f32 %v1147, %v1268
        %1270 = vmatprep.mubr.f32.mxu0 %v927
        %1271 = vmatmul.mubr.f32.gmra.mrb[0].mxu0 %v926
        %v1272 = vpop.f32.mrb[0].mxu0
        %v1273 = vadd.f32 %v1143, %v1272
        %v1274 = vpop.f32.mrb[0].mxu0
        %v1275 = vadd.f32 %v1147, %v1274
        %1276 = vmatprep.mubr.f32.mxu0 %v929
        %1277 = vmatmul.mubr.f32.gmra.mrb[0].mxu0 %v928
        %v1278 = vpop.f32.mrb[0].mxu0
        %v1279 = vadd.f32 %v1143, %v1278
        %v1280 = vpop.f32.mrb[0].mxu0
        %v1281 = vadd.f32 %v1147, %v1280
        %1282 = vmatprep.mubr.f32.mxu0 %v931
        %1283 = vmatmul.mubr.f32.gmra.mrb[0].mxu0 %v930
        %v1284 = vpop.f32.mrb[0].mxu0
        %v1285 = vadd.f32 %v1143, %v1284
        %v1286 = vpop.f32.mrb[0].mxu0
        %v1287 = vadd.f32 %v1147, %v1286
        %1288 = vmatprep.mubr.f32.mxu0 %v933
        %1289 = vmatmul.mubr.f32.gmra.mrb[0].mxu0 %v932
        %v1290 = vpop.f32.mrb[0].mxu0
        %v1291 = vadd.f32 %v1143, %v1290
        %v1292 = vpop.f32.mrb[0].mxu0
        %v1293 = vadd.f32 %v1147, %v1292
        %1294 = vmatprep.mubr.f32.mxu0 %v935
        %1295 = vmatmul.mubr.f32.gmra.mrb[0].mxu0 %v934
        %v1296 = vpop.f32.mrb[0].mxu0
        %v1297 = vadd.f32 %v1143, %v1296
        %v1298 = vpop.f32.mrb[0].mxu0
        %v1299 = vadd.f32 %v1147, %v1298
        %1300 = vmatprep.mubr.f32.mxu0 %v937
        %1301 = vmatmul.mubr.f32.gmra.mrb[0].mxu0 %v936
        %v1302 = vpop.f32.mrb[0].mxu0
        %v1303 = vadd.f32 %v1143, %v1302
        %v1304 = vpop.f32.mrb[0].mxu0
        %v1305 = vadd.f32 %v1147, %v1304
        %1306 = vmatprep.mubr.f32.mxu0 %v939
        %1307 = vmatmul.mubr.f32.gmra.mrb[0].mxu0 %v938
        %v1308 = vpop.f32.mrb[0].mxu0
        %v1309 = vadd.f32 %v1143, %v1308
        %v1310 = vpop.f32.mrb[0].mxu0
        %v1311 = vadd.f32 %v1147, %v1310
        %1312 = vmatprep.mubr.f32.mxu0 %v941
        %1313 = vmatmul.mubr.f32.gmra.mrb[0].mxu0 %v940
        %v1314 = vpop.f32.mrb[0].mxu0
        %v1315 = vadd.f32 %v1143, %v1314
        %v1316 = vpop.f32.mrb[0].mxu0
        %v1317 = vadd.f32 %v1147, %v1316
        %1318 = vmatprep.mubr.f32.mxu0 %v943
        %1319 = vmatmul.mubr.f32.gmra.mrb[0].mxu0 %v942
        %v1320 = vpop.f32.mrb[0].mxu0
        %v1321 = vadd.f32 %v1143, %v1320
        %v1322 = vpop.f32.mrb[0].mxu0
        %v1323 = vadd.f32 %v1147, %v1322
        %1324 = vmatprep.mubr.f32.mxu0 %v945
        %1325 = vmatmul.mubr.f32.gmra.mrb[0].mxu0 %v944
        %v1326 = vpop.f32.mrb[0].mxu0
        %v1327 = vadd.f32 %v1143, %v1326
        %v1328 = vpop.f32.mrb[0].mxu0
        %v1329 = vadd.f32 %v1147, %v1328
        %1330 = vdwg.mxu0
        %1331 = vmatprep.subr.mxu0 %v949
        %1332 = vmatpush1.msra.mxu0 %v948
        %1333 = vmatprep.subr.mxu0 %v955
        %1334 = vmatpush1.msra.mxu0 %v954
        %1335 = vmatprep.subr.mxu0 %v961
        %1336 = vmatpush1.msra.mxu0 %v960
        %1337 = vmatprep.subr.mxu0 %v967
        %1338 = vmatpush1.msra.mxu0 %v966
        %1339 = vmatprep.subr.mxu0 %v973
        %1340 = vmatpush1.msra.mxu0 %v972
        %1341 = vmatprep.subr.mxu0 %v979
        %1342 = vmatpush1.msra.mxu0 %v978
        %1343 = vmatprep.subr.mxu0 %v985
        %1344 = vmatpush1.msra.mxu0 %v984
        %1345 = vmatprep.subr.mxu0 %v991
        %1346 = vmatpush1.msra.mxu0 %v990
        %1347 = vmatprep.subr.mxu0 %v997
        %1348 = vmatpush1.msra.mxu0 %v996
        %1349 = vmatprep.subr.mxu0 %v1003
        %1350 = vmatpush1.msra.mxu0 %v1002
        %1351 = vmatprep.subr.mxu0 %v1009
        %1352 = vmatpush1.msra.mxu0 %v1008
        %1353 = vmatprep.subr.mxu0 %v1015
        %1354 = vmatpush1.msra.mxu0 %v1014
        %1355 = vmatprep.subr.mxu0 %v1021
        %1356 = vmatpush1.msra.mxu0 %v1020
        %1357 = vmatprep.subr.mxu0 %v1027
        %1358 = vmatpush1.msra.mxu0 %v1026
        %1359 = vmatprep.subr.mxu0 %v1033
        %1360 = vmatpush1.msra.mxu0 %v1032
        %1361 = vmatprep.subr.mxu0 %v1039
        %1362 = vmatpush1.msra.mxu0 %v1038
        %1363 = vmatprep.subr.mxu0 %v1045
        %1364 = vmatpush1.msra.mxu0 %v1044
        %1365 = vmatprep.subr.mxu0 %v1051
        %1366 = vmatpush1.msra.mxu0 %v1050
        %1367 = vmatprep.subr.mxu0 %v1057
        %1368 = vmatpush1.msra.mxu0 %v1056
        %1369 = vmatprep.subr.mxu0 %v1063
        %1370 = vmatpush1.msra.mxu0 %v1062
        %1371 = vmatprep.subr.mxu0 %v1069
        %1372 = vmatpush1.msra.mxu0 %v1068
        %1373 = vmatprep.subr.mxu0 %v1075
        %1374 = vmatpush1.msra.mxu0 %v1074
        %1375 = vmatprep.subr.mxu0 %v1081
        %1376 = vmatpush1.msra.mxu0 %v1080
        %1377 = vmatprep.subr.mxu0 %v1087
        %1378 = vmatpush1.msra.mxu0 %v1086
        %1379 = vmatprep.subr.mxu0 %v1093
        %1380 = vmatpush1.msra.mxu0 %v1092
        %1381 = vmatprep.subr.mxu0 %v1099
        %1382 = vmatpush1.msra.mxu0 %v1098
        %1383 = vmatprep.subr.mxu0 %v1105
        %1384 = vmatpush1.msra.mxu0 %v1104
        %1385 = vmatprep.subr.mxu0 %v1111
        %1386 = vmatpush1.msra.mxu0 %v1110
        %1387 = vmatprep.subr.mxu0 %v1117
        %1388 = vmatpush1.msra.mxu0 %v1116
        %1389 = vmatprep.subr.mxu0 %v1123
        %1390 = vmatpush1.msra.mxu0 %v1122
        %1391 = vmatprep.subr.mxu0 %v1129
        %1392 = vmatpush1.msra.mxu0 %v1128
        %1393 = vmatprep.subr.mxu0 %v1135
        %1394 = vmatpush1.msra.mxu0 %v1134
        %1395 = vmatprep.mubr.f32.mxu0 %v915
        %1396 = vmatmul.mubr.f32.gmra.mrb[0].mxu0 %v914
        %v1397 = vpop.f32.mrb[0].mxu0
        %v1398 = vadd.f32 %v1151, %v1397
        %v1399 = vpop.f32.mrb[0].mxu0
        %v1400 = vadd.f32 %v1155, %v1399
        %1401 = vmatprep.mubr.f32.mxu0 %v917
        %1402 = vmatmul.mubr.f32.gmra.mrb[0].mxu0 %v916
        %v1403 = vpop.f32.mrb[0].mxu0
        %v1404 = vadd.f32 %v1151, %v1403
        %v1405 = vpop.f32.mrb[0].mxu0
        %v1406 = vadd.f32 %v1155, %v1405
        %1407 = vmatprep.mubr.f32.mxu0 %v919
        %1408 = vmatmul.mubr.f32.gmra.mrb[0].mxu0 %v918
        %v1409 = vpop.f32.mrb[0].mxu0
        %v1410 = vadd.f32 %v1151, %v1409
        %v1411 = vpop.f32.mrb[0].mxu0
        %v1412 = vadd.f32 %v1155, %v1411
        %1413 = vmatprep.mubr.f32.mxu0 %v921
        %1414 = vmatmul.mubr.f32.gmra.mrb[0].mxu0 %v920
        %v1415 = vpop.f32.mrb[0].mxu0
        %v1416 = vadd.f32 %v1151, %v1415
        %v1417 = vpop.f32.mrb[0].mxu0
        %v1418 = vadd.f32 %v1155, %v1417
        %1419 = vmatprep.mubr.f32.mxu0 %v923
        %1420 = vmatmul.mubr.f32.gmra.mrb[0].mxu0 %v922
        %v1421 = vpop.f32.mrb[0].mxu0
        %v1422 = vadd.f32 %v1151, %v1421
        %v1423 = vpop.f32.mrb[0].mxu0
        %v1424 = vadd.f32 %v1155, %v1423
        %1425 = vmatprep.mubr.f32.mxu0 %v925
        %1426 = vmatmul.mubr.f32.gmra.mrb[0].mxu0 %v924
        %v1427 = vpop.f32.mrb[0].mxu0
        %v1428 = vadd.f32 %v1151, %v1427
        %v1429 = vpop.f32.mrb[0].mxu0
        %v1430 = vadd.f32 %v1155, %v1429
        %1431 = vmatprep.mubr.f32.mxu0 %v927
        %1432 = vmatmul.mubr.f32.gmra.mrb[0].mxu0 %v926
        %v1433 = vpop.f32.mrb[0].mxu0
        %v1434 = vadd.f32 %v1151, %v1433
        %v1435 = vpop.f32.mrb[0].mxu0
        %v1436 = vadd.f32 %v1155, %v1435
        %1437 = vmatprep.mubr.f32.mxu0 %v929
        %1438 = vmatmul.mubr.f32.gmra.mrb[0].mxu0 %v928
        %v1439 = vpop.f32.mrb[0].mxu0
        %v1440 = vadd.f32 %v1151, %v1439
        %v1441 = vpop.f32.mrb[0].mxu0
        %v1442 = vadd.f32 %v1155, %v1441
        %1443 = vmatprep.mubr.f32.mxu0 %v931
        %1444 = vmatmul.mubr.f32.gmra.mrb[0].mxu0 %v930
        %v1445 = vpop.f32.mrb[0].mxu0
        %v1446 = vadd.f32 %v1151, %v1445
        %v1447 = vpop.f32.mrb[0].mxu0
        %v1448 = vadd.f32 %v1155, %v1447
        %1449 = vmatprep.mubr.f32.mxu0 %v933
        %1450 = vmatmul.mubr.f32.gmra.mrb[0].mxu0 %v932
        %v1451 = vpop.f32.mrb[0].mxu0
        %v1452 = vadd.f32 %v1151, %v1451
        %v1453 = vpop.f32.mrb[0].mxu0
        %v1454 = vadd.f32 %v1155, %v1453
        %1455 = vmatprep.mubr.f32.mxu0 %v935
        %1456 = vmatmul.mubr.f32.gmra.mrb[0].mxu0 %v934
        %v1457 = vpop.f32.mrb[0].mxu0
        %v1458 = vadd.f32 %v1151, %v1457
        %v1459 = vpop.f32.mrb[0].mxu0
        %v1460 = vadd.f32 %v1155, %v1459
        %1461 = vmatprep.mubr.f32.mxu0 %v937
        %1462 = vmatmul.mubr.f32.gmra.mrb[0].mxu0 %v936
        %v1463 = vpop.f32.mrb[0].mxu0
        %v1464 = vadd.f32 %v1151, %v1463
        %v1465 = vpop.f32.mrb[0].mxu0
        %v1466 = vadd.f32 %v1155, %v1465
        %1467 = vmatprep.mubr.f32.mxu0 %v939
        %1468 = vmatmul.mubr.f32.gmra.mrb[0].mxu0 %v938
        %v1469 = vpop.f32.mrb[0].mxu0
        %v1470 = vadd.f32 %v1151, %v1469
        %v1471 = vpop.f32.mrb[0].mxu0
        %v1472 = vadd.f32 %v1155, %v1471
        %1473 = vmatprep.mubr.f32.mxu0 %v941
        %1474 = vmatmul.mubr.f32.gmra.mrb[0].mxu0 %v940
        %v1475 = vpop.f32.mrb[0].mxu0
        %v1476 = vadd.f32 %v1151, %v1475
        %v1477 = vpop.f32.mrb[0].mxu0
        %v1478 = vadd.f32 %v1155, %v1477
        %1479 = vmatprep.mubr.f32.mxu0 %v943
        %1480 = vmatmul.mubr.f32.gmra.mrb[0].mxu0 %v942
        %v1481 = vpop.f32.mrb[0].mxu0
        %v1482 = vadd.f32 %v1151, %v1481
        %v1483 = vpop.f32.mrb[0].mxu0
        %v1484 = vadd.f32 %v1155, %v1483
        %1485 = vmatprep.mubr.f32.mxu0 %v945
        %1486 = vmatmul.mubr.f32.gmra.mrb[0].mxu0 %v944
        %v1487 = vpop.f32.mrb[0].mxu0
        %v1488 = vadd.f32 %v1151, %v1487
        %v1489 = vpop.f32.mrb[0].mxu0
        %v1490 = vadd.f32 %v1155, %v1489
        %1491 = vdwg.mxu0
        %1492 = vmatprep.subr.mxu0 %v951
        %1493 = vmatpush1.msra.mxu0 %v950
        %1494 = vmatprep.subr.mxu0 %v957
        %1495 = vmatpush1.msra.mxu0 %v956
        %1496 = vmatprep.subr.mxu0 %v963
        %1497 = vmatpush1.msra.mxu0 %v962
        %1498 = vmatprep.subr.mxu0 %v969
        %1499 = vmatpush1.msra.mxu0 %v968
        %1500 = vmatprep.subr.mxu0 %v975
        %1501 = vmatpush1.msra.mxu0 %v974
        %1502 = vmatprep.subr.mxu0 %v981
        %1503 = vmatpush1.msra.mxu0 %v980
        %1504 = vmatprep.subr.mxu0 %v987
        %1505 = vmatpush1.msra.mxu0 %v986
        %1506 = vmatprep.subr.mxu0 %v993
        %1507 = vmatpush1.msra.mxu0 %v992
        %1508 = vmatprep.subr.mxu0 %v999
        %1509 = vmatpush1.msra.mxu0 %v998
        %1510 = vmatprep.subr.mxu0 %v1005
        %1511 = vmatpush1.msra.mxu0 %v1004
        %1512 = vmatprep.subr.mxu0 %v1011
        %1513 = vmatpush1.msra.mxu0 %v1010
        %1514 = vmatprep.subr.mxu0 %v1017
        %1515 = vmatpush1.msra.mxu0 %v1016
        %1516 = vmatprep.subr.mxu0 %v1023
        %1517 = vmatpush1.msra.mxu0 %v1022
        %1518 = vmatprep.subr.mxu0 %v1029
        %1519 = vmatpush1.msra.mxu0 %v1028
        %1520 = vmatprep.subr.mxu0 %v1035
        %1521 = vmatpush1.msra.mxu0 %v1034
        %1522 = vmatprep.subr.mxu0 %v1041
        %1523 = vmatpush1.msra.mxu0 %v1040
        %1524 = vmatprep.subr.mxu0 %v1047
        %1525 = vmatpush1.msra.mxu0 %v1046
        %1526 = vmatprep.subr.mxu0 %v1053
        %1527 = vmatpush1.msra.mxu0 %v1052
        %1528 = vmatprep.subr.mxu0 %v1059
        %1529 = vmatpush1.msra.mxu0 %v1058
        %1530 = vmatprep.subr.mxu0 %v1065
        %1531 = vmatpush1.msra.mxu0 %v1064
        %1532 = vmatprep.subr.mxu0 %v1071
        %1533 = vmatpush1.msra.mxu0 %v1070
        %1534 = vmatprep.subr.mxu0 %v1077
        %1535 = vmatpush1.msra.mxu0 %v1076
        %1536 = vmatprep.subr.mxu0 %v1083
        %1537 = vmatpush1.msra.mxu0 %v1082
        %1538 = vmatprep.subr.mxu0 %v1089
        %1539 = vmatpush1.msra.mxu0 %v1088
        %1540 = vmatprep.subr.mxu0 %v1095
        %1541 = vmatpush1.msra.mxu0 %v1094
        %1542 = vmatprep.subr.mxu0 %v1101
        %1543 = vmatpush1.msra.mxu0 %v1100
        %1544 = vmatprep.subr.mxu0 %v1107
        %1545 = vmatpush1.msra.mxu0 %v1106
        %1546 = vmatprep.subr.mxu0 %v1113
        %1547 = vmatpush1.msra.mxu0 %v1112
        %1548 = vmatprep.subr.mxu0 %v1119
        %1549 = vmatpush1.msra.mxu0 %v1118
        %1550 = vmatprep.subr.mxu0 %v1125
        %1551 = vmatpush1.msra.mxu0 %v1124
        %1552 = vmatprep.subr.mxu0 %v1131
        %1553 = vmatpush1.msra.mxu0 %v1130
        %1554 = vmatprep.subr.mxu0 %v1137
        %1555 = vmatpush1.msra.mxu0 %v1136
        %1556 = vmatprep.mubr.f32.mxu0 %v915
        %1557 = vmatmul.mubr.f32.gmra.mrb[0].mxu0 %v914
        %v1558 = vpop.f32.mrb[0].mxu0
        %v1559 = vadd.f32 %v1159, %v1558
        %v1560 = vpop.f32.mrb[0].mxu0
        %v1561 = vadd.f32 %v1163, %v1560
        %1562 = vmatprep.mubr.f32.mxu0 %v917
        %1563 = vmatmul.mubr.f32.gmra.mrb[0].mxu0 %v916
        %v1564 = vpop.f32.mrb[0].mxu0
        %v1565 = vadd.f32 %v1159, %v1564
        %v1566 = vpop.f32.mrb[0].mxu0
        %v1567 = vadd.f32 %v1163, %v1566
        %1568 = vmatprep.mubr.f32.mxu0 %v919
        %1569 = vmatmul.mubr.f32.gmra.mrb[0].mxu0 %v918
        %v1570 = vpop.f32.mrb[0].mxu0
        %v1571 = vadd.f32 %v1159, %v1570
        %v1572 = vpop.f32.mrb[0].mxu0
        %v1573 = vadd.f32 %v1163, %v1572
        %1574 = vmatprep.mubr.f32.mxu0 %v921
        %1575 = vmatmul.mubr.f32.gmra.mrb[0].mxu0 %v920
        %v1576 = vpop.f32.mrb[0].mxu0
        %v1577 = vadd.f32 %v1159, %v1576
        %v1578 = vpop.f32.mrb[0].mxu0
        %v1579 = vadd.f32 %v1163, %v1578
        %1580 = vmatprep.mubr.f32.mxu0 %v923
        %1581 = vmatmul.mubr.f32.gmra.mrb[0].mxu0 %v922
        %v1582 = vpop.f32.mrb[0].mxu0
        %v1583 = vadd.f32 %v1159, %v1582
        %v1584 = vpop.f32.mrb[0].mxu0
        %v1585 = vadd.f32 %v1163, %v1584
        %1586 = vmatprep.mubr.f32.mxu0 %v925
        %1587 = vmatmul.mubr.f32.gmra.mrb[0].mxu0 %v924
        %v1588 = vpop.f32.mrb[0].mxu0
        %v1589 = vadd.f32 %v1159, %v1588
        %v1590 = vpop.f32.mrb[0].mxu0
        %v1591 = vadd.f32 %v1163, %v1590
        %1592 = vmatprep.mubr.f32.mxu0 %v927
        %1593 = vmatmul.mubr.f32.gmra.mrb[0].mxu0 %v926
        %v1594 = vpop.f32.mrb[0].mxu0
        %v1595 = vadd.f32 %v1159, %v1594
        %v1596 = vpop.f32.mrb[0].mxu0
        %v1597 = vadd.f32 %v1163, %v1596
        %1598 = vmatprep.mubr.f32.mxu0 %v929
        %1599 = vmatmul.mubr.f32.gmra.mrb[0].mxu0 %v928
        %v1600 = vpop.f32.mrb[0].mxu0
        %v1601 = vadd.f32 %v1159, %v1600
        %v1602 = vpop.f32.mrb[0].mxu0
        %v1603 = vadd.f32 %v1163, %v1602
        %1604 = vmatprep.mubr.f32.mxu0 %v931
        %1605 = vmatmul.mubr.f32.gmra.mrb[0].mxu0 %v930
        %v1606 = vpop.f32.mrb[0].mxu0
        %v1607 = vadd.f32 %v1159, %v1606
        %v1608 = vpop.f32.mrb[0].mxu0
        %v1609 = vadd.f32 %v1163, %v1608
        %1610 = vmatprep.mubr.f32.mxu0 %v933
        %1611 = vmatmul.mubr.f32.gmra.mrb[0].mxu0 %v932
        %v1612 = vpop.f32.mrb[0].mxu0
        %v1613 = vadd.f32 %v1159, %v1612
        %v1614 = vpop.f32.mrb[0].mxu0
        %v1615 = vadd.f32 %v1163, %v1614
        %1616 = vmatprep.mubr.f32.mxu0 %v935
        %1617 = vmatmul.mubr.f32.gmra.mrb[0].mxu0 %v934
        %v1618 = vpop.f32.mrb[0].mxu0
        %v1619 = vadd.f32 %v1159, %v1618
        %v1620 = vpop.f32.mrb[0].mxu0
        %v1621 = vadd.f32 %v1163, %v1620
        %1622 = vmatprep.mubr.f32.mxu0 %v937
        %1623 = vmatmul.mubr.f32.gmra.mrb[0].mxu0 %v936
        %v1624 = vpop.f32.mrb[0].mxu0
        %v1625 = vadd.f32 %v1159, %v1624
        %v1626 = vpop.f32.mrb[0].mxu0
        %v1627 = vadd.f32 %v1163, %v1626
        %1628 = vmatprep.mubr.f32.mxu0 %v939
        %1629 = vmatmul.mubr.f32.gmra.mrb[0].mxu0 %v938
        %v1630 = vpop.f32.mrb[0].mxu0
        %v1631 = vadd.f32 %v1159, %v1630
        %v1632 = vpop.f32.mrb[0].mxu0
        %v1633 = vadd.f32 %v1163, %v1632
        %1634 = vmatprep.mubr.f32.mxu0 %v941
        %1635 = vmatmul.mubr.f32.gmra.mrb[0].mxu0 %v940
        %v1636 = vpop.f32.mrb[0].mxu0
        %v1637 = vadd.f32 %v1159, %v1636
        %v1638 = vpop.f32.mrb[0].mxu0
        %v1639 = vadd.f32 %v1163, %v1638
        %1640 = vmatprep.mubr.f32.mxu0 %v943
        %1641 = vmatmul.mubr.f32.gmra.mrb[0].mxu0 %v942
        %v1642 = vpop.f32.mrb[0].mxu0
        %v1643 = vadd.f32 %v1159, %v1642
        %v1644 = vpop.f32.mrb[0].mxu0
        %v1645 = vadd.f32 %v1163, %v1644
        %1646 = vmatprep.mubr.f32.mxu0 %v945
        %1647 = vmatmul.mubr.f32.gmra.mrb[0].mxu0 %v944
        %v1648 = vpop.f32.mrb[0].mxu0
        %v1649 = vadd.f32 %v1159, %v1648
        %v1650 = vpop.f32.mrb[0].mxu0
        %v1651 = vadd.f32 %v1163, %v1650
        %1652 = vdwg.mxu0
        %v1653 = vld [vmem:[%s5] sm:$0x3]
        %v1654 = vmul.f32 %v1237, %v1237
        %v1655 = vmul.f32 %v1243, %v1243
        %v1656 = vmul.f32 %v1249, %v1249
        %v1657 = vmul.f32 %v1255, %v1255
        %v1658 = vmul.f32 %v1261, %v1261
        %v1659 = vmul.f32 %v1267, %v1267
        %v1660 = vmul.f32 %v1273, %v1273
        %v1661 = vmul.f32 %v1279, %v1279
        %v1662 = vmul.f32 %v1285, %v1285
        %v1663 = vmul.f32 %v1291, %v1291
        %v1664 = vmul.f32 %v1297, %v1297
        %v1665 = vmul.f32 %v1303, %v1303
        %v1666 = vmul.f32 %v1309, %v1309
        %v1667 = vmul.f32 %v1315, %v1315
        %v1668 = vmul.f32 %v1321, %v1321
        %v1669 = vmul.f32 %v1327, %v1327
        %1670 = vadd.xlane.f32.xlu0 %v1654
        %v1671 = vpop.xlane.xlu0 %1670
        %1672 = vadd.xlane.f32.xlu0 %v1655
        %v1673 = vpop.xlane.xlu0 %1672
        %1674 = vadd.xlane.f32.xlu0 %v1656
        %v1675 = vpop.xlane.xlu0 %1674
        %1676 = vadd.xlane.f32.xlu0 %v1657
        %v1677 = vpop.xlane.xlu0 %1676
        %1678 = vadd.xlane.f32.xlu0 %v1658
        %v1679 = vpop.xlane.xlu0 %1678
        %1680 = vadd.xlane.f32.xlu0 %v1659
        %v1681 = vpop.xlane.xlu0 %1680
        %1682 = vadd.xlane.f32.xlu0 %v1660
        %v1683 = vpop.xlane.xlu0 %1682
        %1684 = vadd.xlane.f32.xlu0 %v1661
        %v1685 = vpop.xlane.xlu0 %1684
        %1686 = vadd.xlane.f32.xlu0 %v1662
        %v1687 = vpop.xlane.xlu0 %1686
        %1688 = vadd.xlane.f32.xlu0 %v1663
        %v1689 = vpop.xlane.xlu0 %1688
        %1690 = vadd.xlane.f32.xlu0 %v1664
        %v1691 = vpop.xlane.xlu0 %1690
        %1692 = vadd.xlane.f32.xlu0 %v1665
        %v1693 = vpop.xlane.xlu0 %1692
        %1694 = vadd.xlane.f32.xlu0 %v1666
        %v1695 = vpop.xlane.xlu0 %1694
        %1696 = vadd.xlane.f32.xlu0 %v1667
        %v1697 = vpop.xlane.xlu0 %1696
        %1698 = vadd.xlane.f32.xlu0 %v1668
        %v1699 = vpop.xlane.xlu0 %1698
        %1700 = vadd.xlane.f32.xlu0 %v1669
        %v1701 = vpop.xlane.xlu0 %1700
        %v1702 = vrcp.pop 128.0
        %v1703 = vmul.f32 %v1671, %v1702
        %v1704 = vmul.f32 %v1673, %v1702
        %v1705 = vmul.f32 %v1675, %v1702
        %v1706 = vmul.f32 %v1677, %v1702
        %v1707 = vmul.f32 %v1679, %v1702
        %v1708 = vmul.f32 %v1681, %v1702
        %v1709 = vmul.f32 %v1683, %v1702
        %v1710 = vmul.f32 %v1685, %v1702
        %v1711 = vmul.f32 %v1687, %v1702
        %v1712 = vmul.f32 %v1689, %v1702
        %v1713 = vmul.f32 %v1691, %v1702
        %v1714 = vmul.f32 %v1693, %v1702
        %v1715 = vmul.f32 %v1695, %v1702
        %v1716 = vmul.f32 %v1697, %v1702
        %v1717 = vmul.f32 %v1699, %v1702
        %v1718 = vmul.f32 %v1701, %v1702
        %v1719 = vadd.f32 %v1703, 1.1920929e-07
        %v1720 = vadd.f32 %v1704, 1.1920929e-07
        %v1721 = vadd.f32 %v1705, 1.1920929e-07
        %v1722 = vadd.f32 %v1706, 1.1920929e-07
        %v1723 = vadd.f32 %v1707, 1.1920929e-07
        %v1724 = vadd.f32 %v1708, 1.1920929e-07
        %v1725 = vadd.f32 %v1709, 1.1920929e-07
        %v1726 = vadd.f32 %v1710, 1.1920929e-07
        %v1727 = vadd.f32 %v1711, 1.1920929e-07
        %v1728 = vadd.f32 %v1712, 1.1920929e-07
        %v1729 = vadd.f32 %v1713, 1.1920929e-07
        %v1730 = vadd.f32 %v1714, 1.1920929e-07
        %v1731 = vadd.f32 %v1715, 1.1920929e-07
        %v1732 = vadd.f32 %v1716, 1.1920929e-07
        %v1733 = vadd.f32 %v1717, 1.1920929e-07
        %v1734 = vadd.f32 %v1718, 1.1920929e-07
        %v1735 = vrsqrt.pop %v1719
        %v1736 = vrsqrt.pop %v1720
        %v1737 = vrsqrt.pop %v1721
        %v1738 = vrsqrt.pop %v1722
        %v1739 = vrsqrt.pop %v1723
        %v1740 = vrsqrt.pop %v1724
        %v1741 = vrsqrt.pop %v1725
        %v1742 = vrsqrt.pop %v1726
        %v1743 = vrsqrt.pop %v1727
        %v1744 = vrsqrt.pop %v1728
        %v1745 = vrsqrt.pop %v1729
        %v1746 = vrsqrt.pop %v1730
        %v1747 = vrsqrt.pop %v1731
        %v1748 = vrsqrt.pop %v1732
        %v1749 = vrsqrt.pop %v1733
        %v1750 = vrsqrt.pop %v1734
        %v1751 = vmul.f32 %v1237, %v1735
        %v1752 = vmul.f32 %v1243, %v1736
        %v1753 = vmul.f32 %v1249, %v1737
        %v1754 = vmul.f32 %v1255, %v1738
        %v1755 = vmul.f32 %v1261, %v1739
        %v1756 = vmul.f32 %v1267, %v1740
        %v1757 = vmul.f32 %v1273, %v1741
        %v1758 = vmul.f32 %v1279, %v1742
        %v1759 = vmul.f32 %v1285, %v1743
        %v1760 = vmul.f32 %v1291, %v1744
        %v1761 = vmul.f32 %v1297, %v1745
        %v1762 = vmul.f32 %v1303, %v1746
        %v1763 = vmul.f32 %v1309, %v1747
        %v1764 = vmul.f32 %v1315, %v1748
        %v1765 = vmul.f32 %v1321, %v1749
        %v1766 = vmul.f32 %v1327, %v1750
        %v1767 = vmul.f32 %v1239, %v1239
        %v1768 = vmul.f32 %v1245, %v1245
        %v1769 = vmul.f32 %v1251, %v1251
        %v1770 = vmul.f32 %v1257, %v1257
        %v1771 = vmul.f32 %v1263, %v1263
        %v1772 = vmul.f32 %v1269, %v1269
        %v1773 = vmul.f32 %v1275, %v1275
        %v1774 = vmul.f32 %v1281, %v1281
        %v1775 = vmul.f32 %v1287, %v1287
        %v1776 = vmul.f32 %v1293, %v1293
        %v1777 = vmul.f32 %v1299, %v1299
        %v1778 = vmul.f32 %v1305, %v1305
        %v1779 = vmul.f32 %v1311, %v1311
        %v1780 = vmul.f32 %v1317, %v1317
        %v1781 = vmul.f32 %v1323, %v1323
        %v1782 = vmul.f32 %v1329, %v1329
        %1783 = vadd.xlane.f32.xlu0 %v1767
        %v1784 = vpop.xlane.xlu0 %1783
        %1785 = vadd.xlane.f32.xlu0 %v1768
        %v1786 = vpop.xlane.xlu0 %1785
        %1787 = vadd.xlane.f32.xlu0 %v1769
        %v1788 = vpop.xlane.xlu0 %1787
        %1789 = vadd.xlane.f32.xlu0 %v1770
        %v1790 = vpop.xlane.xlu0 %1789
        %1791 = vadd.xlane.f32.xlu0 %v1771
        %v1792 = vpop.xlane.xlu0 %1791
        %1793 = vadd.xlane.f32.xlu0 %v1772
        %v1794 = vpop.xlane.xlu0 %1793
        %1795 = vadd.xlane.f32.xlu0 %v1773
        %v1796 = vpop.xlane.xlu0 %1795
        %1797 = vadd.xlane.f32.xlu0 %v1774
        %v1798 = vpop.xlane.xlu0 %1797
        %1799 = vadd.xlane.f32.xlu0 %v1775
        %v1800 = vpop.xlane.xlu0 %1799
        %1801 = vadd.xlane.f32.xlu0 %v1776
        %v1802 = vpop.xlane.xlu0 %1801
        %1803 = vadd.xlane.f32.xlu0 %v1777
        %v1804 = vpop.xlane.xlu0 %1803
        %1805 = vadd.xlane.f32.xlu0 %v1778
        %v1806 = vpop.xlane.xlu0 %1805
        %1807 = vadd.xlane.f32.xlu0 %v1779
        %v1808 = vpop.xlane.xlu0 %1807
        %1809 = vadd.xlane.f32.xlu0 %v1780
        %v1810 = vpop.xlane.xlu0 %1809
        %1811 = vadd.xlane.f32.xlu0 %v1781
        %v1812 = vpop.xlane.xlu0 %1811
        %1813 = vadd.xlane.f32.xlu0 %v1782
        %v1814 = vpop.xlane.xlu0 %1813
        %v1815 = vmul.f32 %v1784, %v1702
        %v1816 = vmul.f32 %v1786, %v1702
        %v1817 = vmul.f32 %v1788, %v1702
        %v1818 = vmul.f32 %v1790, %v1702
        %v1819 = vmul.f32 %v1792, %v1702
        %v1820 = vmul.f32 %v1794, %v1702
        %v1821 = vmul.f32 %v1796, %v1702
        %v1822 = vmul.f32 %v1798, %v1702
        %v1823 = vmul.f32 %v1800, %v1702
        %v1824 = vmul.f32 %v1802, %v1702
        %v1825 = vmul.f32 %v1804, %v1702
        %v1826 = vmul.f32 %v1806, %v1702
        %v1827 = vmul.f32 %v1808, %v1702
        %v1828 = vmul.f32 %v1810, %v1702
        %v1829 = vmul.f32 %v1812, %v1702
        %v1830 = vmul.f32 %v1814, %v1702
        %v1831 = vadd.f32 %v1815, 1.1920929e-07
        %v1832 = vadd.f32 %v1816, 1.1920929e-07
        %v1833 = vadd.f32 %v1817, 1.1920929e-07
        %v1834 = vadd.f32 %v1818, 1.1920929e-07
        %v1835 = vadd.f32 %v1819, 1.1920929e-07
        %v1836 = vadd.f32 %v1820, 1.1920929e-07
        %v1837 = vadd.f32 %v1821, 1.1920929e-07
        %v1838 = vadd.f32 %v1822, 1.1920929e-07
        %v1839 = vadd.f32 %v1823, 1.1920929e-07
        %v1840 = vadd.f32 %v1824, 1.1920929e-07
        %v1841 = vadd.f32 %v1825, 1.1920929e-07
        %v1842 = vadd.f32 %v1826, 1.1920929e-07
        %v1843 = vadd.f32 %v1827, 1.1920929e-07
        %v1844 = vadd.f32 %v1828, 1.1920929e-07
        %v1845 = vadd.f32 %v1829, 1.1920929e-07
        %v1846 = vadd.f32 %v1830, 1.1920929e-07
        %v1847 = vrsqrt.pop %v1831
        %v1848 = vrsqrt.pop %v1832
        %v1849 = vrsqrt.pop %v1833
        %v1850 = vrsqrt.pop %v1834
        %v1851 = vrsqrt.pop %v1835
        %v1852 = vrsqrt.pop %v1836
        %v1853 = vrsqrt.pop %v1837
        %v1854 = vrsqrt.pop %v1838
        %v1855 = vrsqrt.pop %v1839
        %v1856 = vrsqrt.pop %v1840
        %v1857 = vrsqrt.pop %v1841
        %v1858 = vrsqrt.pop %v1842
        %v1859 = vrsqrt.pop %v1843
        %v1860 = vrsqrt.pop %v1844
        %v1861 = vrsqrt.pop %v1845
        %v1862 = vrsqrt.pop %v1846
        %v1863 = vmul.f32 %v1239, %v1847
        %v1864 = vmul.f32 %v1245, %v1848
        %v1865 = vmul.f32 %v1251, %v1849
        %v1866 = vmul.f32 %v1257, %v1850
        %v1867 = vmul.f32 %v1263, %v1851
        %v1868 = vmul.f32 %v1269, %v1852
        %v1869 = vmul.f32 %v1275, %v1853
        %v1870 = vmul.f32 %v1281, %v1854
        %v1871 = vmul.f32 %v1287, %v1855
        %v1872 = vmul.f32 %v1293, %v1856
        %v1873 = vmul.f32 %v1299, %v1857
        %v1874 = vmul.f32 %v1305, %v1858
        %v1875 = vmul.f32 %v1311, %v1859
        %v1876 = vmul.f32 %v1317, %v1860
        %v1877 = vmul.f32 %v1323, %v1861
        %v1878 = vmul.f32 %v1329, %v1862
        %v1880 = vlaneseq
        %v1881 = vshrl.u32 %v1880, 7
        %v1882 = vsub.s32 0, %v1881
        %v1883 = vrot.slane %v1653, %v1882
        %v1884 = vlaneseq
        %v1885 = vshrl.u32 %v1884, 7
        %v1886 = vsub.s32 1, %v1885
        %v1887 = vrot.slane %v1653, %v1886
        %v1890 = vmul.f32 %v1751, %v1883
        %v1891 = vmul.f32 %v1863, %v1887
        %v1892 = vmul.f32 %v1752, %v1883
        %v1893 = vmul.f32 %v1864, %v1887
        %v1894 = vmul.f32 %v1753, %v1883
        %v1895 = vmul.f32 %v1865, %v1887
        %v1896 = vmul.f32 %v1754, %v1883
        %v1897 = vmul.f32 %v1866, %v1887
        %v1898 = vmul.f32 %v1755, %v1883
        %v1899 = vmul.f32 %v1867, %v1887
        %v1900 = vmul.f32 %v1756, %v1883
        %v1901 = vmul.f32 %v1868, %v1887
        %v1902 = vmul.f32 %v1757, %v1883
        %v1903 = vmul.f32 %v1869, %v1887
        %v1904 = vmul.f32 %v1758, %v1883
        %v1905 = vmul.f32 %v1870, %v1887
        %v1906 = vmul.f32 %v1759, %v1883
        %v1907 = vmul.f32 %v1871, %v1887
        %v1908 = vmul.f32 %v1760, %v1883
        %v1909 = vmul.f32 %v1872, %v1887
        %v1910 = vmul.f32 %v1761, %v1883
        %v1911 = vmul.f32 %v1873, %v1887
        %v1912 = vmul.f32 %v1762, %v1883
        %v1913 = vmul.f32 %v1874, %v1887
        %v1914 = vmul.f32 %v1763, %v1883
        %v1915 = vmul.f32 %v1875, %v1887
        %v1916 = vmul.f32 %v1764, %v1883
        %v1917 = vmul.f32 %v1876, %v1887
        %v1918 = vmul.f32 %v1765, %v1883
        %v1919 = vmul.f32 %v1877, %v1887
        %v1920 = vmul.f32 %v1766, %v1883
        %v1921 = vmul.f32 %v1878, %v1887
        %v1922 = vld [vmem:[%s6] sm:$0x3]
        %v1923 = vmul.f32 %v1398, %v1398
        %v1924 = vmul.f32 %v1404, %v1404
        %v1925 = vmul.f32 %v1410, %v1410
        %v1926 = vmul.f32 %v1416, %v1416
        %v1927 = vmul.f32 %v1422, %v1422
        %v1928 = vmul.f32 %v1428, %v1428
        %v1929 = vmul.f32 %v1434, %v1434
        %v1930 = vmul.f32 %v1440, %v1440
        %v1931 = vmul.f32 %v1446, %v1446
        %v1932 = vmul.f32 %v1452, %v1452
        %v1933 = vmul.f32 %v1458, %v1458
        %v1934 = vmul.f32 %v1464, %v1464
        %v1935 = vmul.f32 %v1470, %v1470
        %v1936 = vmul.f32 %v1476, %v1476
        %v1937 = vmul.f32 %v1482, %v1482
        %v1938 = vmul.f32 %v1488, %v1488
        %1939 = vadd.xlane.f32.xlu0 %v1923
        %v1940 = vpop.xlane.xlu0 %1939
        %1941 = vadd.xlane.f32.xlu0 %v1924
        %v1942 = vpop.xlane.xlu0 %1941
        %1943 = vadd.xlane.f32.xlu0 %v1925
        %v1944 = vpop.xlane.xlu0 %1943
        %1945 = vadd.xlane.f32.xlu0 %v1926
        %v1946 = vpop.xlane.xlu0 %1945
        %1947 = vadd.xlane.f32.xlu0 %v1927
        %v1948 = vpop.xlane.xlu0 %1947
        %1949 = vadd.xlane.f32.xlu0 %v1928
        %v1950 = vpop.xlane.xlu0 %1949
        %1951 = vadd.xlane.f32.xlu0 %v1929
        %v1952 = vpop.xlane.xlu0 %1951
        %1953 = vadd.xlane.f32.xlu0 %v1930
        %v1954 = vpop.xlane.xlu0 %1953
        %1955 = vadd.xlane.f32.xlu0 %v1931
        %v1956 = vpop.xlane.xlu0 %1955
        %1957 = vadd.xlane.f32.xlu0 %v1932
        %v1958 = vpop.xlane.xlu0 %1957
        %1959 = vadd.xlane.f32.xlu0 %v1933
        %v1960 = vpop.xlane.xlu0 %1959
        %1961 = vadd.xlane.f32.xlu0 %v1934
        %v1962 = vpop.xlane.xlu0 %1961
        %1963 = vadd.xlane.f32.xlu0 %v1935
        %v1964 = vpop.xlane.xlu0 %1963
        %1965 = vadd.xlane.f32.xlu0 %v1936
        %v1966 = vpop.xlane.xlu0 %1965
        %1967 = vadd.xlane.f32.xlu0 %v1937
        %v1968 = vpop.xlane.xlu0 %1967
        %1969 = vadd.xlane.f32.xlu0 %v1938
        %v1970 = vpop.xlane.xlu0 %1969
        %v1971 = vmul.f32 %v1940, %v1702
        %v1972 = vmul.f32 %v1942, %v1702
        %v1973 = vmul.f32 %v1944, %v1702
        %v1974 = vmul.f32 %v1946, %v1702
        %v1975 = vmul.f32 %v1948, %v1702
        %v1976 = vmul.f32 %v1950, %v1702
        %v1977 = vmul.f32 %v1952, %v1702
        %v1978 = vmul.f32 %v1954, %v1702
        %v1979 = vmul.f32 %v1956, %v1702
        %v1980 = vmul.f32 %v1958, %v1702
        %v1981 = vmul.f32 %v1960, %v1702
        %v1982 = vmul.f32 %v1962, %v1702
        %v1983 = vmul.f32 %v1964, %v1702
        %v1984 = vmul.f32 %v1966, %v1702
        %v1985 = vmul.f32 %v1968, %v1702
        %v1986 = vmul.f32 %v1970, %v1702
        %v1987 = vadd.f32 %v1971, 1.1920929e-07
        %v1988 = vadd.f32 %v1972, 1.1920929e-07
        %v1989 = vadd.f32 %v1973, 1.1920929e-07
        %v1990 = vadd.f32 %v1974, 1.1920929e-07
        %v1991 = vadd.f32 %v1975, 1.1920929e-07
        %v1992 = vadd.f32 %v1976, 1.1920929e-07
        %v1993 = vadd.f32 %v1977, 1.1920929e-07
        %v1994 = vadd.f32 %v1978, 1.1920929e-07
        %v1995 = vadd.f32 %v1979, 1.1920929e-07
        %v1996 = vadd.f32 %v1980, 1.1920929e-07
        %v1997 = vadd.f32 %v1981, 1.1920929e-07
        %v1998 = vadd.f32 %v1982, 1.1920929e-07
        %v1999 = vadd.f32 %v1983, 1.1920929e-07
        %v2000 = vadd.f32 %v1984, 1.1920929e-07
        %v2001 = vadd.f32 %v1985, 1.1920929e-07
        %v2002 = vadd.f32 %v1986, 1.1920929e-07
        %v2003 = vrsqrt.pop %v1987
        %v2004 = vrsqrt.pop %v1988
        %v2005 = vrsqrt.pop %v1989
        %v2006 = vrsqrt.pop %v1990
        %v2007 = vrsqrt.pop %v1991
        %v2008 = vrsqrt.pop %v1992
        %v2009 = vrsqrt.pop %v1993
        %v2010 = vrsqrt.pop %v1994
        %v2011 = vrsqrt.pop %v1995
        %v2012 = vrsqrt.pop %v1996
        %v2013 = vrsqrt.pop %v1997
        %v2014 = vrsqrt.pop %v1998
        %v2015 = vrsqrt.pop %v1999
        %v2016 = vrsqrt.pop %v2000
        %v2017 = vrsqrt.pop %v2001
        %v2018 = vrsqrt.pop %v2002
        %v2019 = vmul.f32 %v1398, %v2003
        %v2020 = vmul.f32 %v1404, %v2004
        %v2021 = vmul.f32 %v1410, %v2005
        %v2022 = vmul.f32 %v1416, %v2006
        %v2023 = vmul.f32 %v1422, %v2007
        %v2024 = vmul.f32 %v1428, %v2008
        %v2025 = vmul.f32 %v1434, %v2009
        %v2026 = vmul.f32 %v1440, %v2010
        %v2027 = vmul.f32 %v1446, %v2011
        %v2028 = vmul.f32 %v1452, %v2012
        %v2029 = vmul.f32 %v1458, %v2013
        %v2030 = vmul.f32 %v1464, %v2014
        %v2031 = vmul.f32 %v1470, %v2015
        %v2032 = vmul.f32 %v1476, %v2016
        %v2033 = vmul.f32 %v1482, %v2017
        %v2034 = vmul.f32 %v1488, %v2018
        %v2035 = vmul.f32 %v1400, %v1400
        %v2036 = vmul.f32 %v1406, %v1406
        %v2037 = vmul.f32 %v1412, %v1412
        %v2038 = vmul.f32 %v1418, %v1418
        %v2039 = vmul.f32 %v1424, %v1424
        %v2040 = vmul.f32 %v1430, %v1430
        %v2041 = vmul.f32 %v1436, %v1436
        %v2042 = vmul.f32 %v1442, %v1442
        %v2043 = vmul.f32 %v1448, %v1448
        %v2044 = vmul.f32 %v1454, %v1454
        %v2045 = vmul.f32 %v1460, %v1460
        %v2046 = vmul.f32 %v1466, %v1466
        %v2047 = vmul.f32 %v1472, %v1472
        %v2048 = vmul.f32 %v1478, %v1478
        %v2049 = vmul.f32 %v1484, %v1484
        %v2050 = vmul.f32 %v1490, %v1490
        %2051 = vadd.xlane.f32.xlu0 %v2035
        %v2052 = vpop.xlane.xlu0 %2051
        %2053 = vadd.xlane.f32.xlu0 %v2036
        %v2054 = vpop.xlane.xlu0 %2053
        %2055 = vadd.xlane.f32.xlu0 %v2037
        %v2056 = vpop.xlane.xlu0 %2055
        %2057 = vadd.xlane.f32.xlu0 %v2038
        %v2058 = vpop.xlane.xlu0 %2057
        %2059 = vadd.xlane.f32.xlu0 %v2039
        %v2060 = vpop.xlane.xlu0 %2059
        %2061 = vadd.xlane.f32.xlu0 %v2040
        %v2062 = vpop.xlane.xlu0 %2061
        %2063 = vadd.xlane.f32.xlu0 %v2041
        %v2064 = vpop.xlane.xlu0 %2063
        %2065 = vadd.xlane.f32.xlu0 %v2042
        %v2066 = vpop.xlane.xlu0 %2065
        %2067 = vadd.xlane.f32.xlu0 %v2043
        %v2068 = vpop.xlane.xlu0 %2067
        %2069 = vadd.xlane.f32.xlu0 %v2044
        %v2070 = vpop.xlane.xlu0 %2069
        %2071 = vadd.xlane.f32.xlu0 %v2045
        %v2072 = vpop.xlane.xlu0 %2071
        %2073 = vadd.xlane.f32.xlu0 %v2046
        %v2074 = vpop.xlane.xlu0 %2073
        %2075 = vadd.xlane.f32.xlu0 %v2047
        %v2076 = vpop.xlane.xlu0 %2075
        %2077 = vadd.xlane.f32.xlu0 %v2048
        %v2078 = vpop.xlane.xlu0 %2077
        %2079 = vadd.xlane.f32.xlu0 %v2049
        %v2080 = vpop.xlane.xlu0 %2079
        %2081 = vadd.xlane.f32.xlu0 %v2050
        %v2082 = vpop.xlane.xlu0 %2081
        %v2083 = vmul.f32 %v2052, %v1702
        %v2084 = vmul.f32 %v2054, %v1702
        %v2085 = vmul.f32 %v2056, %v1702
        %v2086 = vmul.f32 %v2058, %v1702
        %v2087 = vmul.f32 %v2060, %v1702
        %v2088 = vmul.f32 %v2062, %v1702
        %v2089 = vmul.f32 %v2064, %v1702
        %v2090 = vmul.f32 %v2066, %v1702
        %v2091 = vmul.f32 %v2068, %v1702
        %v2092 = vmul.f32 %v2070, %v1702
        %v2093 = vmul.f32 %v2072, %v1702
        %v2094 = vmul.f32 %v2074, %v1702
        %v2095 = vmul.f32 %v2076, %v1702
        %v2096 = vmul.f32 %v2078, %v1702
        %v2097 = vmul.f32 %v2080, %v1702
        %v2098 = vmul.f32 %v2082, %v1702
        %v2099 = vadd.f32 %v2083, 1.1920929e-07
        %v2100 = vadd.f32 %v2084, 1.1920929e-07
        %v2101 = vadd.f32 %v2085, 1.1920929e-07
        %v2102 = vadd.f32 %v2086, 1.1920929e-07
        %v2103 = vadd.f32 %v2087, 1.1920929e-07
        %v2104 = vadd.f32 %v2088, 1.1920929e-07
        %v2105 = vadd.f32 %v2089, 1.1920929e-07
        %v2106 = vadd.f32 %v2090, 1.1920929e-07
        %v2107 = vadd.f32 %v2091, 1.1920929e-07
        %v2108 = vadd.f32 %v2092, 1.1920929e-07
        %v2109 = vadd.f32 %v2093, 1.1920929e-07
        %v2110 = vadd.f32 %v2094, 1.1920929e-07
        %v2111 = vadd.f32 %v2095, 1.1920929e-07
        %v2112 = vadd.f32 %v2096, 1.1920929e-07
        %v2113 = vadd.f32 %v2097, 1.1920929e-07
        %v2114 = vadd.f32 %v2098, 1.1920929e-07
        %v2115 = vrsqrt.pop %v2099
        %v2116 = vrsqrt.pop %v2100
        %v2117 = vrsqrt.pop %v2101
        %v2118 = vrsqrt.pop %v2102
        %v2119 = vrsqrt.pop %v2103
        %v2120 = vrsqrt.pop %v2104
        %v2121 = vrsqrt.pop %v2105
        %v2122 = vrsqrt.pop %v2106
        %v2123 = vrsqrt.pop %v2107
        %v2124 = vrsqrt.pop %v2108
        %v2125 = vrsqrt.pop %v2109
        %v2126 = vrsqrt.pop %v2110
        %v2127 = vrsqrt.pop %v2111
        %v2128 = vrsqrt.pop %v2112
        %v2129 = vrsqrt.pop %v2113
        %v2130 = vrsqrt.pop %v2114
        %v2131 = vmul.f32 %v1400, %v2115
        %v2132 = vmul.f32 %v1406, %v2116
        %v2133 = vmul.f32 %v1412, %v2117
        %v2134 = vmul.f32 %v1418, %v2118
        %v2135 = vmul.f32 %v1424, %v2119
        %v2136 = vmul.f32 %v1430, %v2120
        %v2137 = vmul.f32 %v1436, %v2121
        %v2138 = vmul.f32 %v1442, %v2122
        %v2139 = vmul.f32 %v1448, %v2123
        %v2140 = vmul.f32 %v1454, %v2124
        %v2141 = vmul.f32 %v1460, %v2125
        %v2142 = vmul.f32 %v1466, %v2126
        %v2143 = vmul.f32 %v1472, %v2127
        %v2144 = vmul.f32 %v1478, %v2128
        %v2145 = vmul.f32 %v1484, %v2129
        %v2146 = vmul.f32 %v1490, %v2130
        %v2148 = vlaneseq
        %v2149 = vshrl.u32 %v2148, 7
        %v2150 = vsub.s32 0, %v2149
        %v2151 = vrot.slane %v1922, %v2150
        %v2152 = vlaneseq
        %v2153 = vshrl.u32 %v2152, 7
        %v2154 = vsub.s32 1, %v2153
        %v2155 = vrot.slane %v1922, %v2154
        %v2158 = vmul.f32 %v2019, %v2151
        %v2159 = vmul.f32 %v2131, %v2155
        %v2160 = vmul.f32 %v2020, %v2151
        %v2161 = vmul.f32 %v2132, %v2155
        %v2162 = vmul.f32 %v2021, %v2151
        %v2163 = vmul.f32 %v2133, %v2155
        %v2164 = vmul.f32 %v2022, %v2151
        %v2165 = vmul.f32 %v2134, %v2155
        %v2166 = vmul.f32 %v2023, %v2151
        %v2167 = vmul.f32 %v2135, %v2155
        %v2168 = vmul.f32 %v2024, %v2151
        %v2169 = vmul.f32 %v2136, %v2155
        %v2170 = vmul.f32 %v2025, %v2151
        %v2171 = vmul.f32 %v2137, %v2155
        %v2172 = vmul.f32 %v2026, %v2151
        %v2173 = vmul.f32 %v2138, %v2155
        %v2174 = vmul.f32 %v2027, %v2151
        %v2175 = vmul.f32 %v2139, %v2155
        %v2176 = vmul.f32 %v2028, %v2151
        %v2177 = vmul.f32 %v2140, %v2155
        %v2178 = vmul.f32 %v2029, %v2151
        %v2179 = vmul.f32 %v2141, %v2155
        %v2180 = vmul.f32 %v2030, %v2151
        %v2181 = vmul.f32 %v2142, %v2155
        %v2182 = vmul.f32 %v2031, %v2151
        %v2183 = vmul.f32 %v2143, %v2155
        %v2184 = vmul.f32 %v2032, %v2151
        %v2185 = vmul.f32 %v2144, %v2155
        %v2186 = vmul.f32 %v2033, %v2151
        %v2187 = vmul.f32 %v2145, %v2155
        %v2188 = vmul.f32 %v2034, %v2151
        %v2189 = vmul.f32 %v2146, %v2155
        %v2190 = vlaneseq
        %v2191 = vand.u32 %v2190, 127
        %v2192 = vadd.s32 %v2191, 128
        %v2193 = vand.u32 %v2191, 1
        %v2194 = vand.u32 %v2192, 1
        %vm2195 = vcmp.eq.s32.totalorder %v2193, 0
        %vm2196 = vcmp.eq.s32.totalorder %v2194, 0
        %2197 = vrot.lane.b32.xlu0 %v2191, 1
        %v2198 = vpop.permute.xlu0 %2197
        %2199 = vrot.lane.b32.xlu0 %v2192, 1
        %v2200 = vpop.permute.xlu0 %2199
        %vm2201 = vcmp.lt.s32.totalorder %v2191, 1
        %v2202 = vsel %vm2201, %v2198, %v2200
        %v2203 = vsel %vm2201, %v2200, %v2198
        %v2204 = vsub.s32 %v2203, %v2191
        %v2205 = vsub.s32 %v2202, %v2192
        %vm2206 = vcmp.eq.s32.totalorder %v2204, 1
        %vm2207 = vcmp.eq.s32.totalorder %v2205, 1
        %vm2208 = vcmp.eq.s32.totalorder %v2204, 4294967041
        %vm2209 = vcmp.eq.s32.totalorder %v2205, 4294967041
        %vm2210 = vmor %vm2206, %vm2208
        %vm2211 = vmor %vm2207, %vm2209
        %vm2212 = vmxor %vm2195, %vm2210
        %vm2213 = vmxor %vm2196, %vm2211
        %vm2214 = vmxor %vm2212, 1
        %vm2215 = vmxor %vm2213, 1
        %v2216 = vld [vmem:[#allocation8] sm:$0xff]
        %v2217 = vld [vmem:[#allocation8 + $0x8] sm:$0xff]
        %v2218 = vld [vmem:[#allocation8 + $0x10] sm:$0xff]
        %v2219 = vld [vmem:[#allocation8 + $0x18] sm:$0xff]
        %v2220 = vld [vmem:[#allocation8 + $0x20] sm:$0xff]
        %v2221 = vld [vmem:[#allocation8 + $0x28] sm:$0xff]
        %v2222 = vld [vmem:[#allocation8 + $0x30] sm:$0xff]
        %v2223 = vld [vmem:[#allocation8 + $0x38] sm:$0xff]
        %v2224 = vld [vmem:[#allocation8 + $0x40] sm:$0xff]
        %v2225 = vld [vmem:[#allocation8 + $0x48] sm:$0xff]
        %v2226 = vld [vmem:[#allocation8 + $0x50] sm:$0xff]
        %v2227 = vld [vmem:[#allocation8 + $0x58] sm:$0xff]
        %v2228 = vld [vmem:[#allocation8 + $0x60] sm:$0xff]
        %v2229 = vld [vmem:[#allocation8 + $0x68] sm:$0xff]
        %v2230 = vld [vmem:[#allocation8 + $0x70] sm:$0xff]
        %v2231 = vld [vmem:[#allocation8 + $0x78] sm:$0xff]
        %v2232 = vld [vmem:[#allocation8 + $0x80] sm:$0xff]
        %v2233 = vld [vmem:[#allocation8 + $0x88] sm:$0xff]
        %v2234 = vld [vmem:[#allocation8 + $0x90] sm:$0xff]
        %v2235 = vld [vmem:[#allocation8 + $0x98] sm:$0xff]
        %v2236 = vld [vmem:[#allocation8 + $0xa0] sm:$0xff]
        %v2237 = vld [vmem:[#allocation8 + $0xa8] sm:$0xff]
        %v2238 = vld [vmem:[#allocation8 + $0xb0] sm:$0xff]
        %v2239 = vld [vmem:[#allocation8 + $0xb8] sm:$0xff]
        %v2240 = vld [vmem:[#allocation8 + $0xc0] sm:$0xff]
        %v2241 = vld [vmem:[#allocation8 + $0xc8] sm:$0xff]
        %v2242 = vld [vmem:[#allocation8 + $0xd0] sm:$0xff]
        %v2243 = vld [vmem:[#allocation8 + $0xd8] sm:$0xff]
        %v2244 = vld [vmem:[#allocation8 + $0xe0] sm:$0xff]
        %v2245 = vld [vmem:[#allocation8 + $0xe8] sm:$0xff]
        %v2246 = vld [vmem:[#allocation8 + $0xf0] sm:$0xff]
        %v2247 = vld [vmem:[#allocation8 + $0xf8] sm:$0xff]
        %v2248 = vld [vmem:[#allocation10] sm:$0xff]
        %v2249 = vld [vmem:[#allocation10 + $0x8] sm:$0xff]
        %v2250 = vld [vmem:[#allocation10 + $0x10] sm:$0xff]
        %v2251 = vld [vmem:[#allocation10 + $0x18] sm:$0xff]
        %v2252 = vld [vmem:[#allocation10 + $0x20] sm:$0xff]
        %v2253 = vld [vmem:[#allocation10 + $0x28] sm:$0xff]
        %v2254 = vld [vmem:[#allocation10 + $0x30] sm:$0xff]
        %v2255 = vld [vmem:[#allocation10 + $0x38] sm:$0xff]
        %v2256 = vld [vmem:[#allocation10 + $0x40] sm:$0xff]
        %v2257 = vld [vmem:[#allocation10 + $0x48] sm:$0xff]
        %v2258 = vld [vmem:[#allocation10 + $0x50] sm:$0xff]
        %v2259 = vld [vmem:[#allocation10 + $0x58] sm:$0xff]
        %v2260 = vld [vmem:[#allocation10 + $0x60] sm:$0xff]
        %v2261 = vld [vmem:[#allocation10 + $0x68] sm:$0xff]
        %v2262 = vld [vmem:[#allocation10 + $0x70] sm:$0xff]
        %v2263 = vld [vmem:[#allocation10 + $0x78] sm:$0xff]
        %v2264 = vld [vmem:[#allocation10 + $0x80] sm:$0xff]
        %v2265 = vld [vmem:[#allocation10 + $0x88] sm:$0xff]
        %v2266 = vld [vmem:[#allocation10 + $0x90] sm:$0xff]
        %v2267 = vld [vmem:[#allocation10 + $0x98] sm:$0xff]
        %v2268 = vld [vmem:[#allocation10 + $0xa0] sm:$0xff]
        %v2269 = vld [vmem:[#allocation10 + $0xa8] sm:$0xff]
        %v2270 = vld [vmem:[#allocation10 + $0xb0] sm:$0xff]
        %v2271 = vld [vmem:[#allocation10 + $0xb8] sm:$0xff]
        %v2272 = vld [vmem:[#allocation10 + $0xc0] sm:$0xff]
        %v2273 = vld [vmem:[#allocation10 + $0xc8] sm:$0xff]
        %v2274 = vld [vmem:[#allocation10 + $0xd0] sm:$0xff]
        %v2275 = vld [vmem:[#allocation10 + $0xd8] sm:$0xff]
        %v2276 = vld [vmem:[#allocation10 + $0xe0] sm:$0xff]
        %v2277 = vld [vmem:[#allocation10 + $0xe8] sm:$0xff]
        %v2278 = vld [vmem:[#allocation10 + $0xf0] sm:$0xff]
        %v2279 = vld [vmem:[#allocation10 + $0xf8] sm:$0xff]
        %2280 = vrot.lane.b32.xlu0 %v1890, 1
        %v2281 = vpop.permute.xlu0 %2280
        %2282 = vrot.lane.b32.xlu0 %v1892, 1
        %v2283 = vpop.permute.xlu0 %2282
        %2284 = vrot.lane.b32.xlu0 %v1894, 1
        %v2285 = vpop.permute.xlu0 %2284
        %2286 = vrot.lane.b32.xlu0 %v1896, 1
        %v2287 = vpop.permute.xlu0 %2286
        %2288 = vrot.lane.b32.xlu0 %v1898, 1
        %v2289 = vpop.permute.xlu0 %2288
        %2290 = vrot.lane.b32.xlu0 %v1900, 1
        %v2291 = vpop.permute.xlu0 %2290
        %2292 = vrot.lane.b32.xlu0 %v1902, 1
        %v2293 = vpop.permute.xlu0 %2292
        %2294 = vrot.lane.b32.xlu0 %v1904, 1
        %v2295 = vpop.permute.xlu0 %2294
        %2296 = vrot.lane.b32.xlu0 %v1906, 1
        %v2297 = vpop.permute.xlu0 %2296
        %2298 = vrot.lane.b32.xlu0 %v1908, 1
        %v2299 = vpop.permute.xlu0 %2298
        %2300 = vrot.lane.b32.xlu0 %v1910, 1
        %v2301 = vpop.permute.xlu0 %2300
        %2302 = vrot.lane.b32.xlu0 %v1912, 1
        %v2303 = vpop.permute.xlu0 %2302
        %2304 = vrot.lane.b32.xlu0 %v1914, 1
        %v2305 = vpop.permute.xlu0 %2304
        %2306 = vrot.lane.b32.xlu0 %v1916, 1
        %v2307 = vpop.permute.xlu0 %2306
        %2308 = vrot.lane.b32.xlu0 %v1918, 1
        %v2309 = vpop.permute.xlu0 %2308
        %2310 = vrot.lane.b32.xlu0 %v1920, 1
        %v2311 = vpop.permute.xlu0 %2310
        %2312 = vrot.lane.b32.xlu0 %v1891, 1
        %v2313 = vpop.permute.xlu0 %2312
        %2314 = vrot.lane.b32.xlu0 %v1893, 1
        %v2315 = vpop.permute.xlu0 %2314
        %2316 = vrot.lane.b32.xlu0 %v1895, 1
        %v2317 = vpop.permute.xlu0 %2316
        %2318 = vrot.lane.b32.xlu0 %v1897, 1
        %v2319 = vpop.permute.xlu0 %2318
        %2320 = vrot.lane.b32.xlu0 %v1899, 1
        %v2321 = vpop.permute.xlu0 %2320
        %2322 = vrot.lane.b32.xlu0 %v1901, 1
        %v2323 = vpop.permute.xlu0 %2322
        %2324 = vrot.lane.b32.xlu0 %v1903, 1
        %v2325 = vpop.permute.xlu0 %2324
        %2326 = vrot.lane.b32.xlu0 %v1905, 1
        %v2327 = vpop.permute.xlu0 %2326
        %2328 = vrot.lane.b32.xlu0 %v1907, 1
        %v2329 = vpop.permute.xlu0 %2328
        %2330 = vrot.lane.b32.xlu0 %v1909, 1
        %v2331 = vpop.permute.xlu0 %2330
        %2332 = vrot.lane.b32.xlu0 %v1911, 1
        %v2333 = vpop.permute.xlu0 %2332
        %2334 = vrot.lane.b32.xlu0 %v1913, 1
        %v2335 = vpop.permute.xlu0 %2334
        %2336 = vrot.lane.b32.xlu0 %v1915, 1
        %v2337 = vpop.permute.xlu0 %2336
        %2338 = vrot.lane.b32.xlu0 %v1917, 1
        %v2339 = vpop.permute.xlu0 %2338
        %2340 = vrot.lane.b32.xlu0 %v1919, 1
        %v2341 = vpop.permute.xlu0 %2340
        %2342 = vrot.lane.b32.xlu0 %v1921, 1
        %v2343 = vpop.permute.xlu0 %2342
        %v2344 = vsel %vm2201, %v2281, %v2313
        %v2345 = vsel %vm2201, %v2283, %v2315
        %v2346 = vsel %vm2201, %v2285, %v2317
        %v2347 = vsel %vm2201, %v2287, %v2319
        %v2348 = vsel %vm2201, %v2289, %v2321
        %v2349 = vsel %vm2201, %v2291, %v2323
        %v2350 = vsel %vm2201, %v2293, %v2325
        %v2351 = vsel %vm2201, %v2295, %v2327
        %v2352 = vsel %vm2201, %v2297, %v2329
        %v2353 = vsel %vm2201, %v2299, %v2331
        %v2354 = vsel %vm2201, %v2301, %v2333
        %v2355 = vsel %vm2201, %v2303, %v2335
        %v2356 = vsel %vm2201, %v2305, %v2337
        %v2357 = vsel %vm2201, %v2307, %v2339
        %v2358 = vsel %vm2201, %v2309, %v2341
        %v2359 = vsel %vm2201, %v2311, %v2343
        %v2360 = vsel %vm2201, %v2313, %v2281
        %v2361 = vsel %vm2201, %v2315, %v2283
        %v2362 = vsel %vm2201, %v2317, %v2285
        %v2363 = vsel %vm2201, %v2319, %v2287
        %v2364 = vsel %vm2201, %v2321, %v2289
        %v2365 = vsel %vm2201, %v2323, %v2291
        %v2366 = vsel %vm2201, %v2325, %v2293
        %v2367 = vsel %vm2201, %v2327, %v2295
        %v2368 = vsel %vm2201, %v2329, %v2297
        %v2369 = vsel %vm2201, %v2331, %v2299
        %v2370 = vsel %vm2201, %v2333, %v2301
        %v2371 = vsel %vm2201, %v2335, %v2303
        %v2372 = vsel %vm2201, %v2337, %v2305
        %v2373 = vsel %vm2201, %v2339, %v2307
        %v2374 = vsel %vm2201, %v2341, %v2309
        %v2375 = vsel %vm2201, %v2343, %v2311
        %2376 = vrot.lane.b32.xlu0 %v1890, 127
        %v2377 = vpop.permute.xlu0 %2376
        %2378 = vrot.lane.b32.xlu0 %v1892, 127
        %v2379 = vpop.permute.xlu0 %2378
        %2380 = vrot.lane.b32.xlu0 %v1894, 127
        %v2381 = vpop.permute.xlu0 %2380
        %2382 = vrot.lane.b32.xlu0 %v1896, 127
        %v2383 = vpop.permute.xlu0 %2382
        %2384 = vrot.lane.b32.xlu0 %v1898, 127
        %v2385 = vpop.permute.xlu0 %2384
        %2386 = vrot.lane.b32.xlu0 %v1900, 127
        %v2387 = vpop.permute.xlu0 %2386
        %2388 = vrot.lane.b32.xlu0 %v1902, 127
        %v2389 = vpop.permute.xlu0 %2388
        %2390 = vrot.lane.b32.xlu0 %v1904, 127
        %v2391 = vpop.permute.xlu0 %2390
        %2392 = vrot.lane.b32.xlu0 %v1906, 127
        %v2393 = vpop.permute.xlu0 %2392
        %2394 = vrot.lane.b32.xlu0 %v1908, 127
        %v2395 = vpop.permute.xlu0 %2394
        %2396 = vrot.lane.b32.xlu0 %v1910, 127
        %v2397 = vpop.permute.xlu0 %2396
        %2398 = vrot.lane.b32.xlu0 %v1912, 127
        %v2399 = vpop.permute.xlu0 %2398
        %2400 = vrot.lane.b32.xlu0 %v1914, 127
        %v2401 = vpop.permute.xlu0 %2400
        %2402 = vrot.lane.b32.xlu0 %v1916, 127
        %v2403 = vpop.permute.xlu0 %2402
        %2404 = vrot.lane.b32.xlu0 %v1918, 127
        %v2405 = vpop.permute.xlu0 %2404
        %2406 = vrot.lane.b32.xlu0 %v1920, 127
        %v2407 = vpop.permute.xlu0 %2406
        %2408 = vrot.lane.b32.xlu0 %v1891, 127
        %v2409 = vpop.permute.xlu0 %2408
        %2410 = vrot.lane.b32.xlu0 %v1893, 127
        %v2411 = vpop.permute.xlu0 %2410
        %2412 = vrot.lane.b32.xlu0 %v1895, 127
        %v2413 = vpop.permute.xlu0 %2412
        %2414 = vrot.lane.b32.xlu0 %v1897, 127
        %v2415 = vpop.permute.xlu0 %2414
        %2416 = vrot.lane.b32.xlu0 %v1899, 127
        %v2417 = vpop.permute.xlu0 %2416
        %2418 = vrot.lane.b32.xlu0 %v1901, 127
        %v2419 = vpop.permute.xlu0 %2418
        %2420 = vrot.lane.b32.xlu0 %v1903, 127
        %v2421 = vpop.permute.xlu0 %2420
        %2422 = vrot.lane.b32.xlu0 %v1905, 127
        %v2423 = vpop.permute.xlu0 %2422
        %2424 = vrot.lane.b32.xlu0 %v1907, 127
        %v2425 = vpop.permute.xlu0 %2424
        %2426 = vrot.lane.b32.xlu0 %v1909, 127
        %v2427 = vpop.permute.xlu0 %2426
        %2428 = vrot.lane.b32.xlu0 %v1911, 127
        %v2429 = vpop.permute.xlu0 %2428
        %2430 = vrot.lane.b32.xlu0 %v1913, 127
        %v2431 = vpop.permute.xlu0 %2430
        %2432 = vrot.lane.b32.xlu0 %v1915, 127
        %v2433 = vpop.permute.xlu0 %2432
        %2434 = vrot.lane.b32.xlu0 %v1917, 127
        %v2435 = vpop.permute.xlu0 %2434
        %2436 = vrot.lane.b32.xlu0 %v1919, 127
        %v2437 = vpop.permute.xlu0 %2436
        %2438 = vrot.lane.b32.xlu0 %v1921, 127
        %v2439 = vpop.permute.xlu0 %2438
        %vm2440 = vcmp.lt.s32.totalorder %v2191, 127
        %v2441 = vsel %vm2440, %v2377, %v2409
        %v2442 = vsel %vm2440, %v2379, %v2411
        %v2443 = vsel %vm2440, %v2381, %v2413
        %v2444 = vsel %vm2440, %v2383, %v2415
        %v2445 = vsel %vm2440, %v2385, %v2417
        %v2446 = vsel %vm2440, %v2387, %v2419
        %v2447 = vsel %vm2440, %v2389, %v2421
        %v2448 = vsel %vm2440, %v2391, %v2423
        %v2449 = vsel %vm2440, %v2393, %v2425
        %v2450 = vsel %vm2440, %v2395, %v2427
        %v2451 = vsel %vm2440, %v2397, %v2429
        %v2452 = vsel %vm2440, %v2399, %v2431
        %v2453 = vsel %vm2440, %v2401, %v2433
        %v2454 = vsel %vm2440, %v2403, %v2435
        %v2455 = vsel %vm2440, %v2405, %v2437
        %v2456 = vsel %vm2440, %v2407, %v2439
        %v2457 = vsel %vm2440, %v2409, %v2377
        %v2458 = vsel %vm2440, %v2411, %v2379
        %v2459 = vsel %vm2440, %v2413, %v2381
        %v2460 = vsel %vm2440, %v2415, %v2383
        %v2461 = vsel %vm2440, %v2417, %v2385
        %v2462 = vsel %vm2440, %v2419, %v2387
        %v2463 = vsel %vm2440, %v2421, %v2389
        %v2464 = vsel %vm2440, %v2423, %v2391
        %v2465 = vsel %vm2440, %v2425, %v2393
        %v2466 = vsel %vm2440, %v2427, %v2395
        %v2467 = vsel %vm2440, %v2429, %v2397
        %v2468 = vsel %vm2440, %v2431, %v2399
        %v2469 = vsel %vm2440, %v2433, %v2401
        %v2470 = vsel %vm2440, %v2435, %v2403
        %v2471 = vsel %vm2440, %v2437, %v2405
        %v2472 = vsel %vm2440, %v2439, %v2407
        %v2473 = vsel %vm2214, %v2360, %v2441
        %v2474 = vsel %vm2215, %v2344, %v2457
        %v2475 = vsel %vm2214, %v2361, %v2442
        %v2476 = vsel %vm2215, %v2345, %v2458
        %v2477 = vsel %vm2214, %v2362, %v2443
        %v2478 = vsel %vm2215, %v2346, %v2459
        %v2479 = vsel %vm2214, %v2363, %v2444
        %v2480 = vsel %vm2215, %v2347, %v2460
        %v2481 = vsel %vm2214, %v2364, %v2445
        %v2482 = vsel %vm2215, %v2348, %v2461
        %v2483 = vsel %vm2214, %v2365, %v2446
        %v2484 = vsel %vm2215, %v2349, %v2462
        %v2485 = vsel %vm2214, %v2366, %v2447
        %v2486 = vsel %vm2215, %v2350, %v2463
        %v2487 = vsel %vm2214, %v2367, %v2448
        %v2488 = vsel %vm2215, %v2351, %v2464
        %v2489 = vsel %vm2214, %v2368, %v2449
        %v2490 = vsel %vm2215, %v2352, %v2465
        %v2491 = vsel %vm2214, %v2369, %v2450
        %v2492 = vsel %vm2215, %v2353, %v2466
        %v2493 = vsel %vm2214, %v2370, %v2451
        %v2494 = vsel %vm2215, %v2354, %v2467
        %v2495 = vsel %vm2214, %v2371, %v2452
        %v2496 = vsel %vm2215, %v2355, %v2468
        %v2497 = vsel %vm2214, %v2372, %v2453
        %v2498 = vsel %vm2215, %v2356, %v2469
        %v2499 = vsel %vm2214, %v2373, %v2454
        %v2500 = vsel %vm2215, %v2357, %v2470
        %v2501 = vsel %vm2214, %v2374, %v2455
        %v2502 = vsel %vm2215, %v2358, %v2471
        %v2503 = vsel %vm2214, %v2375, %v2456
        %v2504 = vsel %vm2215, %v2359, %v2472
        %v2505 = vmul.f32 %v2216, %v1890
        %v2506 = vmul.f32 %v2217, %v1891
        %v2507 = vmul.f32 %v2218, %v1892
        %v2508 = vmul.f32 %v2219, %v1893
        %v2509 = vmul.f32 %v2220, %v1894
        %v2510 = vmul.f32 %v2221, %v1895
        %v2511 = vmul.f32 %v2222, %v1896
        %v2512 = vmul.f32 %v2223, %v1897
        %v2513 = vmul.f32 %v2224, %v1898
        %v2514 = vmul.f32 %v2225, %v1899
        %v2515 = vmul.f32 %v2226, %v1900
        %v2516 = vmul.f32 %v2227, %v1901
        %v2517 = vmul.f32 %v2228, %v1902
        %v2518 = vmul.f32 %v2229, %v1903
        %v2519 = vmul.f32 %v2230, %v1904
        %v2520 = vmul.f32 %v2231, %v1905
        %v2521 = vmul.f32 %v2232, %v1906
        %v2522 = vmul.f32 %v2233, %v1907
        %v2523 = vmul.f32 %v2234, %v1908
        %v2524 = vmul.f32 %v2235, %v1909
        %v2525 = vmul.f32 %v2236, %v1910
        %v2526 = vmul.f32 %v2237, %v1911
        %v2527 = vmul.f32 %v2238, %v1912
        %v2528 = vmul.f32 %v2239, %v1913
        %v2529 = vmul.f32 %v2240, %v1914
        %v2530 = vmul.f32 %v2241, %v1915
        %v2531 = vmul.f32 %v2242, %v1916
        %v2532 = vmul.f32 %v2243, %v1917
        %v2533 = vmul.f32 %v2244, %v1918
        %v2534 = vmul.f32 %v2245, %v1919
        %v2535 = vmul.f32 %v2246, %v1920
        %v2536 = vmul.f32 %v2247, %v1921
        %v2537 = vmul.f32 %v2248, %v2473
        %v2538 = vmul.f32 %v2249, %v2474
        %v2539 = vmul.f32 %v2250, %v2475
        %v2540 = vmul.f32 %v2251, %v2476
        %v2541 = vmul.f32 %v2252, %v2477
        %v2542 = vmul.f32 %v2253, %v2478
        %v2543 = vmul.f32 %v2254, %v2479
        %v2544 = vmul.f32 %v2255, %v2480
        %v2545 = vmul.f32 %v2256, %v2481
        %v2546 = vmul.f32 %v2257, %v2482
        %v2547 = vmul.f32 %v2258, %v2483
        %v2548 = vmul.f32 %v2259, %v2484
        %v2549 = vmul.f32 %v2260, %v2485
        %v2550 = vmul.f32 %v2261, %v2486
        %v2551 = vmul.f32 %v2262, %v2487
        %v2552 = vmul.f32 %v2263, %v2488
        %v2553 = vmul.f32 %v2264, %v2489
        %v2554 = vmul.f32 %v2265, %v2490
        %v2555 = vmul.f32 %v2266, %v2491
        %v2556 = vmul.f32 %v2267, %v2492
        %v2557 = vmul.f32 %v2268, %v2493
        %v2558 = vmul.f32 %v2269, %v2494
        %v2559 = vmul.f32 %v2270, %v2495
        %v2560 = vmul.f32 %v2271, %v2496
        %v2561 = vmul.f32 %v2272, %v2497
        %v2562 = vmul.f32 %v2273, %v2498
        %v2563 = vmul.f32 %v2274, %v2499
        %v2564 = vmul.f32 %v2275, %v2500
        %v2565 = vmul.f32 %v2276, %v2501
        %v2566 = vmul.f32 %v2277, %v2502
        %v2567 = vmul.f32 %v2278, %v2503
        %v2568 = vmul.f32 %v2279, %v2504
        %v2569 = vadd.f32 %v2505, %v2537
        %v2570 = vadd.f32 %v2506, %v2538
        %v2571 = vadd.f32 %v2507, %v2539
        %v2572 = vadd.f32 %v2508, %v2540
        %v2573 = vadd.f32 %v2509, %v2541
        %v2574 = vadd.f32 %v2510, %v2542
        %v2575 = vadd.f32 %v2511, %v2543
        %v2576 = vadd.f32 %v2512, %v2544
        %v2577 = vadd.f32 %v2513, %v2545
        %v2578 = vadd.f32 %v2514, %v2546
        %v2579 = vadd.f32 %v2515, %v2547
        %v2580 = vadd.f32 %v2516, %v2548
        %v2581 = vadd.f32 %v2517, %v2549
        %v2582 = vadd.f32 %v2518, %v2550
        %v2583 = vadd.f32 %v2519, %v2551
        %v2584 = vadd.f32 %v2520, %v2552
        %v2585 = vadd.f32 %v2521, %v2553
        %v2586 = vadd.f32 %v2522, %v2554
        %v2587 = vadd.f32 %v2523, %v2555
        %v2588 = vadd.f32 %v2524, %v2556
        %v2589 = vadd.f32 %v2525, %v2557
        %v2590 = vadd.f32 %v2526, %v2558
        %v2591 = vadd.f32 %v2527, %v2559
        %v2592 = vadd.f32 %v2528, %v2560
        %v2593 = vadd.f32 %v2529, %v2561
        %v2594 = vadd.f32 %v2530, %v2562
        %v2595 = vadd.f32 %v2531, %v2563
        %v2596 = vadd.f32 %v2532, %v2564
        %v2597 = vadd.f32 %v2533, %v2565
        %v2598 = vadd.f32 %v2534, %v2566
        %v2599 = vadd.f32 %v2535, %v2567
        %v2600 = vadd.f32 %v2536, %v2568
        %2601 = vst [vmem:[%s543] sm:$0xff] %v2569
        %2602 = vst [vmem:[%s543 + $0x8] sm:$0xff] %v2570
        %2603 = vst [vmem:[%s543 + $0x10] sm:$0xff] %v2571
        %2604 = vst [vmem:[%s543 + $0x18] sm:$0xff] %v2572
        %2605 = vst [vmem:[%s543 + $0x20] sm:$0xff] %v2573
        %2606 = vst [vmem:[%s543 + $0x28] sm:$0xff] %v2574
        %2607 = vst [vmem:[%s543 + $0x30] sm:$0xff] %v2575
        %2608 = vst [vmem:[%s543 + $0x38] sm:$0xff] %v2576
        %2609 = vst [vmem:[%s543 + $0x40] sm:$0xff] %v2577
        %2610 = vst [vmem:[%s543 + $0x48] sm:$0xff] %v2578
        %2611 = vst [vmem:[%s543 + $0x50] sm:$0xff] %v2579
        %2612 = vst [vmem:[%s543 + $0x58] sm:$0xff] %v2580
        %2613 = vst [vmem:[%s543 + $0x60] sm:$0xff] %v2581
        %2614 = vst [vmem:[%s543 + $0x68] sm:$0xff] %v2582
        %2615 = vst [vmem:[%s543 + $0x70] sm:$0xff] %v2583
        %2616 = vst [vmem:[%s543 + $0x78] sm:$0xff] %v2584
        %2617 = vst [vmem:[%s543 + $0x80] sm:$0xff] %v2585
        %2618 = vst [vmem:[%s543 + $0x88] sm:$0xff] %v2586
        %2619 = vst [vmem:[%s543 + $0x90] sm:$0xff] %v2587
        %2620 = vst [vmem:[%s543 + $0x98] sm:$0xff] %v2588
        %2621 = vst [vmem:[%s543 + $0xa0] sm:$0xff] %v2589
        %2622 = vst [vmem:[%s543 + $0xa8] sm:$0xff] %v2590
        %2623 = vst [vmem:[%s543 + $0xb0] sm:$0xff] %v2591
        %2624 = vst [vmem:[%s543 + $0xb8] sm:$0xff] %v2592
        %2625 = vst [vmem:[%s543 + $0xc0] sm:$0xff] %v2593
        %2626 = vst [vmem:[%s543 + $0xc8] sm:$0xff] %v2594
        %2627 = vst [vmem:[%s543 + $0xd0] sm:$0xff] %v2595
        %2628 = vst [vmem:[%s543 + $0xd8] sm:$0xff] %v2596
        %2629 = vst [vmem:[%s543 + $0xe0] sm:$0xff] %v2597
        %2630 = vst [vmem:[%s543 + $0xe8] sm:$0xff] %v2598
        %2631 = vst [vmem:[%s543 + $0xf0] sm:$0xff] %v2599
        %2632 = vst [vmem:[%s543 + $0xf8] sm:$0xff] %v2600
        %2633 = vrot.lane.b32.xlu0 %v2158, 1
        %v2634 = vpop.permute.xlu0 %2633
        %2635 = vrot.lane.b32.xlu0 %v2160, 1
        %v2636 = vpop.permute.xlu0 %2635
        %2637 = vrot.lane.b32.xlu0 %v2162, 1
        %v2638 = vpop.permute.xlu0 %2637
        %2639 = vrot.lane.b32.xlu0 %v2164, 1
        %v2640 = vpop.permute.xlu0 %2639
        %2641 = vrot.lane.b32.xlu0 %v2166, 1
        %v2642 = vpop.permute.xlu0 %2641
        %2643 = vrot.lane.b32.xlu0 %v2168, 1
        %v2644 = vpop.permute.xlu0 %2643
        %2645 = vrot.lane.b32.xlu0 %v2170, 1
        %v2646 = vpop.permute.xlu0 %2645
        %2647 = vrot.lane.b32.xlu0 %v2172, 1
        %v2648 = vpop.permute.xlu0 %2647
        %2649 = vrot.lane.b32.xlu0 %v2174, 1
        %v2650 = vpop.permute.xlu0 %2649
        %2651 = vrot.lane.b32.xlu0 %v2176, 1
        %v2652 = vpop.permute.xlu0 %2651
        %2653 = vrot.lane.b32.xlu0 %v2178, 1
        %v2654 = vpop.permute.xlu0 %2653
        %2655 = vrot.lane.b32.xlu0 %v2180, 1
        %v2656 = vpop.permute.xlu0 %2655
        %2657 = vrot.lane.b32.xlu0 %v2182, 1
        %v2658 = vpop.permute.xlu0 %2657
        %2659 = vrot.lane.b32.xlu0 %v2184, 1
        %v2660 = vpop.permute.xlu0 %2659
        %2661 = vrot.lane.b32.xlu0 %v2186, 1
        %v2662 = vpop.permute.xlu0 %2661
        %2663 = vrot.lane.b32.xlu0 %v2188, 1
        %v2664 = vpop.permute.xlu0 %2663
        %2665 = vrot.lane.b32.xlu0 %v2159, 1
        %v2666 = vpop.permute.xlu0 %2665
        %2667 = vrot.lane.b32.xlu0 %v2161, 1
        %v2668 = vpop.permute.xlu0 %2667
        %2669 = vrot.lane.b32.xlu0 %v2163, 1
        %v2670 = vpop.permute.xlu0 %2669
        %2671 = vrot.lane.b32.xlu0 %v2165, 1
        %v2672 = vpop.permute.xlu0 %2671
        %2673 = vrot.lane.b32.xlu0 %v2167, 1
        %v2674 = vpop.permute.xlu0 %2673
        %2675 = vrot.lane.b32.xlu0 %v2169, 1
        %v2676 = vpop.permute.xlu0 %2675
        %2677 = vrot.lane.b32.xlu0 %v2171, 1
        %v2678 = vpop.permute.xlu0 %2677
        %2679 = vrot.lane.b32.xlu0 %v2173, 1
        %v2680 = vpop.permute.xlu0 %2679
        %2681 = vrot.lane.b32.xlu0 %v2175, 1
        %v2682 = vpop.permute.xlu0 %2681
        %2683 = vrot.lane.b32.xlu0 %v2177, 1
        %v2684 = vpop.permute.xlu0 %2683
        %2685 = vrot.lane.b32.xlu0 %v2179, 1
        %v2686 = vpop.permute.xlu0 %2685
        %2687 = vrot.lane.b32.xlu0 %v2181, 1
        %v2688 = vpop.permute.xlu0 %2687
        %2689 = vrot.lane.b32.xlu0 %v2183, 1
        %v2690 = vpop.permute.xlu0 %2689
        %2691 = vrot.lane.b32.xlu0 %v2185, 1
        %v2692 = vpop.permute.xlu0 %2691
        %2693 = vrot.lane.b32.xlu0 %v2187, 1
        %v2694 = vpop.permute.xlu0 %2693
        %2695 = vrot.lane.b32.xlu0 %v2189, 1
        %v2696 = vpop.permute.xlu0 %2695
        %v2697 = vsel %vm2201, %v2634, %v2666
        %v2698 = vsel %vm2201, %v2636, %v2668
        %v2699 = vsel %vm2201, %v2638, %v2670
        %v2700 = vsel %vm2201, %v2640, %v2672
        %v2701 = vsel %vm2201, %v2642, %v2674
        %v2702 = vsel %vm2201, %v2644, %v2676
        %v2703 = vsel %vm2201, %v2646, %v2678
        %v2704 = vsel %vm2201, %v2648, %v2680
        %v2705 = vsel %vm2201, %v2650, %v2682
        %v2706 = vsel %vm2201, %v2652, %v2684
        %v2707 = vsel %vm2201, %v2654, %v2686
        %v2708 = vsel %vm2201, %v2656, %v2688
        %v2709 = vsel %vm2201, %v2658, %v2690
        %v2710 = vsel %vm2201, %v2660, %v2692
        %v2711 = vsel %vm2201, %v2662, %v2694
        %v2712 = vsel %vm2201, %v2664, %v2696
        %v2713 = vsel %vm2201, %v2666, %v2634
        %v2714 = vsel %vm2201, %v2668, %v2636
        %v2715 = vsel %vm2201, %v2670, %v2638
        %v2716 = vsel %vm2201, %v2672, %v2640
        %v2717 = vsel %vm2201, %v2674, %v2642
        %v2718 = vsel %vm2201, %v2676, %v2644
        %v2719 = vsel %vm2201, %v2678, %v2646
        %v2720 = vsel %vm2201, %v2680, %v2648
        %v2721 = vsel %vm2201, %v2682, %v2650
        %v2722 = vsel %vm2201, %v2684, %v2652
        %v2723 = vsel %vm2201, %v2686, %v2654
        %v2724 = vsel %vm2201, %v2688, %v2656
        %v2725 = vsel %vm2201, %v2690, %v2658
        %v2726 = vsel %vm2201, %v2692, %v2660
        %v2727 = vsel %vm2201, %v2694, %v2662
        %v2728 = vsel %vm2201, %v2696, %v2664
        %2729 = vrot.lane.b32.xlu0 %v2158, 127
        %v2730 = vpop.permute.xlu0 %2729
        %2731 = vrot.lane.b32.xlu0 %v2160, 127
        %v2732 = vpop.permute.xlu0 %2731
        %2733 = vrot.lane.b32.xlu0 %v2162, 127
        %v2734 = vpop.permute.xlu0 %2733
        %2735 = vrot.lane.b32.xlu0 %v2164, 127
        %v2736 = vpop.permute.xlu0 %2735
        %2737 = vrot.lane.b32.xlu0 %v2166, 127
        %v2738 = vpop.permute.xlu0 %2737
        %2739 = vrot.lane.b32.xlu0 %v2168, 127
        %v2740 = vpop.permute.xlu0 %2739
        %2741 = vrot.lane.b32.xlu0 %v2170, 127
        %v2742 = vpop.permute.xlu0 %2741
        %2743 = vrot.lane.b32.xlu0 %v2172, 127
        %v2744 = vpop.permute.xlu0 %2743
        %2745 = vrot.lane.b32.xlu0 %v2174, 127
        %v2746 = vpop.permute.xlu0 %2745
        %2747 = vrot.lane.b32.xlu0 %v2176, 127
        %v2748 = vpop.permute.xlu0 %2747
        %2749 = vrot.lane.b32.xlu0 %v2178, 127
        %v2750 = vpop.permute.xlu0 %2749
        %2751 = vrot.lane.b32.xlu0 %v2180, 127
        %v2752 = vpop.permute.xlu0 %2751
        %2753 = vrot.lane.b32.xlu0 %v2182, 127
        %v2754 = vpop.permute.xlu0 %2753
        %2755 = vrot.lane.b32.xlu0 %v2184, 127
        %v2756 = vpop.permute.xlu0 %2755
        %2757 = vrot.lane.b32.xlu0 %v2186, 127
        %v2758 = vpop.permute.xlu0 %2757
        %2759 = vrot.lane.b32.xlu0 %v2188, 127
        %v2760 = vpop.permute.xlu0 %2759
        %2761 = vrot.lane.b32.xlu0 %v2159, 127
        %v2762 = vpop.permute.xlu0 %2761
        %2763 = vrot.lane.b32.xlu0 %v2161, 127
        %v2764 = vpop.permute.xlu0 %2763
        %2765 = vrot.lane.b32.xlu0 %v2163, 127
        %v2766 = vpop.permute.xlu0 %2765
        %2767 = vrot.lane.b32.xlu0 %v2165, 127
        %v2768 = vpop.permute.xlu0 %2767
        %2769 = vrot.lane.b32.xlu0 %v2167, 127
        %v2770 = vpop.permute.xlu0 %2769
        %2771 = vrot.lane.b32.xlu0 %v2169, 127
        %v2772 = vpop.permute.xlu0 %2771
        %2773 = vrot.lane.b32.xlu0 %v2171, 127
        %v2774 = vpop.permute.xlu0 %2773
        %2775 = vrot.lane.b32.xlu0 %v2173, 127
        %v2776 = vpop.permute.xlu0 %2775
        %2777 = vrot.lane.b32.xlu0 %v2175, 127
        %v2778 = vpop.permute.xlu0 %2777
        %2779 = vrot.lane.b32.xlu0 %v2177, 127
        %v2780 = vpop.permute.xlu0 %2779
        %2781 = vrot.lane.b32.xlu0 %v2179, 127
        %v2782 = vpop.permute.xlu0 %2781
        %2783 = vrot.lane.b32.xlu0 %v2181, 127
        %v2784 = vpop.permute.xlu0 %2783
        %2785 = vrot.lane.b32.xlu0 %v2183, 127
        %v2786 = vpop.permute.xlu0 %2785
        %2787 = vrot.lane.b32.xlu0 %v2185, 127
        %v2788 = vpop.permute.xlu0 %2787
        %2789 = vrot.lane.b32.xlu0 %v2187, 127
        %v2790 = vpop.permute.xlu0 %2789
        %2791 = vrot.lane.b32.xlu0 %v2189, 127
        %v2792 = vpop.permute.xlu0 %2791
        %v2793 = vsel %vm2440, %v2730, %v2762
        %v2794 = vsel %vm2440, %v2732, %v2764
        %v2795 = vsel %vm2440, %v2734, %v2766
        %v2796 = vsel %vm2440, %v2736, %v2768
        %v2797 = vsel %vm2440, %v2738, %v2770
        %v2798 = vsel %vm2440, %v2740, %v2772
        %v2799 = vsel %vm2440, %v2742, %v2774
        %v2800 = vsel %vm2440, %v2744, %v2776
        %v2801 = vsel %vm2440, %v2746, %v2778
        %v2802 = vsel %vm2440, %v2748, %v2780
        %v2803 = vsel %vm2440, %v2750, %v2782
        %v2804 = vsel %vm2440, %v2752, %v2784
        %v2805 = vsel %vm2440, %v2754, %v2786
        %v2806 = vsel %vm2440, %v2756, %v2788
        %v2807 = vsel %vm2440, %v2758, %v2790
        %v2808 = vsel %vm2440, %v2760, %v2792
        %v2809 = vsel %vm2440, %v2762, %v2730
        %v2810 = vsel %vm2440, %v2764, %v2732
        %v2811 = vsel %vm2440, %v2766, %v2734
        %v2812 = vsel %vm2440, %v2768, %v2736
        %v2813 = vsel %vm2440, %v2770, %v2738
        %v2814 = vsel %vm2440, %v2772, %v2740
        %v2815 = vsel %vm2440, %v2774, %v2742
        %v2816 = vsel %vm2440, %v2776, %v2744
        %v2817 = vsel %vm2440, %v2778, %v2746
        %v2818 = vsel %vm2440, %v2780, %v2748
        %v2819 = vsel %vm2440, %v2782, %v2750
        %v2820 = vsel %vm2440, %v2784, %v2752
        %v2821 = vsel %vm2440, %v2786, %v2754
        %v2822 = vsel %vm2440, %v2788, %v2756
        %v2823 = vsel %vm2440, %v2790, %v2758
        %v2824 = vsel %vm2440, %v2792, %v2760
        %v2825 = vsel %vm2214, %v2713, %v2793
        %v2826 = vsel %vm2215, %v2697, %v2809
        %v2827 = vsel %vm2214, %v2714, %v2794
        %v2828 = vsel %vm2215, %v2698, %v2810
        %v2829 = vsel %vm2214, %v2715, %v2795
        %v2830 = vsel %vm2215, %v2699, %v2811
        %v2831 = vsel %vm2214, %v2716, %v2796
        %v2832 = vsel %vm2215, %v2700, %v2812
        %v2833 = vsel %vm2214, %v2717, %v2797
        %v2834 = vsel %vm2215, %v2701, %v2813
        %v2835 = vsel %vm2214, %v2718, %v2798
        %v2836 = vsel %vm2215, %v2702, %v2814
        %v2837 = vsel %vm2214, %v2719, %v2799
        %v2838 = vsel %vm2215, %v2703, %v2815
        %v2839 = vsel %vm2214, %v2720, %v2800
        %v2840 = vsel %vm2215, %v2704, %v2816
        %v2841 = vsel %vm2214, %v2721, %v2801
        %v2842 = vsel %vm2215, %v2705, %v2817
        %v2843 = vsel %vm2214, %v2722, %v2802
        %v2844 = vsel %vm2215, %v2706, %v2818
        %v2845 = vsel %vm2214, %v2723, %v2803
        %v2846 = vsel %vm2215, %v2707, %v2819
        %v2847 = vsel %vm2214, %v2724, %v2804
        %v2848 = vsel %vm2215, %v2708, %v2820
        %v2849 = vsel %vm2214, %v2725, %v2805
        %v2850 = vsel %vm2215, %v2709, %v2821
        %v2851 = vsel %vm2214, %v2726, %v2806
        %v2852 = vsel %vm2215, %v2710, %v2822
        %v2853 = vsel %vm2214, %v2727, %v2807
        %v2854 = vsel %vm2215, %v2711, %v2823
        %v2855 = vsel %vm2214, %v2728, %v2808
        %v2856 = vsel %vm2215, %v2712, %v2824
        %v2857 = vmul.f32 %v2216, %v2158
        %v2858 = vmul.f32 %v2217, %v2159
        %v2859 = vmul.f32 %v2218, %v2160
        %v2860 = vmul.f32 %v2219, %v2161
        %v2861 = vmul.f32 %v2220, %v2162
        %v2862 = vmul.f32 %v2221, %v2163
        %v2863 = vmul.f32 %v2222, %v2164
        %v2864 = vmul.f32 %v2223, %v2165
        %v2865 = vmul.f32 %v2224, %v2166
        %v2866 = vmul.f32 %v2225, %v2167
        %v2867 = vmul.f32 %v2226, %v2168
        %v2868 = vmul.f32 %v2227, %v2169
        %v2869 = vmul.f32 %v2228, %v2170
        %v2870 = vmul.f32 %v2229, %v2171
        %v2871 = vmul.f32 %v2230, %v2172
        %v2872 = vmul.f32 %v2231, %v2173
        %v2873 = vmul.f32 %v2232, %v2174
        %v2874 = vmul.f32 %v2233, %v2175
        %v2875 = vmul.f32 %v2234, %v2176
        %v2876 = vmul.f32 %v2235, %v2177
        %v2877 = vmul.f32 %v2236, %v2178
        %v2878 = vmul.f32 %v2237, %v2179
        %v2879 = vmul.f32 %v2238, %v2180
        %v2880 = vmul.f32 %v2239, %v2181
        %v2881 = vmul.f32 %v2240, %v2182
        %v2882 = vmul.f32 %v2241, %v2183
        %v2883 = vmul.f32 %v2242, %v2184
        %v2884 = vmul.f32 %v2243, %v2185
        %v2885 = vmul.f32 %v2244, %v2186
        %v2886 = vmul.f32 %v2245, %v2187
        %v2887 = vmul.f32 %v2246, %v2188
        %v2888 = vmul.f32 %v2247, %v2189
        %v2889 = vmul.f32 %v2248, %v2825
        %v2890 = vmul.f32 %v2249, %v2826
        %v2891 = vmul.f32 %v2250, %v2827
        %v2892 = vmul.f32 %v2251, %v2828
        %v2893 = vmul.f32 %v2252, %v2829
        %v2894 = vmul.f32 %v2253, %v2830
        %v2895 = vmul.f32 %v2254, %v2831
        %v2896 = vmul.f32 %v2255, %v2832
        %v2897 = vmul.f32 %v2256, %v2833
        %v2898 = vmul.f32 %v2257, %v2834
        %v2899 = vmul.f32 %v2258, %v2835
        %v2900 = vmul.f32 %v2259, %v2836
        %v2901 = vmul.f32 %v2260, %v2837
        %v2902 = vmul.f32 %v2261, %v2838
        %v2903 = vmul.f32 %v2262, %v2839
        %v2904 = vmul.f32 %v2263, %v2840
        %v2905 = vmul.f32 %v2264, %v2841
        %v2906 = vmul.f32 %v2265, %v2842
        %v2907 = vmul.f32 %v2266, %v2843
        %v2908 = vmul.f32 %v2267, %v2844
        %v2909 = vmul.f32 %v2268, %v2845
        %v2910 = vmul.f32 %v2269, %v2846
        %v2911 = vmul.f32 %v2270, %v2847
        %v2912 = vmul.f32 %v2271, %v2848
        %v2913 = vmul.f32 %v2272, %v2849
        %v2914 = vmul.f32 %v2273, %v2850
        %v2915 = vmul.f32 %v2274, %v2851
        %v2916 = vmul.f32 %v2275, %v2852
        %v2917 = vmul.f32 %v2276, %v2853
        %v2918 = vmul.f32 %v2277, %v2854
        %v2919 = vmul.f32 %v2278, %v2855
        %v2920 = vmul.f32 %v2279, %v2856
        %v2921 = vadd.f32 %v2857, %v2889
        %v2922 = vadd.f32 %v2858, %v2890
        %v2923 = vadd.f32 %v2859, %v2891
        %v2924 = vadd.f32 %v2860, %v2892
        %v2925 = vadd.f32 %v2861, %v2893
        %v2926 = vadd.f32 %v2862, %v2894
        %v2927 = vadd.f32 %v2863, %v2895
        %v2928 = vadd.f32 %v2864, %v2896
        %v2929 = vadd.f32 %v2865, %v2897
        %v2930 = vadd.f32 %v2866, %v2898
        %v2931 = vadd.f32 %v2867, %v2899
        %v2932 = vadd.f32 %v2868, %v2900
        %v2933 = vadd.f32 %v2869, %v2901
        %v2934 = vadd.f32 %v2870, %v2902
        %v2935 = vadd.f32 %v2871, %v2903
        %v2936 = vadd.f32 %v2872, %v2904
        %v2937 = vadd.f32 %v2873, %v2905
        %v2938 = vadd.f32 %v2874, %v2906
        %v2939 = vadd.f32 %v2875, %v2907
        %v2940 = vadd.f32 %v2876, %v2908
        %v2941 = vadd.f32 %v2877, %v2909
        %v2942 = vadd.f32 %v2878, %v2910
        %v2943 = vadd.f32 %v2879, %v2911
        %v2944 = vadd.f32 %v2880, %v2912
        %v2945 = vadd.f32 %v2881, %v2913
        %v2946 = vadd.f32 %v2882, %v2914
        %v2947 = vadd.f32 %v2883, %v2915
        %v2948 = vadd.f32 %v2884, %v2916
        %v2949 = vadd.f32 %v2885, %v2917
        %v2950 = vadd.f32 %v2886, %v2918
        %v2951 = vadd.f32 %v2887, %v2919
        %v2952 = vadd.f32 %v2888, %v2920
        %2953 = vst [vmem:[%s550] sm:$0xff] %v2921
        %2954 = vst [vmem:[%s550 + $0x8] sm:$0xff] %v2922
        %2955 = vst [vmem:[%s550 + $0x10] sm:$0xff] %v2923
        %2956 = vst [vmem:[%s550 + $0x18] sm:$0xff] %v2924
        %2957 = vst [vmem:[%s550 + $0x20] sm:$0xff] %v2925
        %2958 = vst [vmem:[%s550 + $0x28] sm:$0xff] %v2926
        %2959 = vst [vmem:[%s550 + $0x30] sm:$0xff] %v2927
        %2960 = vst [vmem:[%s550 + $0x38] sm:$0xff] %v2928
        %2961 = vst [vmem:[%s550 + $0x40] sm:$0xff] %v2929
        %2962 = vst [vmem:[%s550 + $0x48] sm:$0xff] %v2930
        %2963 = vst [vmem:[%s550 + $0x50] sm:$0xff] %v2931
        %2964 = vst [vmem:[%s550 + $0x58] sm:$0xff] %v2932
        %2965 = vst [vmem:[%s550 + $0x60] sm:$0xff] %v2933
        %2966 = vst [vmem:[%s550 + $0x68] sm:$0xff] %v2934
        %2967 = vst [vmem:[%s550 + $0x70] sm:$0xff] %v2935
        %2968 = vst [vmem:[%s550 + $0x78] sm:$0xff] %v2936
        %2969 = vst [vmem:[%s550 + $0x80] sm:$0xff] %v2937
        %2970 = vst [vmem:[%s550 + $0x88] sm:$0xff] %v2938
        %2971 = vst [vmem:[%s550 + $0x90] sm:$0xff] %v2939
        %2972 = vst [vmem:[%s550 + $0x98] sm:$0xff] %v2940
        %2973 = vst [vmem:[%s550 + $0xa0] sm:$0xff] %v2941
        %2974 = vst [vmem:[%s550 + $0xa8] sm:$0xff] %v2942
        %2975 = vst [vmem:[%s550 + $0xb0] sm:$0xff] %v2943
        %2976 = vst [vmem:[%s550 + $0xb8] sm:$0xff] %v2944
        %2977 = vst [vmem:[%s550 + $0xc0] sm:$0xff] %v2945
        %2978 = vst [vmem:[%s550 + $0xc8] sm:$0xff] %v2946
        %2979 = vst [vmem:[%s550 + $0xd0] sm:$0xff] %v2947
        %2980 = vst [vmem:[%s550 + $0xd8] sm:$0xff] %v2948
        %2981 = vst [vmem:[%s550 + $0xe0] sm:$0xff] %v2949
        %2982 = vst [vmem:[%s550 + $0xe8] sm:$0xff] %v2950
        %2983 = vst [vmem:[%s550 + $0xf0] sm:$0xff] %v2951
        %2984 = vst [vmem:[%s550 + $0xf8] sm:$0xff] %v2952
        %2985 = vst [vmem:[%s557] sm:$0xff] %v1559
        %2986 = vst [vmem:[%s557 + $0x8] sm:$0xff] %v1561
        %2987 = vst [vmem:[%s557 + $0x10] sm:$0xff] %v1565
        %2988 = vst [vmem:[%s557 + $0x18] sm:$0xff] %v1567
        %2989 = vst [vmem:[%s557 + $0x20] sm:$0xff] %v1571
        %2990 = vst [vmem:[%s557 + $0x28] sm:$0xff] %v1573
        %2991 = vst [vmem:[%s557 + $0x30] sm:$0xff] %v1577
        %2992 = vst [vmem:[%s557 + $0x38] sm:$0xff] %v1579
        %2993 = vst [vmem:[%s557 + $0x40] sm:$0xff] %v1583
        %2994 = vst [vmem:[%s557 + $0x48] sm:$0xff] %v1585
        %2995 = vst [vmem:[%s557 + $0x50] sm:$0xff] %v1589
        %2996 = vst [vmem:[%s557 + $0x58] sm:$0xff] %v1591
        %2997 = vst [vmem:[%s557 + $0x60] sm:$0xff] %v1595
        %2998 = vst [vmem:[%s557 + $0x68] sm:$0xff] %v1597
        %2999 = vst [vmem:[%s557 + $0x70] sm:$0xff] %v1601
        %3000 = vst [vmem:[%s557 + $0x78] sm:$0xff] %v1603
        %3001 = vst [vmem:[%s557 + $0x80] sm:$0xff] %v1607
        %3002 = vst [vmem:[%s557 + $0x88] sm:$0xff] %v1609
        %3003 = vst [vmem:[%s557 + $0x90] sm:$0xff] %v1613
        %3004 = vst [vmem:[%s557 + $0x98] sm:$0xff] %v1615
        %3005 = vst [vmem:[%s557 + $0xa0] sm:$0xff] %v1619
        %3006 = vst [vmem:[%s557 + $0xa8] sm:$0xff] %v1621
        %3007 = vst [vmem:[%s557 + $0xb0] sm:$0xff] %v1625
        %3008 = vst [vmem:[%s557 + $0xb8] sm:$0xff] %v1627
        %3009 = vst [vmem:[%s557 + $0xc0] sm:$0xff] %v1631
        %3010 = vst [vmem:[%s557 + $0xc8] sm:$0xff] %v1633
        %3011 = vst [vmem:[%s557 + $0xd0] sm:$0xff] %v1637
        %3012 = vst [vmem:[%s557 + $0xd8] sm:$0xff] %v1639
        %3013 = vst [vmem:[%s557 + $0xe0] sm:$0xff] %v1643
        %3014 = vst [vmem:[%s557 + $0xe8] sm:$0xff] %v1645
        %3015 = vst [vmem:[%s557 + $0xf0] sm:$0xff] %v1649
        %3016 = vst [vmem:[%s557 + $0xf8] sm:$0xff] %v1651
        %s3017 = sand.u32 %s274, 1
        %s3018 = scalar_lea.sflag [#allocation4], %s3017
        %s3019 = sand.u32 %s274, 1
        %s3020 = smul.addr %s3019, 256
        %s3021 = scalar_lea.vmem [#allocation11], %s3020
        %s3022 = sand.u32 %s36, 1
        %s3023 = scalar_lea.sflag [#allocation13], %s3022
        %s3024 = sand.u32 %s302, 1
        %s3025 = smul.addr %s3024, 256
        %s3026 = scalar_lea.vmem [#allocation12], %s3025
        %s3027 = sand.u32 %s36, 1
        %s3028 = scalar_lea.sflag [#allocation13], %s3027
        %s3029 = sand.u32 %s330, 1
        %s3030 = smul.addr %s3029, 256
        %s3031 = scalar_lea.vmem [#allocation14], %s3030
        // Predicated region
        $region77: #{tpu_custom_call.1} parent=55 // pred_check
          %p3032 = pneg %p284
        $region78: #{tpu_custom_call.1} parent=55 // pred_check_branch
          %3034 = sbr.rel (%p3032) target = $region80
        $region79: #{tpu_custom_call.1} parent=55 // pred_region
          %s3035 = smul.u32 16, %s41
          %s3037 = ssub.s32 4096, 4096
          %3038 = vsyncadd %s3018, %s3037
          %s3039 = smul.addr %s3035, 2
          %s3040 = smul.addr %s40, 32
          %s3041 = sadd.s32 %s3039, %s3040
          %s3042 = smul.addr %s3041, 128
          %s3043 = scalar_lea.hbm %s9, %s3042
          %s3044 = sshll.u32 %s3021, 4
          %s3045 = int_to_ptr.vmem [resolvable:$true] %s3044
          %3050 = dma.vmem_to_hbm [thread:$0]  %s3045, 4096, %s3043, %s3018, 256, 256, 16
        $region80: #{tpu_custom_call.1} parent=55 // pred_fallthru
          _
        // Predicated region
        $region81: #{tpu_custom_call.1} parent=55 // pred_check
          %p3051 = pneg %p312
        $region82: #{tpu_custom_call.1} parent=55 // pred_check_branch
          %3053 = sbr.rel (%p3051) target = $region84
        $region83: #{tpu_custom_call.1} parent=55 // pred_region
          %s3054 = smul.u32 16, %s41
          %s3056 = ssub.s32 4096, 4096
          %3057 = vsyncadd %s3023, %s3056
          %s3058 = smul.addr %s3054, 2
          %s3059 = smul.addr %s40, 32
          %s3060 = sadd.s32 %s3058, %s3059
          %s3061 = smul.addr %s3060, 128
          %s3062 = scalar_lea.hbm %s10, %s3061
          %s3063 = sshll.u32 %s3026, 4
          %s3064 = int_to_ptr.vmem [resolvable:$true] %s3063
          %3069 = dma.vmem_to_hbm [thread:$0]  %s3064, 4096, %s3062, %s3023, 256, 256, 16
        $region84: #{tpu_custom_call.1} parent=55 // pred_fallthru
          _
        // Predicated region
        $region85: #{tpu_custom_call.1} parent=55 // pred_check
          %p3070 = pneg %p340
        $region86: #{tpu_custom_call.1} parent=55 // pred_check_branch
          %3072 = sbr.rel (%p3070) target = $region88
        $region87: #{tpu_custom_call.1} parent=55 // pred_region
          %s3073 = smul.u32 16, %s41
          %s3075 = ssub.s32 4096, 4096
          %3076 = vsyncadd %s3028, %s3075
          %s3077 = smul.addr %s3073, 2
          %s3078 = smul.addr %s40, 32
          %s3079 = sadd.s32 %s3077, %s3078
          %s3080 = smul.addr %s3079, 128
          %s3081 = scalar_lea.hbm %s11, %s3080
          %s3082 = sshll.u32 %s3031, 4
          %s3083 = int_to_ptr.vmem [resolvable:$true] %s3082
          %3088 = dma.vmem_to_hbm [thread:$0]  %s3083, 4096, %s3081, %s3028, 256, 256, 16
        $region88: #{tpu_custom_call.1} parent=55 // pred_fallthru
          _
      $region56: #{tpu_custom_call.1} parent=5 // pred_fallthru
        _
      %p3089 = scmp.le.s32.totalorder 2, %s31
      // Predicated region
      $region89: #{tpu_custom_call.1} parent=5 // pred_check
        %p3090 = pneg %p3089
      $region90: #{tpu_custom_call.1} parent=5 // pred_check_branch
        %3092 = sbr.rel (%p3090) target = $region92
      $region91: #{tpu_custom_call.1} parent=5 // pred_region
        %s3093 = ssub.s32 %s31, 2
        // Predicated region
        $region93: #{tpu_custom_call.1} parent=91 // pred_check
          %p3094 = pneg %p290
        $region94: #{tpu_custom_call.1} parent=91 // pred_check_branch
          %3096 = sbr.rel (%p3094) target = $region96
        $region95: #{tpu_custom_call.1} parent=91 // pred_region
          %s3097 = sand.u32 %s275, 1
          %s3098 = scalar_lea.sflag [#allocation4], %s3097
          %s3099 = sand.u32 %s275, 1
          %s3100 = smul.addr %s3099, 256
          %s3101 = scalar_lea.vmem [#allocation11], %s3100
          %3102 = dma.done %s3098, 4096
        $region96: #{tpu_custom_call.1} parent=91 // pred_fallthru
          _
        // Predicated region
        $region97: #{tpu_custom_call.1} parent=91 // pred_check
          %p3103 = pneg %p318
        $region98: #{tpu_custom_call.1} parent=91 // pred_check_branch
          %3105 = sbr.rel (%p3103) target = $region100
        $region99: #{tpu_custom_call.1} parent=91 // pred_region
          %s3106 = sand.u32 %s37, 1
          %s3107 = scalar_lea.sflag [#allocation13], %s3106
          %s3108 = sand.u32 %s303, 1
          %s3109 = smul.addr %s3108, 256
          %s3110 = scalar_lea.vmem [#allocation12], %s3109
          %3111 = dma.done %s3107, 4096
        $region100: #{tpu_custom_call.1} parent=91 // pred_fallthru
          _
        // Predicated region
        $region101: #{tpu_custom_call.1} parent=91 // pred_check
          %p3112 = pneg %p346
        $region102: #{tpu_custom_call.1} parent=91 // pred_check_branch
          %3114 = sbr.rel (%p3112) target = $region104
        $region103: #{tpu_custom_call.1} parent=91 // pred_region
          %s3115 = sand.u32 %s37, 1
          %s3116 = scalar_lea.sflag [#allocation13], %s3115
          %s3117 = sand.u32 %s331, 1
          %s3118 = smul.addr %s3117, 256
          %s3119 = scalar_lea.vmem [#allocation14], %s3118
          %3120 = dma.done %s3116, 4096
        $region104: #{tpu_custom_call.1} parent=91 // pred_fallthru
          _
      $region92: #{tpu_custom_call.1} parent=5 // pred_fallthru
        _
    $region6: #{tpu_custom_call.1} parent=1 // loop_footer
      %s35 = sadd.s32 1, %s31
    $region7: #{tpu_custom_call.1} parent=1 // loop_footer_branch
      %30 = sbr.rel target = $region3
    $region8: #{tpu_custom_call.1} parent=1 // loop_exit
      _
    %3121 = vsyncpa [#allocation3], 1
    %s3122 = scalar_lea.sflag [#allocation3], 1
    %3123 = vsyncpa %s3122, 1
    %3124 = vsyncpa [#allocation6], 1
    %s3125 = scalar_lea.sflag [#allocation6], 1
    %3126 = vsyncpa %s3125, 1
    %3127 = vsyncpa [#allocation9], 1
    %3128 = vsyncpa [#allocation4], 1
    %s3129 = scalar_lea.sflag [#allocation4], 1
    %3130 = vsyncpa %s3129, 1
    %3131 = vsyncpa [#allocation13], 1
    %s3132 = scalar_lea.sflag [#allocation13], 1
    %3133 = vsyncpa %s3132, 1

</llo_original>
